<compile_context>
chip_gen: v6e
topology: v6e:2x2x1
jax: 0.10.0
libtpu: 0.0.40
codegen_flags: <defaults>
</compile_context>

<pallas_src>
import functools

import numpy as np

import jax
import jax.numpy as jnp
from jax.experimental import pallas as pl
from jax.experimental.pallas import tpu as pltpu


# -----------------------------------------------------------------------------
# One-time host-side parameter preprocessing: conv -> dense (Toeplitz) matrices
# -----------------------------------------------------------------------------
def _conv2d_dense(w, H, W, stride, padding):
    """Dense matrix M s.t. flat(x) @ M == flat(conv2d(x, w, stride, padding)).

    flat() is the PyTorch C-order flatten over (C, H, W).
    w: (Cout, Cin, kh, kw) numpy.  Returns (M[(Cin*H*W), (Cout*OH*OW)], OH, OW).
    """
    w = np.asarray(w, np.float32)
    Cout, Cin, kh, kw = w.shape
    OH = (H + 2 * padding - kh) // stride + 1
    OW = (W + 2 * padding - kw) // stride + 1
    shape = (Cout, Cin, kh, kw, OH, OW)
    co = np.arange(Cout).reshape(-1, 1, 1, 1, 1, 1)
    ci = np.arange(Cin).reshape(1, -1, 1, 1, 1, 1)
    ki = np.arange(kh).reshape(1, 1, -1, 1, 1, 1)
    kj = np.arange(kw).reshape(1, 1, 1, -1, 1, 1)
    oh = np.arange(OH).reshape(1, 1, 1, 1, -1, 1)
    ow = np.arange(OW).reshape(1, 1, 1, 1, 1, -1)
    ih = oh * stride + ki - padding
    iw = ow * stride + kj - padding
    valid = np.broadcast_to((ih >= 0) & (ih < H) & (iw >= 0) & (iw < W), shape)
    rows = np.broadcast_to((ci * H + ih) * W + iw, shape)
    cols = np.broadcast_to((co * OH + oh) * OW + ow, shape)
    vals = np.broadcast_to(w[:, :, :, :, None, None], shape)
    M = np.zeros((Cin * H * W, Cout * OH * OW), np.float32)
    M[rows[valid], cols[valid]] = vals[valid]
    return M, OH, OW


def _conv_transpose2d_dense(w, H, W, stride, padding):
    """Dense matrix for PyTorch ConvTranspose2d (output_padding=0).

    w: (Cin, Cout, kh, kw).  ConvTranspose2d(Cin->Cout) is the adjoint of
    Conv2d(Cout->Cin) with the SAME weight tensor (PyTorch layout matches), so
    its dense matrix is the transpose of that conv's dense matrix.
    Returns (M[(Cin*H*W), (Cout*OH*OW)], OH, OW).
    """
    w = np.asarray(w, np.float32)
    Cin, Cout, kh, kw = w.shape
    OH = (H - 1) * stride + kh - 2 * padding
    OW = (W - 1) * stride + kw - 2 * padding
    M_adj, H2, W2 = _conv2d_dense(w, OH, OW, stride, padding)  # (Cout*OH*OW, Cin*H*W)
    assert (H2, W2) == (H, W)
    return np.ascontiguousarray(M_adj.T), OH, OW


# -----------------------------------------------------------------------------
# Fused Pallas kernel: 6 GEMMs (bf16 in, f32 acc) + bias + activation in VMEM
# -----------------------------------------------------------------------------
def _vae_fused_kernel(*refs, activations):
    x_ref = refs[0]
    o_ref = refs[-1]
    layer_refs = refs[1:-1]                 # (w1, b1, w2, b2, ..., w6, b6)
    assert len(layer_refs) == 2 * len(activations)

    h = x_ref[...]                          # bf16 (BM, D_in), stays in VMEM/vregs
    for idx, act in enumerate(activations):
        w_ref = layer_refs[2 * idx]
        b_ref = layer_refs[2 * idx + 1]
        acc = jnp.dot(h.astype(jnp.bfloat16), w_ref[...],
                      preferred_element_type=jnp.float32)      # MXU, f32 accumulate
        acc = acc + b_ref[...]                                  # (1, N) broadcast
        if act == "relu":
            acc = jnp.maximum(acc, 0.0)
        elif act == "sigmoid":
            # exp on EUP + approx reciprocal on EUP (no VPU divide)
            acc = pl.reciprocal(1.0 + jnp.exp(-acc), approx=True)
        h = acc
    o_ref[...] = h.astype(o_ref.dtype)      # lane-dense (BM, 1024) store


def vae_forward_fused(dense, x):
    """x: NCHW float32 -> (N, Cout*H*W) float32, all six layers in one kernel."""
    N = x.shape[0]
    x_flat = x.reshape(N, -1).astype(jnp.float32)
    D_in = x_flat.shape[1]

    # Pad batch rows to a sublane multiple; tile M at 256 for large batches so
    # the "parallel" grid axis can use both v7x TensorCores (grid=(1,) at N=2).
    Mp = max(8, int(np.ceil(N / 8)) * 8)
    BM = min(Mp, 256)
    Mp = int(np.ceil(Mp / BM)) * BM
    if Mp != N:
        x_flat = jnp.pad(x_flat, ((0, Mp - N), (0, 0)))
    x_bf16 = x_flat.astype(jnp.bfloat16)

    Ws, Bs, acts = dense["Ws"], dense["Bs"], dense["acts"]
    D_out = Ws[-1].shape[1]

    in_specs = [pl.BlockSpec((BM, D_in), lambda i: (i, 0))]
    operands = [x_bf16]
    for W, B in zip(Ws, Bs):
        in_specs.append(pl.BlockSpec(W.shape, lambda i: (0, 0)))   # full-extent block
        in_specs.append(pl.BlockSpec(B.shape, lambda i: (0, 0)))
        operands += [W, B]

    kernel = functools.partial(_vae_fused_kernel, activations=acts)
    out = pl.pallas_call(
        kernel,
        out_shape=jax.ShapeDtypeStruct((Mp, D_out), jnp.float32),
        grid=(Mp // BM,),
        in_specs=in_specs,
        out_specs=pl.BlockSpec((BM, D_out), lambda i: (i, 0)),
        compiler_params=pltpu.CompilerParams(
            dimension_semantics=("parallel",),
            vmem_limit_bytes=32 * 1024 * 1024,
        ),
    )(*operands)
    return out[:N]


def convolutional_vae_forward(dense, x):
    # Matches PyTorch:  z = encoder(input); return decoder(z)
    c, h, w = dense["out_chw"]
    flat = vae_forward_fused(dense, x)
    return flat.reshape(x.shape[0], c, h, w)


# -----------------------------------------------------------------------------
# Parameters (PyTorch layout) + dense-layer packing
# -----------------------------------------------------------------------------
def init_params(key, c_in=4, c1=8, c2=16, spatial=16, latent=32):
    s2 = spatial // 4                       # after two stride-2 convs
    flat = c2 * s2 * s2
    ks = jax.random.split(key, 12)
    scale = 0.05
    p = {
        "enc_conv1_w": scale * jax.random.normal(ks[0], (c1, c_in, 3, 3), jnp.float32),
        "enc_conv1_b": scale * jax.random.normal(ks[1], (c1,), jnp.float32),
        "enc_conv2_w": scale * jax.random.normal(ks[2], (c2, c1, 3, 3), jnp.float32),
        "enc_conv2_b": scale * jax.random.normal(ks[3], (c2,), jnp.float32),
        "enc_fc_w": scale * jax.random.normal(ks[4], (latent, flat), jnp.float32),
        "enc_fc_b": scale * jax.random.normal(ks[5], (latent,), jnp.float32),
        "dec_fc_w": scale * jax.random.normal(ks[6], (flat, latent), jnp.float32),
        "dec_fc_b": scale * jax.random.normal(ks[7], (flat,), jnp.float32),
        "dec_dcv1_w": scale * jax.random.normal(ks[8], (c2, c1, 4, 4), jnp.float32),
        "dec_dcv1_b": scale * jax.random.normal(ks[9], (c1,), jnp.float32),
        "dec_dcv2_w": scale * jax.random.normal(ks[10], (c1, c_in, 4, 4), jnp.float32),
        "dec_dcv2_b": scale * jax.random.normal(ks[11], (c_in,), jnp.float32),
    }
    p["_dims"] = (c_in, c1, c2, s2, latent)
    return p


def build_dense_layers(p, spatial=16):
    """One-time preprocessing: pack every layer as (K, N) bf16 weight + f32 bias."""
    c_in, c1, c2, s2, latent = p["_dims"]
    H = W = spatial
    M1, H1, W1 = _conv2d_dense(p["enc_conv1_w"], H, W, 2, 1)
    b1 = np.repeat(np.asarray(p["enc_conv1_b"], np.float32), H1 * W1)
    M2, H2, W2 = _conv2d_dense(p["enc_conv2_w"], H1, W1, 2, 1)
    b2 = np.repeat(np.asarray(p["enc_conv2_b"], np.float32), H2 * W2)
    M3 = np.asarray(p["enc_fc_w"], np.float32).T
    b3 = np.asarray(p["enc_fc_b"], np.float32)
    M4 = np.asarray(p["dec_fc_w"], np.float32).T
    b4 = np.asarray(p["dec_fc_b"], np.float32)
    M5, H5, W5 = _conv_transpose2d_dense(p["dec_dcv1_w"], H2, W2, 2, 1)
    b5 = np.repeat(np.asarray(p["dec_dcv1_b"], np.float32), H5 * W5)
    M6, H6, W6 = _conv_transpose2d_dense(p["dec_dcv2_w"], H5, W5, 2, 1)
    b6 = np.repeat(np.asarray(p["dec_dcv2_b"], np.float32), H6 * W6)
    Ws = [jnp.asarray(m, dtype=jnp.bfloat16) for m in (M1, M2, M3, M4, M5, M6)]
    Bs = [jnp.asarray(b, dtype=jnp.float32).reshape(1, -1)
          for b in (b1, b2, b3, b4, b5, b6)]
    return {
        "Ws": Ws,
        "Bs": Bs,
        "acts": ("relu", "relu", "none", "relu", "relu", "sigmoid"),
        "out_chw": (c_in, H6, W6),
    }


# -----------------------------------------------------------------------------
# Pure-numpy reference (correctness check only; not in the TPU data path)
# -----------------------------------------------------------------------------
def _ref_conv2d(x, w, b, stride, padding):
    N, Cin, H, W = x.shape
    Cout, _, kh, kw = w.shape
    OH = (H + 2 * padding - kh) // stride + 1
    OW = (W + 2 * padding - kw) // stride + 1
    xp = np.pad(x, ((0, 0), (0, 0), (padding, padding), (padding, padding)))
    out = np.zeros((N, Cout, OH, OW), np.float32)
    for i in range(kh):
        for j in range(kw):
            patch = xp[:, :, i:i + stride * OH:stride, j:j + stride * OW:stride]
            out += np.einsum("nchw,oc->nohw", patch, w[:, :, i, j])
    return out + b.reshape(1, -1, 1, 1)


def _ref_conv_transpose2d(x, w, b, stride, padding):
    N, Cin, H, W = x.shape
    _, Cout, kh, kw = w.shape
    OH = (H - 1) * stride + kh - 2 * padding
    OW = (W - 1) * stride + kw - 2 * padding
    full = np.zeros((N, Cout, (H - 1) * stride + kh, (W - 1) * stride + kw), np.float32)
    for i in range(kh):
        for j in range(kw):
            full[:, :, i:i + stride * H:stride, j:j + stride * W:stride] += np.einsum(
                "nchw,co->nohw", x, w[:, :, i, j])
    out = full[:, :, padding:padding + OH, padding:padding + OW]
    return out + b.reshape(1, -1, 1, 1)


def reference_forward_np(p, x):
    c_in, c1, c2, s2, latent = p["_dims"]
    x = np.asarray(x, np.float32)
    g = lambda k: np.asarray(p[k], np.float32)
    h = np.maximum(_ref_conv2d(x, g("enc_conv1_w"), g("enc_conv1_b"), 2, 1), 0.0)
    h = np.maximum(_ref_conv2d(h, g("enc_conv2_w"), g("enc_conv2_b"), 2, 1), 0.0)
    N = h.shape[0]
    z = h.reshape(N, -1) @ g("enc_fc_w").T + g("enc_fc_b")
    d = np.maximum(z @ g("dec_fc_w").T + g("dec_fc_b"), 0.0)
    d = d.reshape(N, c2, s2, s2)
    d = np.maximum(_ref_conv_transpose2d(d, g("dec_dcv1_w"), g("dec_dcv1_b"), 2, 1), 0.0)
    d = _ref_conv_transpose2d(d, g("dec_dcv2_w"), g("dec_dcv2_b"), 2, 1)
    return 1.0 / (1.0 + np.exp(-d))


if __name__ == "__main__":
    key = jax.random.PRNGKey(0)
    k_param, k_data = jax.random.split(key)
    params = init_params(k_param)
    dense = build_dense_layers(params)

    x = jax.random.normal(k_data, (2, 4, 16, 16), jnp.float32)  # NCHW

    fwd = jax.jit(lambda xx: convolutional_vae_forward(dense, xx))
    out = jax.block_until_ready(fwd(x))

    assert out.shape == (2, 4, 16, 16), out.shape
    assert out.dtype == jnp.float32
    assert bool(jnp.all(jnp.isfinite(out)))
    # sigmoid output must lie in (0, 1)
    assert bool(jnp.all(out > 0.0)) and bool(jnp.all(out < 1.0))

    # Numerical check against an independent numpy reference of the PyTorch model
    # (loose tolerance: bf16 MXU operands + approx reciprocal in sigmoid).
    ref = reference_forward_np(params, np.asarray(x))
    err = float(np.max(np.abs(np.asarray(out) - ref)))
    assert err < 1e-2, f"max abs error vs reference: {err}"

    print("KERNEL_OK")
</pallas_src>

<mosaic_0001>
module attributes {stable_mosaic.version = 11 : i64} {
  func.func @_vae_fused_kernel(%arg0: i32, %arg1: memref<8x1024xbf16, #tpu.memory_space<vmem>>, %arg2: memref<1024x512xbf16, #tpu.memory_space<vmem>>, %arg3: memref<1x512xf32, #tpu.memory_space<vmem>>, %arg4: memref<512x256xbf16, #tpu.memory_space<vmem>>, %arg5: memref<1x256xf32, #tpu.memory_space<vmem>>, %arg6: memref<256x32xbf16, #tpu.memory_space<vmem>>, %arg7: memref<1x32xf32, #tpu.memory_space<vmem>>, %arg8: memref<32x256xbf16, #tpu.memory_space<vmem>>, %arg9: memref<1x256xf32, #tpu.memory_space<vmem>>, %arg10: memref<256x512xbf16, #tpu.memory_space<vmem>>, %arg11: memref<1x512xf32, #tpu.memory_space<vmem>>, %arg12: memref<512x1024xbf16, #tpu.memory_space<vmem>>, %arg13: memref<1x1024xf32, #tpu.memory_space<vmem>>, %arg14: memref<8x1024xf32, #tpu.memory_space<vmem>>) attributes {dimension_semantics = [#tpu.dimension_semantics<parallel>], iteration_bounds = array<i64: 1>, scalar_prefetch = 0 : i64, scratch_operands = 0 : i64, tpu.core_type = #tpu.core_type<tc>, window_params = [{transform_indices = @transform_0, window_bounds = array<i64: 8, 1024>}, {pipeline_mode = #tpu.pipeline_mode<synchronous>, transform_indices = @transform_1, window_bounds = array<i64: 1024, 512>}, {pipeline_mode = #tpu.pipeline_mode<synchronous>, transform_indices = @transform_2, window_bounds = array<i64: 1, 512>}, {pipeline_mode = #tpu.pipeline_mode<synchronous>, transform_indices = @transform_3, window_bounds = array<i64: 512, 256>}, {pipeline_mode = #tpu.pipeline_mode<synchronous>, transform_indices = @transform_4, window_bounds = array<i64: 1, 256>}, {pipeline_mode = #tpu.pipeline_mode<synchronous>, transform_indices = @transform_5, window_bounds = array<i64: 256, 32>}, {pipeline_mode = #tpu.pipeline_mode<synchronous>, transform_indices = @transform_6, window_bounds = array<i64: 1, 32>}, {pipeline_mode = #tpu.pipeline_mode<synchronous>, transform_indices = @transform_7, window_bounds = array<i64: 32, 256>}, {pipeline_mode = #tpu.pipeline_mode<synchronous>, transform_indices = @transform_8, window_bounds = array<i64: 1, 256>}, {pipeline_mode = #tpu.pipeline_mode<synchronous>, transform_indices = @transform_9, window_bounds = array<i64: 256, 512>}, {pipeline_mode = #tpu.pipeline_mode<synchronous>, transform_indices = @transform_10, window_bounds = array<i64: 1, 512>}, {pipeline_mode = #tpu.pipeline_mode<synchronous>, transform_indices = @transform_11, window_bounds = array<i64: 512, 1024>}, {pipeline_mode = #tpu.pipeline_mode<synchronous>, transform_indices = @transform_12, window_bounds = array<i64: 1, 1024>}, {transform_indices = @transform_13, window_bounds = array<i64: 8, 1024>}]} {
    %c0 = arith.constant 0 : index
    %c0_0 = arith.constant 0 : index
    %0 = vector.load %arg1[%c0, %c0_0] : memref<8x1024xbf16, #tpu.memory_space<vmem>>, vector<8x1024xbf16>
    %c0_1 = arith.constant 0 : index
    %c0_2 = arith.constant 0 : index
    %1 = vector.load %arg2[%c0_1, %c0_2] : memref<1024x512xbf16, #tpu.memory_space<vmem>>, vector<1024x512xbf16>
    %cst = arith.constant dense<0.000000e+00> : vector<8x512xf32>
    %2 = tpu.matmul %0, %1, %cst {dimension_numbers = #tpu.dot_dimension_numbers<[1], [0], [0], [1], [0, 0, 1, 1], [], []>} : vector<8x1024xbf16>, vector<1024x512xbf16>, vector<8x512xf32> -> vector<8x512xf32>
    %c0_3 = arith.constant 0 : index
    %c0_4 = arith.constant 0 : index
    %3 = vector.load %arg3[%c0_3, %c0_4] : memref<1x512xf32, #tpu.memory_space<vmem>>, vector<1x512xf32>
    %4 = vector.broadcast %3 : vector<1x512xf32> to vector<8x512xf32>
    %5 = arith.addf %2, %4 : vector<8x512xf32>
    %cst_5 = arith.constant 0.000000e+00 : f32
    %6 = vector.broadcast %cst_5 : f32 to vector<8x512xf32>
    %7 = arith.maximumf %5, %6 : vector<8x512xf32>
    %8 = arith.truncf %7 : vector<8x512xf32> to vector<8x512xbf16>
    %c0_6 = arith.constant 0 : index
    %c0_7 = arith.constant 0 : index
    %9 = vector.load %arg4[%c0_6, %c0_7] : memref<512x256xbf16, #tpu.memory_space<vmem>>, vector<512x256xbf16>
    %cst_8 = arith.constant dense<0.000000e+00> : vector<8x256xf32>
    %10 = tpu.matmul %8, %9, %cst_8 {dimension_numbers = #tpu.dot_dimension_numbers<[1], [0], [0], [1], [0, 0, 1, 1], [], []>} : vector<8x512xbf16>, vector<512x256xbf16>, vector<8x256xf32> -> vector<8x256xf32>
    %c0_9 = arith.constant 0 : index
    %c0_10 = arith.constant 0 : index
    %11 = vector.load %arg5[%c0_9, %c0_10] : memref<1x256xf32, #tpu.memory_space<vmem>>, vector<1x256xf32>
    %12 = vector.broadcast %11 : vector<1x256xf32> to vector<8x256xf32>
    %13 = arith.addf %10, %12 : vector<8x256xf32>
    %cst_11 = arith.constant 0.000000e+00 : f32
    %14 = vector.broadcast %cst_11 : f32 to vector<8x256xf32>
    %15 = arith.maximumf %13, %14 : vector<8x256xf32>
    %16 = arith.truncf %15 : vector<8x256xf32> to vector<8x256xbf16>
    %c0_12 = arith.constant 0 : index
    %c0_13 = arith.constant 0 : index
    %17 = vector.load %arg6[%c0_12, %c0_13] : memref<256x32xbf16, #tpu.memory_space<vmem>>, vector<256x32xbf16>
    %cst_14 = arith.constant dense<0.000000e+00> : vector<8x32xf32>
    %18 = tpu.matmul %16, %17, %cst_14 {dimension_numbers = #tpu.dot_dimension_numbers<[1], [0], [0], [1], [0, 0, 1, 1], [], []>} : vector<8x256xbf16>, vector<256x32xbf16>, vector<8x32xf32> -> vector<8x32xf32>
    %c0_15 = arith.constant 0 : index
    %c0_16 = arith.constant 0 : index
    %19 = vector.load %arg7[%c0_15, %c0_16] : memref<1x32xf32, #tpu.memory_space<vmem>>, vector<1x32xf32>
    %20 = vector.broadcast %19 : vector<1x32xf32> to vector<8x32xf32>
    %21 = arith.addf %18, %20 : vector<8x32xf32>
    %22 = arith.truncf %21 : vector<8x32xf32> to vector<8x32xbf16>
    %c0_17 = arith.constant 0 : index
    %c0_18 = arith.constant 0 : index
    %23 = vector.load %arg8[%c0_17, %c0_18] : memref<32x256xbf16, #tpu.memory_space<vmem>>, vector<32x256xbf16>
    %cst_19 = arith.constant dense<0.000000e+00> : vector<8x256xf32>
    %24 = tpu.matmul %22, %23, %cst_19 {dimension_numbers = #tpu.dot_dimension_numbers<[1], [0], [0], [1], [0, 0, 1, 1], [], []>} : vector<8x32xbf16>, vector<32x256xbf16>, vector<8x256xf32> -> vector<8x256xf32>
    %c0_20 = arith.constant 0 : index
    %c0_21 = arith.constant 0 : index
    %25 = vector.load %arg9[%c0_20, %c0_21] : memref<1x256xf32, #tpu.memory_space<vmem>>, vector<1x256xf32>
    %26 = vector.broadcast %25 : vector<1x256xf32> to vector<8x256xf32>
    %27 = arith.addf %24, %26 : vector<8x256xf32>
    %cst_22 = arith.constant 0.000000e+00 : f32
    %28 = vector.broadcast %cst_22 : f32 to vector<8x256xf32>
    %29 = arith.maximumf %27, %28 : vector<8x256xf32>
    %30 = arith.truncf %29 : vector<8x256xf32> to vector<8x256xbf16>
    %c0_23 = arith.constant 0 : index
    %c0_24 = arith.constant 0 : index
    %31 = vector.load %arg10[%c0_23, %c0_24] : memref<256x512xbf16, #tpu.memory_space<vmem>>, vector<256x512xbf16>
    %cst_25 = arith.constant dense<0.000000e+00> : vector<8x512xf32>
    %32 = tpu.matmul %30, %31, %cst_25 {dimension_numbers = #tpu.dot_dimension_numbers<[1], [0], [0], [1], [0, 0, 1, 1], [], []>} : vector<8x256xbf16>, vector<256x512xbf16>, vector<8x512xf32> -> vector<8x512xf32>
    %c0_26 = arith.constant 0 : index
    %c0_27 = arith.constant 0 : index
    %33 = vector.load %arg11[%c0_26, %c0_27] : memref<1x512xf32, #tpu.memory_space<vmem>>, vector<1x512xf32>
    %34 = vector.broadcast %33 : vector<1x512xf32> to vector<8x512xf32>
    %35 = arith.addf %32, %34 : vector<8x512xf32>
    %cst_28 = arith.constant 0.000000e+00 : f32
    %36 = vector.broadcast %cst_28 : f32 to vector<8x512xf32>
    %37 = arith.maximumf %35, %36 : vector<8x512xf32>
    %38 = arith.truncf %37 : vector<8x512xf32> to vector<8x512xbf16>
    %c0_29 = arith.constant 0 : index
    %c0_30 = arith.constant 0 : index
    %39 = vector.load %arg12[%c0_29, %c0_30] : memref<512x1024xbf16, #tpu.memory_space<vmem>>, vector<512x1024xbf16>
    %cst_31 = arith.constant dense<0.000000e+00> : vector<8x1024xf32>
    %40 = tpu.matmul %38, %39, %cst_31 {dimension_numbers = #tpu.dot_dimension_numbers<[1], [0], [0], [1], [0, 0, 1, 1], [], []>} : vector<8x512xbf16>, vector<512x1024xbf16>, vector<8x1024xf32> -> vector<8x1024xf32>
    %c0_32 = arith.constant 0 : index
    %c0_33 = arith.constant 0 : index
    %41 = vector.load %arg13[%c0_32, %c0_33] : memref<1x1024xf32, #tpu.memory_space<vmem>>, vector<1x1024xf32>
    %42 = vector.broadcast %41 : vector<1x1024xf32> to vector<8x1024xf32>
    %43 = arith.addf %40, %42 : vector<8x1024xf32>
    %cst_34 = arith.constant 0.000000e+00 : f32
    %44 = vector.broadcast %cst_34 : f32 to vector<8x1024xf32>
    %45 = arith.subf %44, %43 : vector<8x1024xf32>
    %46 = math.exp %45 : vector<8x1024xf32>
    %cst_35 = arith.constant 1.000000e+00 : f32
    %47 = vector.broadcast %cst_35 : f32 to vector<8x1024xf32>
    %48 = arith.addf %47, %46 : vector<8x1024xf32>
    %49 = tpu.reciprocal %48 {approx = true} : vector<8x1024xf32> -> vector<8x1024xf32>
    %c0_36 = arith.constant 0 : index
    %c0_37 = arith.constant 0 : index
    %50 = vector.load %arg14[%c0_36, %c0_37] : memref<8x1024xf32, #tpu.memory_space<vmem>>, vector<8x1024xf32>
    tpu.vector_store %arg14[%c0_36, %c0_37], %49 {strides = array<i32>} : memref<8x1024xf32, #tpu.memory_space<vmem>>, vector<8x1024xf32>,
    return
  }
  func.func @transform_0(%arg0: i32) -> (i32, i32) {
    %c0_i32 = arith.constant 0 : i32
    %c0_i32_0 = arith.constant 0 : i32
    return %arg0, %c0_i32 : i32, i32
  }
  func.func @transform_1(%arg0: i32) -> (i32, i32) {
    %c0_i32 = arith.constant 0 : i32
    %c0_i32_0 = arith.constant 0 : i32
    %c0_i32_1 = arith.constant 0 : i32
    return %c0_i32, %c0_i32_0 : i32, i32
  }
  func.func @transform_2(%arg0: i32) -> (i32, i32) {
    %c0_i32 = arith.constant 0 : i32
    %c0_i32_0 = arith.constant 0 : i32
    %c0_i32_1 = arith.constant 0 : i32
    return %c0_i32, %c0_i32_0 : i32, i32
  }
  func.func @transform_3(%arg0: i32) -> (i32, i32) {
    %c0_i32 = arith.constant 0 : i32
    %c0_i32_0 = arith.constant 0 : i32
    %c0_i32_1 = arith.constant 0 : i32
    return %c0_i32, %c0_i32_0 : i32, i32
  }
  func.func @transform_4(%arg0: i32) -> (i32, i32) {
    %c0_i32 = arith.constant 0 : i32
    %c0_i32_0 = arith.constant 0 : i32
    %c0_i32_1 = arith.constant 0 : i32
    return %c0_i32, %c0_i32_0 : i32, i32
  }
  func.func @transform_5(%arg0: i32) -> (i32, i32) {
    %c0_i32 = arith.constant 0 : i32
    %c0_i32_0 = arith.constant 0 : i32
    %c0_i32_1 = arith.constant 0 : i32
    return %c0_i32, %c0_i32_0 : i32, i32
  }
  func.func @transform_6(%arg0: i32) -> (i32, i32) {
    %c0_i32 = arith.constant 0 : i32
    %c0_i32_0 = arith.constant 0 : i32
    %c0_i32_1 = arith.constant 0 : i32
    return %c0_i32, %c0_i32_0 : i32, i32
  }
  func.func @transform_7(%arg0: i32) -> (i32, i32) {
    %c0_i32 = arith.constant 0 : i32
    %c0_i32_0 = arith.constant 0 : i32
    %c0_i32_1 = arith.constant 0 : i32
    return %c0_i32, %c0_i32_0 : i32, i32
  }
  func.func @transform_8(%arg0: i32) -> (i32, i32) {
    %c0_i32 = arith.constant 0 : i32
    %c0_i32_0 = arith.constant 0 : i32
    %c0_i32_1 = arith.constant 0 : i32
    return %c0_i32, %c0_i32_0 : i32, i32
  }
  func.func @transform_9(%arg0: i32) -> (i32, i32) {
    %c0_i32 = arith.constant 0 : i32
    %c0_i32_0 = arith.constant 0 : i32
    %c0_i32_1 = arith.constant 0 : i32
    return %c0_i32, %c0_i32_0 : i32, i32
  }
  func.func @transform_10(%arg0: i32) -> (i32, i32) {
    %c0_i32 = arith.constant 0 : i32
    %c0_i32_0 = arith.constant 0 : i32
    %c0_i32_1 = arith.constant 0 : i32
    return %c0_i32, %c0_i32_0 : i32, i32
  }
  func.func @transform_11(%arg0: i32) -> (i32, i32) {
    %c0_i32 = arith.constant 0 : i32
    %c0_i32_0 = arith.constant 0 : i32
    %c0_i32_1 = arith.constant 0 : i32
    return %c0_i32, %c0_i32_0 : i32, i32
  }
  func.func @transform_12(%arg0: i32) -> (i32, i32) {
    %c0_i32 = arith.constant 0 : i32
    %c0_i32_0 = arith.constant 0 : i32
    %c0_i32_1 = arith.constant 0 : i32
    return %c0_i32, %c0_i32_0 : i32, i32
  }
  func.func @transform_13(%arg0: i32) -> (i32, i32) {
    %c0_i32 = arith.constant 0 : i32
    %c0_i32_0 = arith.constant 0 : i32
    return %arg0, %c0_i32 : i32, i32
  }
}

</mosaic_0001>

<llo_original>
// kernel: _lambda_.1
$region0: #{_lambda_.1}
  #allocation0 [shape = 'u32[]', space=smem, size = 0x4, offset = 0x4, fixed_abs, tag = 'smem constant byte address 0x4 - core index']
  #allocation1 [shape = 'u32[144,128]{1,0:T(1,128)}', space=vmem, size = 0x12000, scoped, tag = 'internal scratch']
  %s0 = inlined_call_operand.vmem [shape: bf16[8,1024], index: 0, kind: input, shape index: {}]
  %s1 = inlined_call_operand.hbm [shape: bf16[1024,512], index: 1, kind: input, shape index: {}]
  %s2 = inlined_call_operand.vmem [shape: f32[1,512], index: 2, kind: input, shape index: {}]
  %s3 = inlined_call_operand.hbm [shape: bf16[512,256], index: 3, kind: input, shape index: {}]
  %s4 = inlined_call_operand.vmem [shape: f32[1,256], index: 4, kind: input, shape index: {}]
  %s5 = inlined_call_operand.vmem [shape: bf16[256,32], index: 5, kind: input, shape index: {}]
  %s6 = inlined_call_operand.vmem [shape: f32[1,32], index: 6, kind: input, shape index: {}]
  %s7 = inlined_call_operand.vmem [shape: bf16[32,256], index: 7, kind: input, shape index: {}]
  %s8 = inlined_call_operand.vmem [shape: f32[1,256], index: 8, kind: input, shape index: {}]
  %s9 = inlined_call_operand.hbm [shape: bf16[256,512], index: 9, kind: input, shape index: {}]
  %s10 = inlined_call_operand.vmem [shape: f32[1,512], index: 10, kind: input, shape index: {}]
  %s11 = inlined_call_operand.hbm [shape: bf16[512,1024], index: 11, kind: input, shape index: {}]
  %s12 = inlined_call_operand.vmem [shape: f32[1,1024], index: 12, kind: input, shape index: {}]
  %s13 = inlined_call_operand.vmem [shape: f32[8,1024], index: 13, kind: output, shape index: {}]
  %s14 = sld [smem:[#allocation0]]
  $region78: #{_lambda_.1} parent=0
    _
  %s16 = ssub.s32 1, %s14
  %s17 = scalar_select 0, %s16, %s14
  $region1: #{_lambda_.1} parent=0
    #allocation2 [shape = 'u8[1048576]{0}', space=vmem, size = 0x100000, scoped, tag = 'input window, operand 1, single buffered']
    #allocation3 [shape = 's32[1]{0}', space=sflag, size = 0x4, scoped, tag = 'scoped memory for _lambda_.1']
    #allocation4 [shape = 'u8[262144]{0}', space=vmem, size = 0x40000, scoped, tag = 'input window, operand 3, single buffered']
    #allocation5 [shape = 's32[1]{0}', space=sflag, size = 0x4, scoped, tag = 'scoped memory for _lambda_.1']
    #allocation6 [shape = 'u8[262144]{0}', space=vmem, size = 0x40000, scoped, tag = 'input window, operand 9, single buffered']
    #allocation7 [shape = 'u8[1048576]{0}', space=vmem, size = 0x100000, scoped, tag = 'input window, operand 11, single buffered']
    #allocation8 [shape = 's32[1]{0}', space=sflag, size = 0x4, scoped, tag = 'scoped memory for _lambda_.1']
    %18 = vsyncpa [#allocation3], 0
    %19 = vsyncpa [#allocation5], 0
    %20 = vsyncpa [#allocation8], 0
    // Predicated region
    $region2: #{_lambda_.1} parent=1 // pred_check
      _
    $region3: #{_lambda_.1} parent=1 // pred_check_branch
      %22 = sbr.rel (0) target = $region5
    $region4: #{_lambda_.1} parent=1 // pred_region
      _
    $region5: #{_lambda_.1} parent=1 // pred_fallthru
      _
    // Predicated region
    $region6: #{_lambda_.1} parent=1 // pred_check
      _
    $region7: #{_lambda_.1} parent=1 // pred_check_branch
      %24 = sbr.rel (0) target = $region9
    $region8: #{_lambda_.1} parent=1 // pred_region
      %s26 = ssub.s32 32768, 32768
      %27 = vsyncadd [#allocation3], %s26
      %s28 = sshll.u32 [#allocation2], 4
      %s29 = int_to_ptr.vmem [resolvable:$true] %s28
      %34 = dma.hbm_to_vmem [thread:$0]  %s1, 32768, %s29, [#allocation3], 256, 256, 16
    $region9: #{_lambda_.1} parent=1 // pred_fallthru
      _
    // Predicated region
    $region10: #{_lambda_.1} parent=1 // pred_check
      _
    $region11: #{_lambda_.1} parent=1 // pred_check_branch
      %36 = sbr.rel (0) target = $region13
    $region12: #{_lambda_.1} parent=1 // pred_region
      _
    $region13: #{_lambda_.1} parent=1 // pred_fallthru
      _
    // Predicated region
    $region14: #{_lambda_.1} parent=1 // pred_check
      _
    $region15: #{_lambda_.1} parent=1 // pred_check_branch
      %38 = sbr.rel (0) target = $region17
    $region16: #{_lambda_.1} parent=1 // pred_region
      %s40 = ssub.s32 8192, 8192
      %41 = vsyncadd [#allocation5], %s40
      %s42 = sshll.u32 [#allocation4], 4
      %s43 = int_to_ptr.vmem [resolvable:$true] %s42
      %48 = dma.hbm_to_vmem [thread:$0]  %s3, 8192, %s43, [#allocation5], 128, 128, 8
    $region17: #{_lambda_.1} parent=1 // pred_fallthru
      _
    // Predicated region
    $region18: #{_lambda_.1} parent=1 // pred_check
      _
    $region19: #{_lambda_.1} parent=1 // pred_check_branch
      %50 = sbr.rel (0) target = $region21
    $region20: #{_lambda_.1} parent=1 // pred_region
      _
    $region21: #{_lambda_.1} parent=1 // pred_fallthru
      _
    // Predicated region
    $region22: #{_lambda_.1} parent=1 // pred_check
      _
    $region23: #{_lambda_.1} parent=1 // pred_check_branch
      %52 = sbr.rel (0) target = $region25
    $region24: #{_lambda_.1} parent=1 // pred_region
      _
    $region25: #{_lambda_.1} parent=1 // pred_fallthru
      _
    // Predicated region
    $region26: #{_lambda_.1} parent=1 // pred_check
      _
    $region27: #{_lambda_.1} parent=1 // pred_check_branch
      %54 = sbr.rel (0) target = $region29
    $region28: #{_lambda_.1} parent=1 // pred_region
      _
    $region29: #{_lambda_.1} parent=1 // pred_fallthru
      _
    // Predicated region
    $region30: #{_lambda_.1} parent=1 // pred_check
      _
    $region31: #{_lambda_.1} parent=1 // pred_check_branch
      %56 = sbr.rel (0) target = $region33
    $region32: #{_lambda_.1} parent=1 // pred_region
      _
    $region33: #{_lambda_.1} parent=1 // pred_fallthru
      _
    // Predicated region
    $region34: #{_lambda_.1} parent=1 // pred_check
      _
    $region35: #{_lambda_.1} parent=1 // pred_check_branch
      %58 = sbr.rel (0) target = $region37
    $region36: #{_lambda_.1} parent=1 // pred_region
      _
    $region37: #{_lambda_.1} parent=1 // pred_fallthru
      _
    // Predicated region
    $region38: #{_lambda_.1} parent=1 // pred_check
      _
    $region39: #{_lambda_.1} parent=1 // pred_check_branch
      %60 = sbr.rel (0) target = $region41
    $region40: #{_lambda_.1} parent=1 // pred_region
      %s62 = ssub.s32 8192, 8192
      %63 = vsyncadd [#allocation5], %s62
      %s64 = sshll.u32 [#allocation6], 4
      %s65 = int_to_ptr.vmem [resolvable:$true] %s64
      %70 = dma.hbm_to_vmem [thread:$0]  %s9, 8192, %s65, [#allocation5], 256, 256, 16
    $region41: #{_lambda_.1} parent=1 // pred_fallthru
      _
    // Predicated region
    $region42: #{_lambda_.1} parent=1 // pred_check
      _
    $region43: #{_lambda_.1} parent=1 // pred_check_branch
      %72 = sbr.rel (0) target = $region45
    $region44: #{_lambda_.1} parent=1 // pred_region
      _
    $region45: #{_lambda_.1} parent=1 // pred_fallthru
      _
    // Predicated region
    $region46: #{_lambda_.1} parent=1 // pred_check
      _
    $region47: #{_lambda_.1} parent=1 // pred_check_branch
      %74 = sbr.rel (0) target = $region49
    $region48: #{_lambda_.1} parent=1 // pred_region
      %s76 = ssub.s32 32768, 32768
      %77 = vsyncadd [#allocation8], %s76
      %s78 = sshll.u32 [#allocation7], 4
      %s79 = int_to_ptr.vmem [resolvable:$true] %s78
      %84 = dma.hbm_to_vmem [thread:$0]  %s11, 32768, %s79, [#allocation8], 512, 512, 32
    $region49: #{_lambda_.1} parent=1 // pred_fallthru
      _
    // Predicated region
    $region50: #{_lambda_.1} parent=1 // pred_check
      _
    $region51: #{_lambda_.1} parent=1 // pred_check_branch
      %86 = sbr.rel (0) target = $region53
    $region52: #{_lambda_.1} parent=1 // pred_region
      _
    $region53: #{_lambda_.1} parent=1 // pred_fallthru
      _
    // Predicated region
    $region54: #{_lambda_.1} parent=1 // pred_check
      _
    $region55: #{_lambda_.1} parent=1 // pred_check_branch
      %88 = sbr.rel (0) target = $region57
    $region56: #{_lambda_.1} parent=1 // pred_region
      %89 = dma.done [#allocation3], 32768
    $region57: #{_lambda_.1} parent=1 // pred_fallthru
      _
    // Predicated region
    $region58: #{_lambda_.1} parent=1 // pred_check
      _
    $region59: #{_lambda_.1} parent=1 // pred_check_branch
      %91 = sbr.rel (0) target = $region61
    $region60: #{_lambda_.1} parent=1 // pred_region
      %92 = dma.done [#allocation5], 8192
    $region61: #{_lambda_.1} parent=1 // pred_fallthru
      _
    // Predicated region
    $region62: #{_lambda_.1} parent=1 // pred_check
      _
    $region63: #{_lambda_.1} parent=1 // pred_check_branch
      %94 = sbr.rel (0) target = $region65
    $region64: #{_lambda_.1} parent=1 // pred_region
      %95 = dma.done [#allocation5], 8192
    $region65: #{_lambda_.1} parent=1 // pred_fallthru
      _
    // Predicated region
    $region66: #{_lambda_.1} parent=1 // pred_check
      _
    $region67: #{_lambda_.1} parent=1 // pred_check_branch
      %97 = sbr.rel (0) target = $region69
    $region68: #{_lambda_.1} parent=1 // pred_region
      %98 = dma.done [#allocation8], 32768
    $region69: #{_lambda_.1} parent=1 // pred_fallthru
      _
    %v100 = vld [vmem:[%s0] sm:$0xff]
    %v101 = vld [vmem:[%s0 + $0x8] sm:$0xff]
    %v102 = vld [vmem:[%s0 + $0x10] sm:$0xff]
    %v103 = vld [vmem:[%s0 + $0x18] sm:$0xff]
    %v104 = vld [vmem:[#allocation2] sm:$0xff]
    %v105 = vld [vmem:[#allocation2 + $0x8] sm:$0xff]
    %v106 = vld [vmem:[#allocation2 + $0x10] sm:$0xff]
    %v107 = vld [vmem:[#allocation2 + $0x18] sm:$0xff]
    %v108 = vld [vmem:[#allocation2 + $0x20] sm:$0xff]
    %v109 = vld [vmem:[#allocation2 + $0x28] sm:$0xff]
    %v110 = vld [vmem:[#allocation2 + $0x30] sm:$0xff]
    %v111 = vld [vmem:[#allocation2 + $0x38] sm:$0xff]
    %v112 = vld [vmem:[#allocation2 + $0x40] sm:$0xff]
    %v113 = vld [vmem:[#allocation2 + $0x48] sm:$0xff]
    %v114 = vld [vmem:[#allocation2 + $0x50] sm:$0xff]
    %v115 = vld [vmem:[#allocation2 + $0x58] sm:$0xff]
    %v116 = vld [vmem:[#allocation2 + $0x60] sm:$0xff]
    %v117 = vld [vmem:[#allocation2 + $0x68] sm:$0xff]
    %v118 = vld [vmem:[#allocation2 + $0x70] sm:$0xff]
    %v119 = vld [vmem:[#allocation2 + $0x78] sm:$0xff]
    %v120 = vld [vmem:[#allocation2 + $0x80] sm:$0xff]
    %v121 = vld [vmem:[#allocation2 + $0x88] sm:$0xff]
    %v122 = vld [vmem:[#allocation2 + $0x90] sm:$0xff]
    %v123 = vld [vmem:[#allocation2 + $0x98] sm:$0xff]
    %v124 = vld [vmem:[#allocation2 + $0xa0] sm:$0xff]
    %v125 = vld [vmem:[#allocation2 + $0xa8] sm:$0xff]
    %v126 = vld [vmem:[#allocation2 + $0xb0] sm:$0xff]
    %v127 = vld [vmem:[#allocation2 + $0xb8] sm:$0xff]
    %v128 = vld [vmem:[#allocation2 + $0xc0] sm:$0xff]
    %v129 = vld [vmem:[#allocation2 + $0xc8] sm:$0xff]
    %v130 = vld [vmem:[#allocation2 + $0xd0] sm:$0xff]
    %v131 = vld [vmem:[#allocation2 + $0xd8] sm:$0xff]
    %v132 = vld [vmem:[#allocation2 + $0xe0] sm:$0xff]
    %v133 = vld [vmem:[#allocation2 + $0xe8] sm:$0xff]
    %v134 = vld [vmem:[#allocation2 + $0xf0] sm:$0xff]
    %v135 = vld [vmem:[#allocation2 + $0xf8] sm:$0xff]
    %v136 = vld [vmem:[#allocation2 + $0x100] sm:$0xff]
    %v137 = vld [vmem:[#allocation2 + $0x108] sm:$0xff]
    %v138 = vld [vmem:[#allocation2 + $0x110] sm:$0xff]
    %v139 = vld [vmem:[#allocation2 + $0x118] sm:$0xff]
    %v140 = vld [vmem:[#allocation2 + $0x120] sm:$0xff]
    %v141 = vld [vmem:[#allocation2 + $0x128] sm:$0xff]
    %v142 = vld [vmem:[#allocation2 + $0x130] sm:$0xff]
    %v143 = vld [vmem:[#allocation2 + $0x138] sm:$0xff]
    %v144 = vld [vmem:[#allocation2 + $0x140] sm:$0xff]
    %v145 = vld [vmem:[#allocation2 + $0x148] sm:$0xff]
    %v146 = vld [vmem:[#allocation2 + $0x150] sm:$0xff]
    %v147 = vld [vmem:[#allocation2 + $0x158] sm:$0xff]
    %v148 = vld [vmem:[#allocation2 + $0x160] sm:$0xff]
    %v149 = vld [vmem:[#allocation2 + $0x168] sm:$0xff]
    %v150 = vld [vmem:[#allocation2 + $0x170] sm:$0xff]
    %v151 = vld [vmem:[#allocation2 + $0x178] sm:$0xff]
    %v152 = vld [vmem:[#allocation2 + $0x180] sm:$0xff]
    %v153 = vld [vmem:[#allocation2 + $0x188] sm:$0xff]
    %v154 = vld [vmem:[#allocation2 + $0x190] sm:$0xff]
    %v155 = vld [vmem:[#allocation2 + $0x198] sm:$0xff]
    %v156 = vld [vmem:[#allocation2 + $0x1a0] sm:$0xff]
    %v157 = vld [vmem:[#allocation2 + $0x1a8] sm:$0xff]
    %v158 = vld [vmem:[#allocation2 + $0x1b0] sm:$0xff]
    %v159 = vld [vmem:[#allocation2 + $0x1b8] sm:$0xff]
    %v160 = vld [vmem:[#allocation2 + $0x1c0] sm:$0xff]
    %v161 = vld [vmem:[#allocation2 + $0x1c8] sm:$0xff]
    %v162 = vld [vmem:[#allocation2 + $0x1d0] sm:$0xff]
    %v163 = vld [vmem:[#allocation2 + $0x1d8] sm:$0xff]
    %v164 = vld [vmem:[#allocation2 + $0x1e0] sm:$0xff]
    %v165 = vld [vmem:[#allocation2 + $0x1e8] sm:$0xff]
    %v166 = vld [vmem:[#allocation2 + $0x1f0] sm:$0xff]
    %v167 = vld [vmem:[#allocation2 + $0x1f8] sm:$0xff]
    %v168 = vld [vmem:[#allocation2 + $0x200] sm:$0xff]
    %v169 = vld [vmem:[#allocation2 + $0x208] sm:$0xff]
    %v170 = vld [vmem:[#allocation2 + $0x210] sm:$0xff]
    %v171 = vld [vmem:[#allocation2 + $0x218] sm:$0xff]
    %v172 = vld [vmem:[#allocation2 + $0x220] sm:$0xff]
    %v173 = vld [vmem:[#allocation2 + $0x228] sm:$0xff]
    %v174 = vld [vmem:[#allocation2 + $0x230] sm:$0xff]
    %v175 = vld [vmem:[#allocation2 + $0x238] sm:$0xff]
    %v176 = vld [vmem:[#allocation2 + $0x240] sm:$0xff]
    %v177 = vld [vmem:[#allocation2 + $0x248] sm:$0xff]
    %v178 = vld [vmem:[#allocation2 + $0x250] sm:$0xff]
    %v179 = vld [vmem:[#allocation2 + $0x258] sm:$0xff]
    %v180 = vld [vmem:[#allocation2 + $0x260] sm:$0xff]
    %v181 = vld [vmem:[#allocation2 + $0x268] sm:$0xff]
    %v182 = vld [vmem:[#allocation2 + $0x270] sm:$0xff]
    %v183 = vld [vmem:[#allocation2 + $0x278] sm:$0xff]
    %v184 = vld [vmem:[#allocation2 + $0x280] sm:$0xff]
    %v185 = vld [vmem:[#allocation2 + $0x288] sm:$0xff]
    %v186 = vld [vmem:[#allocation2 + $0x290] sm:$0xff]
    %v187 = vld [vmem:[#allocation2 + $0x298] sm:$0xff]
    %v188 = vld [vmem:[#allocation2 + $0x2a0] sm:$0xff]
    %v189 = vld [vmem:[#allocation2 + $0x2a8] sm:$0xff]
    %v190 = vld [vmem:[#allocation2 + $0x2b0] sm:$0xff]
    %v191 = vld [vmem:[#allocation2 + $0x2b8] sm:$0xff]
    %v192 = vld [vmem:[#allocation2 + $0x2c0] sm:$0xff]
    %v193 = vld [vmem:[#allocation2 + $0x2c8] sm:$0xff]
    %v194 = vld [vmem:[#allocation2 + $0x2d0] sm:$0xff]
    %v195 = vld [vmem:[#allocation2 + $0x2d8] sm:$0xff]
    %v196 = vld [vmem:[#allocation2 + $0x2e0] sm:$0xff]
    %v197 = vld [vmem:[#allocation2 + $0x2e8] sm:$0xff]
    %v198 = vld [vmem:[#allocation2 + $0x2f0] sm:$0xff]
    %v199 = vld [vmem:[#allocation2 + $0x2f8] sm:$0xff]
    %v200 = vld [vmem:[#allocation2 + $0x300] sm:$0xff]
    %v201 = vld [vmem:[#allocation2 + $0x308] sm:$0xff]
    %v202 = vld [vmem:[#allocation2 + $0x310] sm:$0xff]
    %v203 = vld [vmem:[#allocation2 + $0x318] sm:$0xff]
    %v204 = vld [vmem:[#allocation2 + $0x320] sm:$0xff]
    %v205 = vld [vmem:[#allocation2 + $0x328] sm:$0xff]
    %v206 = vld [vmem:[#allocation2 + $0x330] sm:$0xff]
    %v207 = vld [vmem:[#allocation2 + $0x338] sm:$0xff]
    %v208 = vld [vmem:[#allocation2 + $0x340] sm:$0xff]
    %v209 = vld [vmem:[#allocation2 + $0x348] sm:$0xff]
    %v210 = vld [vmem:[#allocation2 + $0x350] sm:$0xff]
    %v211 = vld [vmem:[#allocation2 + $0x358] sm:$0xff]
    %v212 = vld [vmem:[#allocation2 + $0x360] sm:$0xff]
    %v213 = vld [vmem:[#allocation2 + $0x368] sm:$0xff]
    %v214 = vld [vmem:[#allocation2 + $0x370] sm:$0xff]
    %v215 = vld [vmem:[#allocation2 + $0x378] sm:$0xff]
    %v216 = vld [vmem:[#allocation2 + $0x380] sm:$0xff]
    %v217 = vld [vmem:[#allocation2 + $0x388] sm:$0xff]
    %v218 = vld [vmem:[#allocation2 + $0x390] sm:$0xff]
    %v219 = vld [vmem:[#allocation2 + $0x398] sm:$0xff]
    %v220 = vld [vmem:[#allocation2 + $0x3a0] sm:$0xff]
    %v221 = vld [vmem:[#allocation2 + $0x3a8] sm:$0xff]
    %v222 = vld [vmem:[#allocation2 + $0x3b0] sm:$0xff]
    %v223 = vld [vmem:[#allocation2 + $0x3b8] sm:$0xff]
    %v224 = vld [vmem:[#allocation2 + $0x3c0] sm:$0xff]
    %v225 = vld [vmem:[#allocation2 + $0x3c8] sm:$0xff]
    %v226 = vld [vmem:[#allocation2 + $0x3d0] sm:$0xff]
    %v227 = vld [vmem:[#allocation2 + $0x3d8] sm:$0xff]
    %v228 = vld [vmem:[#allocation2 + $0x3e0] sm:$0xff]
    %v229 = vld [vmem:[#allocation2 + $0x3e8] sm:$0xff]
    %v230 = vld [vmem:[#allocation2 + $0x3f0] sm:$0xff]
    %v231 = vld [vmem:[#allocation2 + $0x3f8] sm:$0xff]
    %v232 = vld [vmem:[#allocation2 + $0x400] sm:$0xff]
    %v233 = vld [vmem:[#allocation2 + $0x408] sm:$0xff]
    %v234 = vld [vmem:[#allocation2 + $0x410] sm:$0xff]
    %v235 = vld [vmem:[#allocation2 + $0x418] sm:$0xff]
    %v236 = vld [vmem:[#allocation2 + $0x420] sm:$0xff]
    %v237 = vld [vmem:[#allocation2 + $0x428] sm:$0xff]
    %v238 = vld [vmem:[#allocation2 + $0x430] sm:$0xff]
    %v239 = vld [vmem:[#allocation2 + $0x438] sm:$0xff]
    %v240 = vld [vmem:[#allocation2 + $0x440] sm:$0xff]
    %v241 = vld [vmem:[#allocation2 + $0x448] sm:$0xff]
    %v242 = vld [vmem:[#allocation2 + $0x450] sm:$0xff]
    %v243 = vld [vmem:[#allocation2 + $0x458] sm:$0xff]
    %v244 = vld [vmem:[#allocation2 + $0x460] sm:$0xff]
    %v245 = vld [vmem:[#allocation2 + $0x468] sm:$0xff]
    %v246 = vld [vmem:[#allocation2 + $0x470] sm:$0xff]
    %v247 = vld [vmem:[#allocation2 + $0x478] sm:$0xff]
    %v248 = vld [vmem:[#allocation2 + $0x480] sm:$0xff]
    %v249 = vld [vmem:[#allocation2 + $0x488] sm:$0xff]
    %v250 = vld [vmem:[#allocation2 + $0x490] sm:$0xff]
    %v251 = vld [vmem:[#allocation2 + $0x498] sm:$0xff]
    %v252 = vld [vmem:[#allocation2 + $0x4a0] sm:$0xff]
    %v253 = vld [vmem:[#allocation2 + $0x4a8] sm:$0xff]
    %v254 = vld [vmem:[#allocation2 + $0x4b0] sm:$0xff]
    %v255 = vld [vmem:[#allocation2 + $0x4b8] sm:$0xff]
    %v256 = vld [vmem:[#allocation2 + $0x4c0] sm:$0xff]
    %v257 = vld [vmem:[#allocation2 + $0x4c8] sm:$0xff]
    %v258 = vld [vmem:[#allocation2 + $0x4d0] sm:$0xff]
    %v259 = vld [vmem:[#allocation2 + $0x4d8] sm:$0xff]
    %v260 = vld [vmem:[#allocation2 + $0x4e0] sm:$0xff]
    %v261 = vld [vmem:[#allocation2 + $0x4e8] sm:$0xff]
    %v262 = vld [vmem:[#allocation2 + $0x4f0] sm:$0xff]
    %v263 = vld [vmem:[#allocation2 + $0x4f8] sm:$0xff]
    %v264 = vld [vmem:[#allocation2 + $0x500] sm:$0xff]
    %v265 = vld [vmem:[#allocation2 + $0x508] sm:$0xff]
    %v266 = vld [vmem:[#allocation2 + $0x510] sm:$0xff]
    %v267 = vld [vmem:[#allocation2 + $0x518] sm:$0xff]
    %v268 = vld [vmem:[#allocation2 + $0x520] sm:$0xff]
    %v269 = vld [vmem:[#allocation2 + $0x528] sm:$0xff]
    %v270 = vld [vmem:[#allocation2 + $0x530] sm:$0xff]
    %v271 = vld [vmem:[#allocation2 + $0x538] sm:$0xff]
    %v272 = vld [vmem:[#allocation2 + $0x540] sm:$0xff]
    %v273 = vld [vmem:[#allocation2 + $0x548] sm:$0xff]
    %v274 = vld [vmem:[#allocation2 + $0x550] sm:$0xff]
    %v275 = vld [vmem:[#allocation2 + $0x558] sm:$0xff]
    %v276 = vld [vmem:[#allocation2 + $0x560] sm:$0xff]
    %v277 = vld [vmem:[#allocation2 + $0x568] sm:$0xff]
    %v278 = vld [vmem:[#allocation2 + $0x570] sm:$0xff]
    %v279 = vld [vmem:[#allocation2 + $0x578] sm:$0xff]
    %v280 = vld [vmem:[#allocation2 + $0x580] sm:$0xff]
    %v281 = vld [vmem:[#allocation2 + $0x588] sm:$0xff]
    %v282 = vld [vmem:[#allocation2 + $0x590] sm:$0xff]
    %v283 = vld [vmem:[#allocation2 + $0x598] sm:$0xff]
    %v284 = vld [vmem:[#allocation2 + $0x5a0] sm:$0xff]
    %v285 = vld [vmem:[#allocation2 + $0x5a8] sm:$0xff]
    %v286 = vld [vmem:[#allocation2 + $0x5b0] sm:$0xff]
    %v287 = vld [vmem:[#allocation2 + $0x5b8] sm:$0xff]
    %v288 = vld [vmem:[#allocation2 + $0x5c0] sm:$0xff]
    %v289 = vld [vmem:[#allocation2 + $0x5c8] sm:$0xff]
    %v290 = vld [vmem:[#allocation2 + $0x5d0] sm:$0xff]
    %v291 = vld [vmem:[#allocation2 + $0x5d8] sm:$0xff]
    %v292 = vld [vmem:[#allocation2 + $0x5e0] sm:$0xff]
    %v293 = vld [vmem:[#allocation2 + $0x5e8] sm:$0xff]
    %v294 = vld [vmem:[#allocation2 + $0x5f0] sm:$0xff]
    %v295 = vld [vmem:[#allocation2 + $0x5f8] sm:$0xff]
    %v296 = vld [vmem:[#allocation2 + $0x600] sm:$0xff]
    %v297 = vld [vmem:[#allocation2 + $0x608] sm:$0xff]
    %v298 = vld [vmem:[#allocation2 + $0x610] sm:$0xff]
    %v299 = vld [vmem:[#allocation2 + $0x618] sm:$0xff]
    %v300 = vld [vmem:[#allocation2 + $0x620] sm:$0xff]
    %v301 = vld [vmem:[#allocation2 + $0x628] sm:$0xff]
    %v302 = vld [vmem:[#allocation2 + $0x630] sm:$0xff]
    %v303 = vld [vmem:[#allocation2 + $0x638] sm:$0xff]
    %v304 = vld [vmem:[#allocation2 + $0x640] sm:$0xff]
    %v305 = vld [vmem:[#allocation2 + $0x648] sm:$0xff]
    %v306 = vld [vmem:[#allocation2 + $0x650] sm:$0xff]
    %v307 = vld [vmem:[#allocation2 + $0x658] sm:$0xff]
    %v308 = vld [vmem:[#allocation2 + $0x660] sm:$0xff]
    %v309 = vld [vmem:[#allocation2 + $0x668] sm:$0xff]
    %v310 = vld [vmem:[#allocation2 + $0x670] sm:$0xff]
    %v311 = vld [vmem:[#allocation2 + $0x678] sm:$0xff]
    %v312 = vld [vmem:[#allocation2 + $0x680] sm:$0xff]
    %v313 = vld [vmem:[#allocation2 + $0x688] sm:$0xff]
    %v314 = vld [vmem:[#allocation2 + $0x690] sm:$0xff]
    %v315 = vld [vmem:[#allocation2 + $0x698] sm:$0xff]
    %v316 = vld [vmem:[#allocation2 + $0x6a0] sm:$0xff]
    %v317 = vld [vmem:[#allocation2 + $0x6a8] sm:$0xff]
    %v318 = vld [vmem:[#allocation2 + $0x6b0] sm:$0xff]
    %v319 = vld [vmem:[#allocation2 + $0x6b8] sm:$0xff]
    %v320 = vld [vmem:[#allocation2 + $0x6c0] sm:$0xff]
    %v321 = vld [vmem:[#allocation2 + $0x6c8] sm:$0xff]
    %v322 = vld [vmem:[#allocation2 + $0x6d0] sm:$0xff]
    %v323 = vld [vmem:[#allocation2 + $0x6d8] sm:$0xff]
    %v324 = vld [vmem:[#allocation2 + $0x6e0] sm:$0xff]
    %v325 = vld [vmem:[#allocation2 + $0x6e8] sm:$0xff]
    %v326 = vld [vmem:[#allocation2 + $0x6f0] sm:$0xff]
    %v327 = vld [vmem:[#allocation2 + $0x6f8] sm:$0xff]
    %v328 = vld [vmem:[#allocation2 + $0x700] sm:$0xff]
    %v329 = vld [vmem:[#allocation2 + $0x708] sm:$0xff]
    %v330 = vld [vmem:[#allocation2 + $0x710] sm:$0xff]
    %v331 = vld [vmem:[#allocation2 + $0x718] sm:$0xff]
    %v332 = vld [vmem:[#allocation2 + $0x720] sm:$0xff]
    %v333 = vld [vmem:[#allocation2 + $0x728] sm:$0xff]
    %v334 = vld [vmem:[#allocation2 + $0x730] sm:$0xff]
    %v335 = vld [vmem:[#allocation2 + $0x738] sm:$0xff]
    %v336 = vld [vmem:[#allocation2 + $0x740] sm:$0xff]
    %v337 = vld [vmem:[#allocation2 + $0x748] sm:$0xff]
    %v338 = vld [vmem:[#allocation2 + $0x750] sm:$0xff]
    %v339 = vld [vmem:[#allocation2 + $0x758] sm:$0xff]
    %v340 = vld [vmem:[#allocation2 + $0x760] sm:$0xff]
    %v341 = vld [vmem:[#allocation2 + $0x768] sm:$0xff]
    %v342 = vld [vmem:[#allocation2 + $0x770] sm:$0xff]
    %v343 = vld [vmem:[#allocation2 + $0x778] sm:$0xff]
    %v344 = vld [vmem:[#allocation2 + $0x780] sm:$0xff]
    %v345 = vld [vmem:[#allocation2 + $0x788] sm:$0xff]
    %v346 = vld [vmem:[#allocation2 + $0x790] sm:$0xff]
    %v347 = vld [vmem:[#allocation2 + $0x798] sm:$0xff]
    %v348 = vld [vmem:[#allocation2 + $0x7a0] sm:$0xff]
    %v349 = vld [vmem:[#allocation2 + $0x7a8] sm:$0xff]
    %v350 = vld [vmem:[#allocation2 + $0x7b0] sm:$0xff]
    %v351 = vld [vmem:[#allocation2 + $0x7b8] sm:$0xff]
    %v352 = vld [vmem:[#allocation2 + $0x7c0] sm:$0xff]
    %v353 = vld [vmem:[#allocation2 + $0x7c8] sm:$0xff]
    %v354 = vld [vmem:[#allocation2 + $0x7d0] sm:$0xff]
    %v355 = vld [vmem:[#allocation2 + $0x7d8] sm:$0xff]
    %v356 = vld [vmem:[#allocation2 + $0x7e0] sm:$0xff]
    %v357 = vld [vmem:[#allocation2 + $0x7e8] sm:$0xff]
    %v358 = vld [vmem:[#allocation2 + $0x7f0] sm:$0xff]
    %v359 = vld [vmem:[#allocation2 + $0x7f8] sm:$0xff]
    %v360 = vld [vmem:[%s2] sm:$0xf]
    %v362 = vlaneseq
    %v363 = vshrl.u32 %v362, 7
    %v364 = vsub.s32 0, %v363
    %v365 = vrot.slane %v360, %v364
    %v366 = vlaneseq
    %v367 = vshrl.u32 %v366, 7
    %v368 = vsub.s32 1, %v367
    %v369 = vrot.slane %v360, %v368
    %v370 = vlaneseq
    %v371 = vshrl.u32 %v370, 7
    %v372 = vsub.s32 2, %v371
    %v373 = vrot.slane %v360, %v372
    %v374 = vlaneseq
    %v375 = vshrl.u32 %v374, 7
    %v376 = vsub.s32 3, %v375
    %v377 = vrot.slane %v360, %v376
    %v386 = vunpack.c.l.b16 %v100
    %v387 = vunpack.c.h.b16 %v100
    %v388 = vunpack.c.l.b16 %v101
    %v389 = vunpack.c.h.b16 %v101
    %v390 = vunpack.c.l.b16 %v102
    %v391 = vunpack.c.h.b16 %v102
    %v392 = vunpack.c.l.b16 %v103
    %v393 = vunpack.c.h.b16 %v103
    %v394 = vpack.c.b16 %v386, %v386
    %v395 = vpack.c.b16 %v387, %v387
    %v396 = vpack.c.b16 %v388, %v388
    %v397 = vpack.c.b16 %v389, %v389
    %v398 = vpack.c.b16 %v390, %v390
    %v399 = vpack.c.b16 %v391, %v391
    %v400 = vpack.c.b16 %v392, %v392
    %v401 = vpack.c.b16 %v393, %v393
    %v666 = vunpack.c.l.b16 %v104
    %v667 = vunpack.c.h.b16 %v104
    %v668 = vunpack.c.l.b16 %v105
    %v669 = vunpack.c.h.b16 %v105
    %v670 = vunpack.c.l.b16 %v106
    %v671 = vunpack.c.h.b16 %v106
    %v672 = vunpack.c.l.b16 %v107
    %v673 = vunpack.c.h.b16 %v107
    %v674 = vunpack.c.l.b16 %v108
    %v675 = vunpack.c.h.b16 %v108
    %v676 = vunpack.c.l.b16 %v109
    %v677 = vunpack.c.h.b16 %v109
    %v678 = vunpack.c.l.b16 %v110
    %v679 = vunpack.c.h.b16 %v110
    %v680 = vunpack.c.l.b16 %v111
    %v681 = vunpack.c.h.b16 %v111
    %v682 = vunpack.c.l.b16 %v112
    %v683 = vunpack.c.h.b16 %v112
    %v684 = vunpack.c.l.b16 %v113
    %v685 = vunpack.c.h.b16 %v113
    %v686 = vunpack.c.l.b16 %v114
    %v687 = vunpack.c.h.b16 %v114
    %v688 = vunpack.c.l.b16 %v115
    %v689 = vunpack.c.h.b16 %v115
    %v690 = vunpack.c.l.b16 %v116
    %v691 = vunpack.c.h.b16 %v116
    %v692 = vunpack.c.l.b16 %v117
    %v693 = vunpack.c.h.b16 %v117
    %v694 = vunpack.c.l.b16 %v118
    %v695 = vunpack.c.h.b16 %v118
    %v696 = vunpack.c.l.b16 %v119
    %v697 = vunpack.c.h.b16 %v119
    %v698 = vunpack.c.l.b16 %v120
    %v699 = vunpack.c.h.b16 %v120
    %v700 = vunpack.c.l.b16 %v121
    %v701 = vunpack.c.h.b16 %v121
    %v702 = vunpack.c.l.b16 %v122
    %v703 = vunpack.c.h.b16 %v122
    %v704 = vunpack.c.l.b16 %v123
    %v705 = vunpack.c.h.b16 %v123
    %v706 = vunpack.c.l.b16 %v124
    %v707 = vunpack.c.h.b16 %v124
    %v708 = vunpack.c.l.b16 %v125
    %v709 = vunpack.c.h.b16 %v125
    %v710 = vunpack.c.l.b16 %v126
    %v711 = vunpack.c.h.b16 %v126
    %v712 = vunpack.c.l.b16 %v127
    %v713 = vunpack.c.h.b16 %v127
    %v714 = vunpack.c.l.b16 %v128
    %v715 = vunpack.c.h.b16 %v128
    %v716 = vunpack.c.l.b16 %v129
    %v717 = vunpack.c.h.b16 %v129
    %v718 = vunpack.c.l.b16 %v130
    %v719 = vunpack.c.h.b16 %v130
    %v720 = vunpack.c.l.b16 %v131
    %v721 = vunpack.c.h.b16 %v131
    %v722 = vunpack.c.l.b16 %v132
    %v723 = vunpack.c.h.b16 %v132
    %v724 = vunpack.c.l.b16 %v133
    %v725 = vunpack.c.h.b16 %v133
    %v726 = vunpack.c.l.b16 %v134
    %v727 = vunpack.c.h.b16 %v134
    %v728 = vunpack.c.l.b16 %v135
    %v729 = vunpack.c.h.b16 %v135
    %v730 = vunpack.c.l.b16 %v136
    %v731 = vunpack.c.h.b16 %v136
    %v732 = vunpack.c.l.b16 %v137
    %v733 = vunpack.c.h.b16 %v137
    %v734 = vunpack.c.l.b16 %v138
    %v735 = vunpack.c.h.b16 %v138
    %v736 = vunpack.c.l.b16 %v139
    %v737 = vunpack.c.h.b16 %v139
    %v738 = vunpack.c.l.b16 %v140
    %v739 = vunpack.c.h.b16 %v140
    %v740 = vunpack.c.l.b16 %v141
    %v741 = vunpack.c.h.b16 %v141
    %v742 = vunpack.c.l.b16 %v142
    %v743 = vunpack.c.h.b16 %v142
    %v744 = vunpack.c.l.b16 %v143
    %v745 = vunpack.c.h.b16 %v143
    %v746 = vunpack.c.l.b16 %v144
    %v747 = vunpack.c.h.b16 %v144
    %v748 = vunpack.c.l.b16 %v145
    %v749 = vunpack.c.h.b16 %v145
    %v750 = vunpack.c.l.b16 %v146
    %v751 = vunpack.c.h.b16 %v146
    %v752 = vunpack.c.l.b16 %v147
    %v753 = vunpack.c.h.b16 %v147
    %v754 = vunpack.c.l.b16 %v148
    %v755 = vunpack.c.h.b16 %v148
    %v756 = vunpack.c.l.b16 %v149
    %v757 = vunpack.c.h.b16 %v149
    %v758 = vunpack.c.l.b16 %v150
    %v759 = vunpack.c.h.b16 %v150
    %v760 = vunpack.c.l.b16 %v151
    %v761 = vunpack.c.h.b16 %v151
    %v762 = vunpack.c.l.b16 %v152
    %v763 = vunpack.c.h.b16 %v152
    %v764 = vunpack.c.l.b16 %v153
    %v765 = vunpack.c.h.b16 %v153
    %v766 = vunpack.c.l.b16 %v154
    %v767 = vunpack.c.h.b16 %v154
    %v768 = vunpack.c.l.b16 %v155
    %v769 = vunpack.c.h.b16 %v155
    %v770 = vunpack.c.l.b16 %v156
    %v771 = vunpack.c.h.b16 %v156
    %v772 = vunpack.c.l.b16 %v157
    %v773 = vunpack.c.h.b16 %v157
    %v774 = vunpack.c.l.b16 %v158
    %v775 = vunpack.c.h.b16 %v158
    %v776 = vunpack.c.l.b16 %v159
    %v777 = vunpack.c.h.b16 %v159
    %v778 = vunpack.c.l.b16 %v160
    %v779 = vunpack.c.h.b16 %v160
    %v780 = vunpack.c.l.b16 %v161
    %v781 = vunpack.c.h.b16 %v161
    %v782 = vunpack.c.l.b16 %v162
    %v783 = vunpack.c.h.b16 %v162
    %v784 = vunpack.c.l.b16 %v163
    %v785 = vunpack.c.h.b16 %v163
    %v786 = vunpack.c.l.b16 %v164
    %v787 = vunpack.c.h.b16 %v164
    %v788 = vunpack.c.l.b16 %v165
    %v789 = vunpack.c.h.b16 %v165
    %v790 = vunpack.c.l.b16 %v166
    %v791 = vunpack.c.h.b16 %v166
    %v792 = vunpack.c.l.b16 %v167
    %v793 = vunpack.c.h.b16 %v167
    %v794 = vunpack.c.l.b16 %v168
    %v795 = vunpack.c.h.b16 %v168
    %v796 = vunpack.c.l.b16 %v169
    %v797 = vunpack.c.h.b16 %v169
    %v798 = vunpack.c.l.b16 %v170
    %v799 = vunpack.c.h.b16 %v170
    %v800 = vunpack.c.l.b16 %v171
    %v801 = vunpack.c.h.b16 %v171
    %v802 = vunpack.c.l.b16 %v172
    %v803 = vunpack.c.h.b16 %v172
    %v804 = vunpack.c.l.b16 %v173
    %v805 = vunpack.c.h.b16 %v173
    %v806 = vunpack.c.l.b16 %v174
    %v807 = vunpack.c.h.b16 %v174
    %v808 = vunpack.c.l.b16 %v175
    %v809 = vunpack.c.h.b16 %v175
    %v810 = vunpack.c.l.b16 %v176
    %v811 = vunpack.c.h.b16 %v176
    %v812 = vunpack.c.l.b16 %v177
    %v813 = vunpack.c.h.b16 %v177
    %v814 = vunpack.c.l.b16 %v178
    %v815 = vunpack.c.h.b16 %v178
    %v816 = vunpack.c.l.b16 %v179
    %v817 = vunpack.c.h.b16 %v179
    %v818 = vunpack.c.l.b16 %v180
    %v819 = vunpack.c.h.b16 %v180
    %v820 = vunpack.c.l.b16 %v181
    %v821 = vunpack.c.h.b16 %v181
    %v822 = vunpack.c.l.b16 %v182
    %v823 = vunpack.c.h.b16 %v182
    %v824 = vunpack.c.l.b16 %v183
    %v825 = vunpack.c.h.b16 %v183
    %v826 = vunpack.c.l.b16 %v184
    %v827 = vunpack.c.h.b16 %v184
    %v828 = vunpack.c.l.b16 %v185
    %v829 = vunpack.c.h.b16 %v185
    %v830 = vunpack.c.l.b16 %v186
    %v831 = vunpack.c.h.b16 %v186
    %v832 = vunpack.c.l.b16 %v187
    %v833 = vunpack.c.h.b16 %v187
    %v834 = vunpack.c.l.b16 %v188
    %v835 = vunpack.c.h.b16 %v188
    %v836 = vunpack.c.l.b16 %v189
    %v837 = vunpack.c.h.b16 %v189
    %v838 = vunpack.c.l.b16 %v190
    %v839 = vunpack.c.h.b16 %v190
    %v840 = vunpack.c.l.b16 %v191
    %v841 = vunpack.c.h.b16 %v191
    %v842 = vunpack.c.l.b16 %v192
    %v843 = vunpack.c.h.b16 %v192
    %v844 = vunpack.c.l.b16 %v193
    %v845 = vunpack.c.h.b16 %v193
    %v846 = vunpack.c.l.b16 %v194
    %v847 = vunpack.c.h.b16 %v194
    %v848 = vunpack.c.l.b16 %v195
    %v849 = vunpack.c.h.b16 %v195
    %v850 = vunpack.c.l.b16 %v196
    %v851 = vunpack.c.h.b16 %v196
    %v852 = vunpack.c.l.b16 %v197
    %v853 = vunpack.c.h.b16 %v197
    %v854 = vunpack.c.l.b16 %v198
    %v855 = vunpack.c.h.b16 %v198
    %v856 = vunpack.c.l.b16 %v199
    %v857 = vunpack.c.h.b16 %v199
    %v858 = vunpack.c.l.b16 %v200
    %v859 = vunpack.c.h.b16 %v200
    %v860 = vunpack.c.l.b16 %v201
    %v861 = vunpack.c.h.b16 %v201
    %v862 = vunpack.c.l.b16 %v202
    %v863 = vunpack.c.h.b16 %v202
    %v864 = vunpack.c.l.b16 %v203
    %v865 = vunpack.c.h.b16 %v203
    %v866 = vunpack.c.l.b16 %v204
    %v867 = vunpack.c.h.b16 %v204
    %v868 = vunpack.c.l.b16 %v205
    %v869 = vunpack.c.h.b16 %v205
    %v870 = vunpack.c.l.b16 %v206
    %v871 = vunpack.c.h.b16 %v206
    %v872 = vunpack.c.l.b16 %v207
    %v873 = vunpack.c.h.b16 %v207
    %v874 = vunpack.c.l.b16 %v208
    %v875 = vunpack.c.h.b16 %v208
    %v876 = vunpack.c.l.b16 %v209
    %v877 = vunpack.c.h.b16 %v209
    %v878 = vunpack.c.l.b16 %v210
    %v879 = vunpack.c.h.b16 %v210
    %v880 = vunpack.c.l.b16 %v211
    %v881 = vunpack.c.h.b16 %v211
    %v882 = vunpack.c.l.b16 %v212
    %v883 = vunpack.c.h.b16 %v212
    %v884 = vunpack.c.l.b16 %v213
    %v885 = vunpack.c.h.b16 %v213
    %v886 = vunpack.c.l.b16 %v214
    %v887 = vunpack.c.h.b16 %v214
    %v888 = vunpack.c.l.b16 %v215
    %v889 = vunpack.c.h.b16 %v215
    %v890 = vunpack.c.l.b16 %v216
    %v891 = vunpack.c.h.b16 %v216
    %v892 = vunpack.c.l.b16 %v217
    %v893 = vunpack.c.h.b16 %v217
    %v894 = vunpack.c.l.b16 %v218
    %v895 = vunpack.c.h.b16 %v218
    %v896 = vunpack.c.l.b16 %v219
    %v897 = vunpack.c.h.b16 %v219
    %v898 = vunpack.c.l.b16 %v220
    %v899 = vunpack.c.h.b16 %v220
    %v900 = vunpack.c.l.b16 %v221
    %v901 = vunpack.c.h.b16 %v221
    %v902 = vunpack.c.l.b16 %v222
    %v903 = vunpack.c.h.b16 %v222
    %v904 = vunpack.c.l.b16 %v223
    %v905 = vunpack.c.h.b16 %v223
    %v906 = vunpack.c.l.b16 %v224
    %v907 = vunpack.c.h.b16 %v224
    %v908 = vunpack.c.l.b16 %v225
    %v909 = vunpack.c.h.b16 %v225
    %v910 = vunpack.c.l.b16 %v226
    %v911 = vunpack.c.h.b16 %v226
    %v912 = vunpack.c.l.b16 %v227
    %v913 = vunpack.c.h.b16 %v227
    %v914 = vunpack.c.l.b16 %v228
    %v915 = vunpack.c.h.b16 %v228
    %v916 = vunpack.c.l.b16 %v229
    %v917 = vunpack.c.h.b16 %v229
    %v918 = vunpack.c.l.b16 %v230
    %v919 = vunpack.c.h.b16 %v230
    %v920 = vunpack.c.l.b16 %v231
    %v921 = vunpack.c.h.b16 %v231
    %v922 = vunpack.c.l.b16 %v232
    %v923 = vunpack.c.h.b16 %v232
    %v924 = vunpack.c.l.b16 %v233
    %v925 = vunpack.c.h.b16 %v233
    %v926 = vunpack.c.l.b16 %v234
    %v927 = vunpack.c.h.b16 %v234
    %v928 = vunpack.c.l.b16 %v235
    %v929 = vunpack.c.h.b16 %v235
    %v930 = vunpack.c.l.b16 %v236
    %v931 = vunpack.c.h.b16 %v236
    %v932 = vunpack.c.l.b16 %v237
    %v933 = vunpack.c.h.b16 %v237
    %v934 = vunpack.c.l.b16 %v238
    %v935 = vunpack.c.h.b16 %v238
    %v936 = vunpack.c.l.b16 %v239
    %v937 = vunpack.c.h.b16 %v239
    %v938 = vunpack.c.l.b16 %v240
    %v939 = vunpack.c.h.b16 %v240
    %v940 = vunpack.c.l.b16 %v241
    %v941 = vunpack.c.h.b16 %v241
    %v942 = vunpack.c.l.b16 %v242
    %v943 = vunpack.c.h.b16 %v242
    %v944 = vunpack.c.l.b16 %v243
    %v945 = vunpack.c.h.b16 %v243
    %v946 = vunpack.c.l.b16 %v244
    %v947 = vunpack.c.h.b16 %v244
    %v948 = vunpack.c.l.b16 %v245
    %v949 = vunpack.c.h.b16 %v245
    %v950 = vunpack.c.l.b16 %v246
    %v951 = vunpack.c.h.b16 %v246
    %v952 = vunpack.c.l.b16 %v247
    %v953 = vunpack.c.h.b16 %v247
    %v954 = vunpack.c.l.b16 %v248
    %v955 = vunpack.c.h.b16 %v248
    %v956 = vunpack.c.l.b16 %v249
    %v957 = vunpack.c.h.b16 %v249
    %v958 = vunpack.c.l.b16 %v250
    %v959 = vunpack.c.h.b16 %v250
    %v960 = vunpack.c.l.b16 %v251
    %v961 = vunpack.c.h.b16 %v251
    %v962 = vunpack.c.l.b16 %v252
    %v963 = vunpack.c.h.b16 %v252
    %v964 = vunpack.c.l.b16 %v253
    %v965 = vunpack.c.h.b16 %v253
    %v966 = vunpack.c.l.b16 %v254
    %v967 = vunpack.c.h.b16 %v254
    %v968 = vunpack.c.l.b16 %v255
    %v969 = vunpack.c.h.b16 %v255
    %v970 = vunpack.c.l.b16 %v256
    %v971 = vunpack.c.h.b16 %v256
    %v972 = vunpack.c.l.b16 %v257
    %v973 = vunpack.c.h.b16 %v257
    %v974 = vunpack.c.l.b16 %v258
    %v975 = vunpack.c.h.b16 %v258
    %v976 = vunpack.c.l.b16 %v259
    %v977 = vunpack.c.h.b16 %v259
    %v978 = vunpack.c.l.b16 %v260
    %v979 = vunpack.c.h.b16 %v260
    %v980 = vunpack.c.l.b16 %v261
    %v981 = vunpack.c.h.b16 %v261
    %v982 = vunpack.c.l.b16 %v262
    %v983 = vunpack.c.h.b16 %v262
    %v984 = vunpack.c.l.b16 %v263
    %v985 = vunpack.c.h.b16 %v263
    %v986 = vunpack.c.l.b16 %v264
    %v987 = vunpack.c.h.b16 %v264
    %v988 = vunpack.c.l.b16 %v265
    %v989 = vunpack.c.h.b16 %v265
    %v990 = vunpack.c.l.b16 %v266
    %v991 = vunpack.c.h.b16 %v266
    %v992 = vunpack.c.l.b16 %v267
    %v993 = vunpack.c.h.b16 %v267
    %v994 = vunpack.c.l.b16 %v268
    %v995 = vunpack.c.h.b16 %v268
    %v996 = vunpack.c.l.b16 %v269
    %v997 = vunpack.c.h.b16 %v269
    %v998 = vunpack.c.l.b16 %v270
    %v999 = vunpack.c.h.b16 %v270
    %v1000 = vunpack.c.l.b16 %v271
    %v1001 = vunpack.c.h.b16 %v271
    %v1002 = vunpack.c.l.b16 %v272
    %v1003 = vunpack.c.h.b16 %v272
    %v1004 = vunpack.c.l.b16 %v273
    %v1005 = vunpack.c.h.b16 %v273
    %v1006 = vunpack.c.l.b16 %v274
    %v1007 = vunpack.c.h.b16 %v274
    %v1008 = vunpack.c.l.b16 %v275
    %v1009 = vunpack.c.h.b16 %v275
    %v1010 = vunpack.c.l.b16 %v276
    %v1011 = vunpack.c.h.b16 %v276
    %v1012 = vunpack.c.l.b16 %v277
    %v1013 = vunpack.c.h.b16 %v277
    %v1014 = vunpack.c.l.b16 %v278
    %v1015 = vunpack.c.h.b16 %v278
    %v1016 = vunpack.c.l.b16 %v279
    %v1017 = vunpack.c.h.b16 %v279
    %v1018 = vunpack.c.l.b16 %v280
    %v1019 = vunpack.c.h.b16 %v280
    %v1020 = vunpack.c.l.b16 %v281
    %v1021 = vunpack.c.h.b16 %v281
    %v1022 = vunpack.c.l.b16 %v282
    %v1023 = vunpack.c.h.b16 %v282
    %v1024 = vunpack.c.l.b16 %v283
    %v1025 = vunpack.c.h.b16 %v283
    %v1026 = vunpack.c.l.b16 %v284
    %v1027 = vunpack.c.h.b16 %v284
    %v1028 = vunpack.c.l.b16 %v285
    %v1029 = vunpack.c.h.b16 %v285
    %v1030 = vunpack.c.l.b16 %v286
    %v1031 = vunpack.c.h.b16 %v286
    %v1032 = vunpack.c.l.b16 %v287
    %v1033 = vunpack.c.h.b16 %v287
    %v1034 = vunpack.c.l.b16 %v288
    %v1035 = vunpack.c.h.b16 %v288
    %v1036 = vunpack.c.l.b16 %v289
    %v1037 = vunpack.c.h.b16 %v289
    %v1038 = vunpack.c.l.b16 %v290
    %v1039 = vunpack.c.h.b16 %v290
    %v1040 = vunpack.c.l.b16 %v291
    %v1041 = vunpack.c.h.b16 %v291
    %v1042 = vunpack.c.l.b16 %v292
    %v1043 = vunpack.c.h.b16 %v292
    %v1044 = vunpack.c.l.b16 %v293
    %v1045 = vunpack.c.h.b16 %v293
    %v1046 = vunpack.c.l.b16 %v294
    %v1047 = vunpack.c.h.b16 %v294
    %v1048 = vunpack.c.l.b16 %v295
    %v1049 = vunpack.c.h.b16 %v295
    %v1050 = vunpack.c.l.b16 %v296
    %v1051 = vunpack.c.h.b16 %v296
    %v1052 = vunpack.c.l.b16 %v297
    %v1053 = vunpack.c.h.b16 %v297
    %v1054 = vunpack.c.l.b16 %v298
    %v1055 = vunpack.c.h.b16 %v298
    %v1056 = vunpack.c.l.b16 %v299
    %v1057 = vunpack.c.h.b16 %v299
    %v1058 = vunpack.c.l.b16 %v300
    %v1059 = vunpack.c.h.b16 %v300
    %v1060 = vunpack.c.l.b16 %v301
    %v1061 = vunpack.c.h.b16 %v301
    %v1062 = vunpack.c.l.b16 %v302
    %v1063 = vunpack.c.h.b16 %v302
    %v1064 = vunpack.c.l.b16 %v303
    %v1065 = vunpack.c.h.b16 %v303
    %v1066 = vunpack.c.l.b16 %v304
    %v1067 = vunpack.c.h.b16 %v304
    %v1068 = vunpack.c.l.b16 %v305
    %v1069 = vunpack.c.h.b16 %v305
    %v1070 = vunpack.c.l.b16 %v306
    %v1071 = vunpack.c.h.b16 %v306
    %v1072 = vunpack.c.l.b16 %v307
    %v1073 = vunpack.c.h.b16 %v307
    %v1074 = vunpack.c.l.b16 %v308
    %v1075 = vunpack.c.h.b16 %v308
    %v1076 = vunpack.c.l.b16 %v309
    %v1077 = vunpack.c.h.b16 %v309
    %v1078 = vunpack.c.l.b16 %v310
    %v1079 = vunpack.c.h.b16 %v310
    %v1080 = vunpack.c.l.b16 %v311
    %v1081 = vunpack.c.h.b16 %v311
    %v1082 = vunpack.c.l.b16 %v312
    %v1083 = vunpack.c.h.b16 %v312
    %v1084 = vunpack.c.l.b16 %v313
    %v1085 = vunpack.c.h.b16 %v313
    %v1086 = vunpack.c.l.b16 %v314
    %v1087 = vunpack.c.h.b16 %v314
    %v1088 = vunpack.c.l.b16 %v315
    %v1089 = vunpack.c.h.b16 %v315
    %v1090 = vunpack.c.l.b16 %v316
    %v1091 = vunpack.c.h.b16 %v316
    %v1092 = vunpack.c.l.b16 %v317
    %v1093 = vunpack.c.h.b16 %v317
    %v1094 = vunpack.c.l.b16 %v318
    %v1095 = vunpack.c.h.b16 %v318
    %v1096 = vunpack.c.l.b16 %v319
    %v1097 = vunpack.c.h.b16 %v319
    %v1098 = vunpack.c.l.b16 %v320
    %v1099 = vunpack.c.h.b16 %v320
    %v1100 = vunpack.c.l.b16 %v321
    %v1101 = vunpack.c.h.b16 %v321
    %v1102 = vunpack.c.l.b16 %v322
    %v1103 = vunpack.c.h.b16 %v322
    %v1104 = vunpack.c.l.b16 %v323
    %v1105 = vunpack.c.h.b16 %v323
    %v1106 = vunpack.c.l.b16 %v324
    %v1107 = vunpack.c.h.b16 %v324
    %v1108 = vunpack.c.l.b16 %v325
    %v1109 = vunpack.c.h.b16 %v325
    %v1110 = vunpack.c.l.b16 %v326
    %v1111 = vunpack.c.h.b16 %v326
    %v1112 = vunpack.c.l.b16 %v327
    %v1113 = vunpack.c.h.b16 %v327
    %v1114 = vunpack.c.l.b16 %v328
    %v1115 = vunpack.c.h.b16 %v328
    %v1116 = vunpack.c.l.b16 %v329
    %v1117 = vunpack.c.h.b16 %v329
    %v1118 = vunpack.c.l.b16 %v330
    %v1119 = vunpack.c.h.b16 %v330
    %v1120 = vunpack.c.l.b16 %v331
    %v1121 = vunpack.c.h.b16 %v331
    %v1122 = vunpack.c.l.b16 %v332
    %v1123 = vunpack.c.h.b16 %v332
    %v1124 = vunpack.c.l.b16 %v333
    %v1125 = vunpack.c.h.b16 %v333
    %v1126 = vunpack.c.l.b16 %v334
    %v1127 = vunpack.c.h.b16 %v334
    %v1128 = vunpack.c.l.b16 %v335
    %v1129 = vunpack.c.h.b16 %v335
    %v1130 = vunpack.c.l.b16 %v336
    %v1131 = vunpack.c.h.b16 %v336
    %v1132 = vunpack.c.l.b16 %v337
    %v1133 = vunpack.c.h.b16 %v337
    %v1134 = vunpack.c.l.b16 %v338
    %v1135 = vunpack.c.h.b16 %v338
    %v1136 = vunpack.c.l.b16 %v339
    %v1137 = vunpack.c.h.b16 %v339
    %v1138 = vunpack.c.l.b16 %v340
    %v1139 = vunpack.c.h.b16 %v340
    %v1140 = vunpack.c.l.b16 %v341
    %v1141 = vunpack.c.h.b16 %v341
    %v1142 = vunpack.c.l.b16 %v342
    %v1143 = vunpack.c.h.b16 %v342
    %v1144 = vunpack.c.l.b16 %v343
    %v1145 = vunpack.c.h.b16 %v343
    %v1146 = vunpack.c.l.b16 %v344
    %v1147 = vunpack.c.h.b16 %v344
    %v1148 = vunpack.c.l.b16 %v345
    %v1149 = vunpack.c.h.b16 %v345
    %v1150 = vunpack.c.l.b16 %v346
    %v1151 = vunpack.c.h.b16 %v346
    %v1152 = vunpack.c.l.b16 %v347
    %v1153 = vunpack.c.h.b16 %v347
    %v1154 = vunpack.c.l.b16 %v348
    %v1155 = vunpack.c.h.b16 %v348
    %v1156 = vunpack.c.l.b16 %v349
    %v1157 = vunpack.c.h.b16 %v349
    %v1158 = vunpack.c.l.b16 %v350
    %v1159 = vunpack.c.h.b16 %v350
    %v1160 = vunpack.c.l.b16 %v351
    %v1161 = vunpack.c.h.b16 %v351
    %v1162 = vunpack.c.l.b16 %v352
    %v1163 = vunpack.c.h.b16 %v352
    %v1164 = vunpack.c.l.b16 %v353
    %v1165 = vunpack.c.h.b16 %v353
    %v1166 = vunpack.c.l.b16 %v354
    %v1167 = vunpack.c.h.b16 %v354
    %v1168 = vunpack.c.l.b16 %v355
    %v1169 = vunpack.c.h.b16 %v355
    %v1170 = vunpack.c.l.b16 %v356
    %v1171 = vunpack.c.h.b16 %v356
    %v1172 = vunpack.c.l.b16 %v357
    %v1173 = vunpack.c.h.b16 %v357
    %v1174 = vunpack.c.l.b16 %v358
    %v1175 = vunpack.c.h.b16 %v358
    %v1176 = vunpack.c.l.b16 %v359
    %v1177 = vunpack.c.h.b16 %v359
    %v1178 = vpack.c.b16 %v670, %v666
    %v1179 = vpack.c.b16 %v671, %v667
    %v1180 = vpack.c.b16 %v672, %v668
    %v1181 = vpack.c.b16 %v673, %v669
    %v1182 = vpack.c.b16 %v678, %v674
    %v1183 = vpack.c.b16 %v679, %v675
    %v1184 = vpack.c.b16 %v680, %v676
    %v1185 = vpack.c.b16 %v681, %v677
    %v1186 = vpack.c.b16 %v686, %v682
    %v1187 = vpack.c.b16 %v687, %v683
    %v1188 = vpack.c.b16 %v688, %v684
    %v1189 = vpack.c.b16 %v689, %v685
    %v1190 = vpack.c.b16 %v694, %v690
    %v1191 = vpack.c.b16 %v695, %v691
    %v1192 = vpack.c.b16 %v696, %v692
    %v1193 = vpack.c.b16 %v697, %v693
    %v1194 = vpack.c.b16 %v702, %v698
    %v1195 = vpack.c.b16 %v703, %v699
    %v1196 = vpack.c.b16 %v704, %v700
    %v1197 = vpack.c.b16 %v705, %v701
    %v1198 = vpack.c.b16 %v710, %v706
    %v1199 = vpack.c.b16 %v711, %v707
    %v1200 = vpack.c.b16 %v712, %v708
    %v1201 = vpack.c.b16 %v713, %v709
    %v1202 = vpack.c.b16 %v718, %v714
    %v1203 = vpack.c.b16 %v719, %v715
    %v1204 = vpack.c.b16 %v720, %v716
    %v1205 = vpack.c.b16 %v721, %v717
    %v1206 = vpack.c.b16 %v726, %v722
    %v1207 = vpack.c.b16 %v727, %v723
    %v1208 = vpack.c.b16 %v728, %v724
    %v1209 = vpack.c.b16 %v729, %v725
    %v1210 = vpack.c.b16 %v734, %v730
    %v1211 = vpack.c.b16 %v735, %v731
    %v1212 = vpack.c.b16 %v736, %v732
    %v1213 = vpack.c.b16 %v737, %v733
    %v1214 = vpack.c.b16 %v742, %v738
    %v1215 = vpack.c.b16 %v743, %v739
    %v1216 = vpack.c.b16 %v744, %v740
    %v1217 = vpack.c.b16 %v745, %v741
    %v1218 = vpack.c.b16 %v750, %v746
    %v1219 = vpack.c.b16 %v751, %v747
    %v1220 = vpack.c.b16 %v752, %v748
    %v1221 = vpack.c.b16 %v753, %v749
    %v1222 = vpack.c.b16 %v758, %v754
    %v1223 = vpack.c.b16 %v759, %v755
    %v1224 = vpack.c.b16 %v760, %v756
    %v1225 = vpack.c.b16 %v761, %v757
    %v1226 = vpack.c.b16 %v766, %v762
    %v1227 = vpack.c.b16 %v767, %v763
    %v1228 = vpack.c.b16 %v768, %v764
    %v1229 = vpack.c.b16 %v769, %v765
    %v1230 = vpack.c.b16 %v774, %v770
    %v1231 = vpack.c.b16 %v775, %v771
    %v1232 = vpack.c.b16 %v776, %v772
    %v1233 = vpack.c.b16 %v777, %v773
    %v1234 = vpack.c.b16 %v782, %v778
    %v1235 = vpack.c.b16 %v783, %v779
    %v1236 = vpack.c.b16 %v784, %v780
    %v1237 = vpack.c.b16 %v785, %v781
    %v1238 = vpack.c.b16 %v790, %v786
    %v1239 = vpack.c.b16 %v791, %v787
    %v1240 = vpack.c.b16 %v792, %v788
    %v1241 = vpack.c.b16 %v793, %v789
    %v1242 = vpack.c.b16 %v798, %v794
    %v1243 = vpack.c.b16 %v799, %v795
    %v1244 = vpack.c.b16 %v800, %v796
    %v1245 = vpack.c.b16 %v801, %v797
    %v1246 = vpack.c.b16 %v806, %v802
    %v1247 = vpack.c.b16 %v807, %v803
    %v1248 = vpack.c.b16 %v808, %v804
    %v1249 = vpack.c.b16 %v809, %v805
    %v1250 = vpack.c.b16 %v814, %v810
    %v1251 = vpack.c.b16 %v815, %v811
    %v1252 = vpack.c.b16 %v816, %v812
    %v1253 = vpack.c.b16 %v817, %v813
    %v1254 = vpack.c.b16 %v822, %v818
    %v1255 = vpack.c.b16 %v823, %v819
    %v1256 = vpack.c.b16 %v824, %v820
    %v1257 = vpack.c.b16 %v825, %v821
    %v1258 = vpack.c.b16 %v830, %v826
    %v1259 = vpack.c.b16 %v831, %v827
    %v1260 = vpack.c.b16 %v832, %v828
    %v1261 = vpack.c.b16 %v833, %v829
    %v1262 = vpack.c.b16 %v838, %v834
    %v1263 = vpack.c.b16 %v839, %v835
    %v1264 = vpack.c.b16 %v840, %v836
    %v1265 = vpack.c.b16 %v841, %v837
    %v1266 = vpack.c.b16 %v846, %v842
    %v1267 = vpack.c.b16 %v847, %v843
    %v1268 = vpack.c.b16 %v848, %v844
    %v1269 = vpack.c.b16 %v849, %v845
    %v1270 = vpack.c.b16 %v854, %v850
    %v1271 = vpack.c.b16 %v855, %v851
    %v1272 = vpack.c.b16 %v856, %v852
    %v1273 = vpack.c.b16 %v857, %v853
    %v1274 = vpack.c.b16 %v862, %v858
    %v1275 = vpack.c.b16 %v863, %v859
    %v1276 = vpack.c.b16 %v864, %v860
    %v1277 = vpack.c.b16 %v865, %v861
    %v1278 = vpack.c.b16 %v870, %v866
    %v1279 = vpack.c.b16 %v871, %v867
    %v1280 = vpack.c.b16 %v872, %v868
    %v1281 = vpack.c.b16 %v873, %v869
    %v1282 = vpack.c.b16 %v878, %v874
    %v1283 = vpack.c.b16 %v879, %v875
    %v1284 = vpack.c.b16 %v880, %v876
    %v1285 = vpack.c.b16 %v881, %v877
    %v1286 = vpack.c.b16 %v886, %v882
    %v1287 = vpack.c.b16 %v887, %v883
    %v1288 = vpack.c.b16 %v888, %v884
    %v1289 = vpack.c.b16 %v889, %v885
    %v1290 = vpack.c.b16 %v894, %v890
    %v1291 = vpack.c.b16 %v895, %v891
    %v1292 = vpack.c.b16 %v896, %v892
    %v1293 = vpack.c.b16 %v897, %v893
    %v1294 = vpack.c.b16 %v902, %v898
    %v1295 = vpack.c.b16 %v903, %v899
    %v1296 = vpack.c.b16 %v904, %v900
    %v1297 = vpack.c.b16 %v905, %v901
    %v1298 = vpack.c.b16 %v910, %v906
    %v1299 = vpack.c.b16 %v911, %v907
    %v1300 = vpack.c.b16 %v912, %v908
    %v1301 = vpack.c.b16 %v913, %v909
    %v1302 = vpack.c.b16 %v918, %v914
    %v1303 = vpack.c.b16 %v919, %v915
    %v1304 = vpack.c.b16 %v920, %v916
    %v1305 = vpack.c.b16 %v921, %v917
    %v1306 = vpack.c.b16 %v926, %v922
    %v1307 = vpack.c.b16 %v927, %v923
    %v1308 = vpack.c.b16 %v928, %v924
    %v1309 = vpack.c.b16 %v929, %v925
    %v1310 = vpack.c.b16 %v934, %v930
    %v1311 = vpack.c.b16 %v935, %v931
    %v1312 = vpack.c.b16 %v936, %v932
    %v1313 = vpack.c.b16 %v937, %v933
    %v1314 = vpack.c.b16 %v942, %v938
    %v1315 = vpack.c.b16 %v943, %v939
    %v1316 = vpack.c.b16 %v944, %v940
    %v1317 = vpack.c.b16 %v945, %v941
    %v1318 = vpack.c.b16 %v950, %v946
    %v1319 = vpack.c.b16 %v951, %v947
    %v1320 = vpack.c.b16 %v952, %v948
    %v1321 = vpack.c.b16 %v953, %v949
    %v1322 = vpack.c.b16 %v958, %v954
    %v1323 = vpack.c.b16 %v959, %v955
    %v1324 = vpack.c.b16 %v960, %v956
    %v1325 = vpack.c.b16 %v961, %v957
    %v1326 = vpack.c.b16 %v966, %v962
    %v1327 = vpack.c.b16 %v967, %v963
    %v1328 = vpack.c.b16 %v968, %v964
    %v1329 = vpack.c.b16 %v969, %v965
    %v1330 = vpack.c.b16 %v974, %v970
    %v1331 = vpack.c.b16 %v975, %v971
    %v1332 = vpack.c.b16 %v976, %v972
    %v1333 = vpack.c.b16 %v977, %v973
    %v1334 = vpack.c.b16 %v982, %v978
    %v1335 = vpack.c.b16 %v983, %v979
    %v1336 = vpack.c.b16 %v984, %v980
    %v1337 = vpack.c.b16 %v985, %v981
    %v1338 = vpack.c.b16 %v990, %v986
    %v1339 = vpack.c.b16 %v991, %v987
    %v1340 = vpack.c.b16 %v992, %v988
    %v1341 = vpack.c.b16 %v993, %v989
    %v1342 = vpack.c.b16 %v998, %v994
    %v1343 = vpack.c.b16 %v999, %v995
    %v1344 = vpack.c.b16 %v1000, %v996
    %v1345 = vpack.c.b16 %v1001, %v997
    %v1346 = vpack.c.b16 %v1006, %v1002
    %v1347 = vpack.c.b16 %v1007, %v1003
    %v1348 = vpack.c.b16 %v1008, %v1004
    %v1349 = vpack.c.b16 %v1009, %v1005
    %v1350 = vpack.c.b16 %v1014, %v1010
    %v1351 = vpack.c.b16 %v1015, %v1011
    %v1352 = vpack.c.b16 %v1016, %v1012
    %v1353 = vpack.c.b16 %v1017, %v1013
    %v1354 = vpack.c.b16 %v1022, %v1018
    %v1355 = vpack.c.b16 %v1023, %v1019
    %v1356 = vpack.c.b16 %v1024, %v1020
    %v1357 = vpack.c.b16 %v1025, %v1021
    %v1358 = vpack.c.b16 %v1030, %v1026
    %v1359 = vpack.c.b16 %v1031, %v1027
    %v1360 = vpack.c.b16 %v1032, %v1028
    %v1361 = vpack.c.b16 %v1033, %v1029
    %v1362 = vpack.c.b16 %v1038, %v1034
    %v1363 = vpack.c.b16 %v1039, %v1035
    %v1364 = vpack.c.b16 %v1040, %v1036
    %v1365 = vpack.c.b16 %v1041, %v1037
    %v1366 = vpack.c.b16 %v1046, %v1042
    %v1367 = vpack.c.b16 %v1047, %v1043
    %v1368 = vpack.c.b16 %v1048, %v1044
    %v1369 = vpack.c.b16 %v1049, %v1045
    %v1370 = vpack.c.b16 %v1054, %v1050
    %v1371 = vpack.c.b16 %v1055, %v1051
    %v1372 = vpack.c.b16 %v1056, %v1052
    %v1373 = vpack.c.b16 %v1057, %v1053
    %v1374 = vpack.c.b16 %v1062, %v1058
    %v1375 = vpack.c.b16 %v1063, %v1059
    %v1376 = vpack.c.b16 %v1064, %v1060
    %v1377 = vpack.c.b16 %v1065, %v1061
    %v1378 = vpack.c.b16 %v1070, %v1066
    %v1379 = vpack.c.b16 %v1071, %v1067
    %v1380 = vpack.c.b16 %v1072, %v1068
    %v1381 = vpack.c.b16 %v1073, %v1069
    %v1382 = vpack.c.b16 %v1078, %v1074
    %v1383 = vpack.c.b16 %v1079, %v1075
    %v1384 = vpack.c.b16 %v1080, %v1076
    %v1385 = vpack.c.b16 %v1081, %v1077
    %v1386 = vpack.c.b16 %v1086, %v1082
    %v1387 = vpack.c.b16 %v1087, %v1083
    %v1388 = vpack.c.b16 %v1088, %v1084
    %v1389 = vpack.c.b16 %v1089, %v1085
    %v1390 = vpack.c.b16 %v1094, %v1090
    %v1391 = vpack.c.b16 %v1095, %v1091
    %v1392 = vpack.c.b16 %v1096, %v1092
    %v1393 = vpack.c.b16 %v1097, %v1093
    %v1394 = vpack.c.b16 %v1102, %v1098
    %v1395 = vpack.c.b16 %v1103, %v1099
    %v1396 = vpack.c.b16 %v1104, %v1100
    %v1397 = vpack.c.b16 %v1105, %v1101
    %v1398 = vpack.c.b16 %v1110, %v1106
    %v1399 = vpack.c.b16 %v1111, %v1107
    %v1400 = vpack.c.b16 %v1112, %v1108
    %v1401 = vpack.c.b16 %v1113, %v1109
    %v1402 = vpack.c.b16 %v1118, %v1114
    %v1403 = vpack.c.b16 %v1119, %v1115
    %v1404 = vpack.c.b16 %v1120, %v1116
    %v1405 = vpack.c.b16 %v1121, %v1117
    %v1406 = vpack.c.b16 %v1126, %v1122
    %v1407 = vpack.c.b16 %v1127, %v1123
    %v1408 = vpack.c.b16 %v1128, %v1124
    %v1409 = vpack.c.b16 %v1129, %v1125
    %v1410 = vpack.c.b16 %v1134, %v1130
    %v1411 = vpack.c.b16 %v1135, %v1131
    %v1412 = vpack.c.b16 %v1136, %v1132
    %v1413 = vpack.c.b16 %v1137, %v1133
    %v1414 = vpack.c.b16 %v1142, %v1138
    %v1415 = vpack.c.b16 %v1143, %v1139
    %v1416 = vpack.c.b16 %v1144, %v1140
    %v1417 = vpack.c.b16 %v1145, %v1141
    %v1418 = vpack.c.b16 %v1150, %v1146
    %v1419 = vpack.c.b16 %v1151, %v1147
    %v1420 = vpack.c.b16 %v1152, %v1148
    %v1421 = vpack.c.b16 %v1153, %v1149
    %v1422 = vpack.c.b16 %v1158, %v1154
    %v1423 = vpack.c.b16 %v1159, %v1155
    %v1424 = vpack.c.b16 %v1160, %v1156
    %v1425 = vpack.c.b16 %v1161, %v1157
    %v1426 = vpack.c.b16 %v1166, %v1162
    %v1427 = vpack.c.b16 %v1167, %v1163
    %v1428 = vpack.c.b16 %v1168, %v1164
    %v1429 = vpack.c.b16 %v1169, %v1165
    %v1430 = vpack.c.b16 %v1174, %v1170
    %v1431 = vpack.c.b16 %v1175, %v1171
    %v1432 = vpack.c.b16 %v1176, %v1172
    %v1433 = vpack.c.b16 %v1177, %v1173
    %1690 = vmatprep.subr.bf16.mxu0 %v1207
    %1691 = vmatpush1.bf16.msra.mxu0 %v1206
    %1692 = vmatprep.subr.bf16.mxu0 %v1203
    %1693 = vmatpush1.bf16.msra.mxu0 %v1202
    %1694 = vmatprep.subr.bf16.mxu0 %v1199
    %1695 = vmatpush1.bf16.msra.mxu0 %v1198
    %1696 = vmatprep.subr.bf16.mxu0 %v1195
    %1697 = vmatpush1.bf16.msra.mxu0 %v1194
    %1698 = vmatprep.subr.bf16.mxu0 %v1191
    %1699 = vmatpush1.bf16.msra.mxu0 %v1190
    %1700 = vmatprep.subr.bf16.mxu0 %v1187
    %1701 = vmatpush1.bf16.msra.mxu0 %v1186
    %1702 = vmatprep.subr.bf16.mxu0 %v1183
    %1703 = vmatpush1.bf16.msra.mxu0 %v1182
    %1704 = vmatprep.subr.bf16.mxu0 %v1179
    %1705 = vmatpush1.bf16.msra.mxu0 %v1178
    %1706 = vmatprep.subr.bf16.mxu0 %v1239
    %1707 = vmatpush2.bf16.msra.mxu0 %v1238
    %1708 = vmatprep.subr.bf16.mxu0 %v1235
    %1709 = vmatpush2.bf16.msra.mxu0 %v1234
    %1710 = vmatprep.subr.bf16.mxu0 %v1231
    %1711 = vmatpush2.bf16.msra.mxu0 %v1230
    %1712 = vmatprep.subr.bf16.mxu0 %v1227
    %1713 = vmatpush2.bf16.msra.mxu0 %v1226
    %1714 = vmatprep.subr.bf16.mxu0 %v1223
    %1715 = vmatpush2.bf16.msra.mxu0 %v1222
    %1716 = vmatprep.subr.bf16.mxu0 %v1219
    %1717 = vmatpush2.bf16.msra.mxu0 %v1218
    %1718 = vmatprep.subr.bf16.mxu0 %v1215
    %1719 = vmatpush2.bf16.msra.mxu0 %v1214
    %1720 = vmatprep.subr.bf16.mxu0 %v1211
    %1721 = vmatpush2.bf16.msra.mxu0 %v1210
    %1722 = vmatprep.mubr.bf16.mxu0 %v395
    %1723 = vmatmul.mubr.bf16.gmra.mxu0 %v394
    %v1724 = vpop.f32.mrf.mxu0
    %v1725 = vadd.f32 %v365, %v1724
    %v1726 = vpop.f32.mrf.mxu0
    %v1727 = vadd.f32 %v369, %v1726
    %v1728 = vpop.f32.mrf.mxu0
    %v1729 = vpop.f32.mrf.mxu0
    %1730 = vdwg.mxu0
    %1731 = vmatprep.subr.bf16.mxu0 %v1271
    %1732 = vmatpush1.bf16.msra.mxu0 %v1270
    %1733 = vmatprep.subr.bf16.mxu0 %v1267
    %1734 = vmatpush1.bf16.msra.mxu0 %v1266
    %1735 = vmatprep.subr.bf16.mxu0 %v1263
    %1736 = vmatpush1.bf16.msra.mxu0 %v1262
    %1737 = vmatprep.subr.bf16.mxu0 %v1259
    %1738 = vmatpush1.bf16.msra.mxu0 %v1258
    %1739 = vmatprep.subr.bf16.mxu0 %v1255
    %1740 = vmatpush1.bf16.msra.mxu0 %v1254
    %1741 = vmatprep.subr.bf16.mxu0 %v1251
    %1742 = vmatpush1.bf16.msra.mxu0 %v1250
    %1743 = vmatprep.subr.bf16.mxu0 %v1247
    %1744 = vmatpush1.bf16.msra.mxu0 %v1246
    %1745 = vmatprep.subr.bf16.mxu0 %v1243
    %1746 = vmatpush1.bf16.msra.mxu0 %v1242
    %1747 = vmatprep.subr.bf16.mxu0 %v1303
    %1748 = vmatpush2.bf16.msra.mxu0 %v1302
    %1749 = vmatprep.subr.bf16.mxu0 %v1299
    %1750 = vmatpush2.bf16.msra.mxu0 %v1298
    %1751 = vmatprep.subr.bf16.mxu0 %v1295
    %1752 = vmatpush2.bf16.msra.mxu0 %v1294
    %1753 = vmatprep.subr.bf16.mxu0 %v1291
    %1754 = vmatpush2.bf16.msra.mxu0 %v1290
    %1755 = vmatprep.subr.bf16.mxu0 %v1287
    %1756 = vmatpush2.bf16.msra.mxu0 %v1286
    %1757 = vmatprep.subr.bf16.mxu0 %v1283
    %1758 = vmatpush2.bf16.msra.mxu0 %v1282
    %1759 = vmatprep.subr.bf16.mxu0 %v1279
    %1760 = vmatpush2.bf16.msra.mxu0 %v1278
    %1761 = vmatprep.subr.bf16.mxu0 %v1275
    %1762 = vmatpush2.bf16.msra.mxu0 %v1274
    %1763 = vmatprep.mubr.bf16.mxu0 %v397
    %1764 = vmatmul.mubr.bf16.gmra.mxu0 %v396
    %v1765 = vpop.f32.mrf.mxu0
    %v1766 = vadd.f32 %v1725, %v1765
    %v1767 = vpop.f32.mrf.mxu0
    %v1768 = vadd.f32 %v1727, %v1767
    %v1769 = vpop.f32.mrf.mxu0
    %v1770 = vpop.f32.mrf.mxu0
    %1771 = vdwg.mxu0
    %1772 = vmatprep.subr.bf16.mxu0 %v1335
    %1773 = vmatpush1.bf16.msra.mxu0 %v1334
    %1774 = vmatprep.subr.bf16.mxu0 %v1331
    %1775 = vmatpush1.bf16.msra.mxu0 %v1330
    %1776 = vmatprep.subr.bf16.mxu0 %v1327
    %1777 = vmatpush1.bf16.msra.mxu0 %v1326
    %1778 = vmatprep.subr.bf16.mxu0 %v1323
    %1779 = vmatpush1.bf16.msra.mxu0 %v1322
    %1780 = vmatprep.subr.bf16.mxu0 %v1319
    %1781 = vmatpush1.bf16.msra.mxu0 %v1318
    %1782 = vmatprep.subr.bf16.mxu0 %v1315
    %1783 = vmatpush1.bf16.msra.mxu0 %v1314
    %1784 = vmatprep.subr.bf16.mxu0 %v1311
    %1785 = vmatpush1.bf16.msra.mxu0 %v1310
    %1786 = vmatprep.subr.bf16.mxu0 %v1307
    %1787 = vmatpush1.bf16.msra.mxu0 %v1306
    %1788 = vmatprep.subr.bf16.mxu0 %v1367
    %1789 = vmatpush2.bf16.msra.mxu0 %v1366
    %1790 = vmatprep.subr.bf16.mxu0 %v1363
    %1791 = vmatpush2.bf16.msra.mxu0 %v1362
    %1792 = vmatprep.subr.bf16.mxu0 %v1359
    %1793 = vmatpush2.bf16.msra.mxu0 %v1358
    %1794 = vmatprep.subr.bf16.mxu0 %v1355
    %1795 = vmatpush2.bf16.msra.mxu0 %v1354
    %1796 = vmatprep.subr.bf16.mxu0 %v1351
    %1797 = vmatpush2.bf16.msra.mxu0 %v1350
    %1798 = vmatprep.subr.bf16.mxu0 %v1347
    %1799 = vmatpush2.bf16.msra.mxu0 %v1346
    %1800 = vmatprep.subr.bf16.mxu0 %v1343
    %1801 = vmatpush2.bf16.msra.mxu0 %v1342
    %1802 = vmatprep.subr.bf16.mxu0 %v1339
    %1803 = vmatpush2.bf16.msra.mxu0 %v1338
    %1804 = vmatprep.mubr.bf16.mxu0 %v399
    %1805 = vmatmul.mubr.bf16.gmra.mxu0 %v398
    %v1806 = vpop.f32.mrf.mxu0
    %v1807 = vadd.f32 %v1766, %v1806
    %v1808 = vpop.f32.mrf.mxu0
    %v1809 = vadd.f32 %v1768, %v1808
    %v1810 = vpop.f32.mrf.mxu0
    %v1811 = vpop.f32.mrf.mxu0
    %1812 = vdwg.mxu0
    %1813 = vmatprep.subr.bf16.mxu0 %v1399
    %1814 = vmatpush1.bf16.msra.mxu0 %v1398
    %1815 = vmatprep.subr.bf16.mxu0 %v1395
    %1816 = vmatpush1.bf16.msra.mxu0 %v1394
    %1817 = vmatprep.subr.bf16.mxu0 %v1391
    %1818 = vmatpush1.bf16.msra.mxu0 %v1390
    %1819 = vmatprep.subr.bf16.mxu0 %v1387
    %1820 = vmatpush1.bf16.msra.mxu0 %v1386
    %1821 = vmatprep.subr.bf16.mxu0 %v1383
    %1822 = vmatpush1.bf16.msra.mxu0 %v1382
    %1823 = vmatprep.subr.bf16.mxu0 %v1379
    %1824 = vmatpush1.bf16.msra.mxu0 %v1378
    %1825 = vmatprep.subr.bf16.mxu0 %v1375
    %1826 = vmatpush1.bf16.msra.mxu0 %v1374
    %1827 = vmatprep.subr.bf16.mxu0 %v1371
    %1828 = vmatpush1.bf16.msra.mxu0 %v1370
    %1829 = vmatprep.subr.bf16.mxu0 %v1431
    %1830 = vmatpush2.bf16.msra.mxu0 %v1430
    %1831 = vmatprep.subr.bf16.mxu0 %v1427
    %1832 = vmatpush2.bf16.msra.mxu0 %v1426
    %1833 = vmatprep.subr.bf16.mxu0 %v1423
    %1834 = vmatpush2.bf16.msra.mxu0 %v1422
    %1835 = vmatprep.subr.bf16.mxu0 %v1419
    %1836 = vmatpush2.bf16.msra.mxu0 %v1418
    %1837 = vmatprep.subr.bf16.mxu0 %v1415
    %1838 = vmatpush2.bf16.msra.mxu0 %v1414
    %1839 = vmatprep.subr.bf16.mxu0 %v1411
    %1840 = vmatpush2.bf16.msra.mxu0 %v1410
    %1841 = vmatprep.subr.bf16.mxu0 %v1407
    %1842 = vmatpush2.bf16.msra.mxu0 %v1406
    %1843 = vmatprep.subr.bf16.mxu0 %v1403
    %1844 = vmatpush2.bf16.msra.mxu0 %v1402
    %1845 = vmatprep.mubr.bf16.mxu0 %v401
    %1846 = vmatmul.mubr.bf16.gmra.mxu0 %v400
    %v1847 = vpop.f32.mrf.mxu0
    %v1848 = vadd.f32 %v1807, %v1847
    %v1849 = vpop.f32.mrf.mxu0
    %v1850 = vadd.f32 %v1809, %v1849
    %v1851 = vpop.f32.mrf.mxu0
    %v1852 = vpop.f32.mrf.mxu0
    %1853 = vdwg.mxu0
    %1854 = vmatprep.subr.bf16.mxu0 %v1209
    %1855 = vmatpush1.bf16.msra.mxu0 %v1208
    %1856 = vmatprep.subr.bf16.mxu0 %v1205
    %1857 = vmatpush1.bf16.msra.mxu0 %v1204
    %1858 = vmatprep.subr.bf16.mxu0 %v1201
    %1859 = vmatpush1.bf16.msra.mxu0 %v1200
    %1860 = vmatprep.subr.bf16.mxu0 %v1197
    %1861 = vmatpush1.bf16.msra.mxu0 %v1196
    %1862 = vmatprep.subr.bf16.mxu0 %v1193
    %1863 = vmatpush1.bf16.msra.mxu0 %v1192
    %1864 = vmatprep.subr.bf16.mxu0 %v1189
    %1865 = vmatpush1.bf16.msra.mxu0 %v1188
    %1866 = vmatprep.subr.bf16.mxu0 %v1185
    %1867 = vmatpush1.bf16.msra.mxu0 %v1184
    %1868 = vmatprep.subr.bf16.mxu0 %v1181
    %1869 = vmatpush1.bf16.msra.mxu0 %v1180
    %1870 = vmatprep.subr.bf16.mxu0 %v1241
    %1871 = vmatpush2.bf16.msra.mxu0 %v1240
    %1872 = vmatprep.subr.bf16.mxu0 %v1237
    %1873 = vmatpush2.bf16.msra.mxu0 %v1236
    %1874 = vmatprep.subr.bf16.mxu0 %v1233
    %1875 = vmatpush2.bf16.msra.mxu0 %v1232
    %1876 = vmatprep.subr.bf16.mxu0 %v1229
    %1877 = vmatpush2.bf16.msra.mxu0 %v1228
    %1878 = vmatprep.subr.bf16.mxu0 %v1225
    %1879 = vmatpush2.bf16.msra.mxu0 %v1224
    %1880 = vmatprep.subr.bf16.mxu0 %v1221
    %1881 = vmatpush2.bf16.msra.mxu0 %v1220
    %1882 = vmatprep.subr.bf16.mxu0 %v1217
    %1883 = vmatpush2.bf16.msra.mxu0 %v1216
    %1884 = vmatprep.subr.bf16.mxu0 %v1213
    %1885 = vmatpush2.bf16.msra.mxu0 %v1212
    %1886 = vmatprep.mubr.bf16.mxu0 %v395
    %1887 = vmatmul.mubr.bf16.gmra.mxu0 %v394
    %v1888 = vpop.f32.mrf.mxu0
    %v1889 = vadd.f32 %v373, %v1888
    %v1890 = vpop.f32.mrf.mxu0
    %v1891 = vadd.f32 %v377, %v1890
    %v1892 = vpop.f32.mrf.mxu0
    %v1893 = vpop.f32.mrf.mxu0
    %1894 = vdwg.mxu0
    %1895 = vmatprep.subr.bf16.mxu0 %v1273
    %1896 = vmatpush1.bf16.msra.mxu0 %v1272
    %1897 = vmatprep.subr.bf16.mxu0 %v1269
    %1898 = vmatpush1.bf16.msra.mxu0 %v1268
    %1899 = vmatprep.subr.bf16.mxu0 %v1265
    %1900 = vmatpush1.bf16.msra.mxu0 %v1264
    %1901 = vmatprep.subr.bf16.mxu0 %v1261
    %1902 = vmatpush1.bf16.msra.mxu0 %v1260
    %1903 = vmatprep.subr.bf16.mxu0 %v1257
    %1904 = vmatpush1.bf16.msra.mxu0 %v1256
    %1905 = vmatprep.subr.bf16.mxu0 %v1253
    %1906 = vmatpush1.bf16.msra.mxu0 %v1252
    %1907 = vmatprep.subr.bf16.mxu0 %v1249
    %1908 = vmatpush1.bf16.msra.mxu0 %v1248
    %1909 = vmatprep.subr.bf16.mxu0 %v1245
    %1910 = vmatpush1.bf16.msra.mxu0 %v1244
    %1911 = vmatprep.subr.bf16.mxu0 %v1305
    %1912 = vmatpush2.bf16.msra.mxu0 %v1304
    %1913 = vmatprep.subr.bf16.mxu0 %v1301
    %1914 = vmatpush2.bf16.msra.mxu0 %v1300
    %1915 = vmatprep.subr.bf16.mxu0 %v1297
    %1916 = vmatpush2.bf16.msra.mxu0 %v1296
    %1917 = vmatprep.subr.bf16.mxu0 %v1293
    %1918 = vmatpush2.bf16.msra.mxu0 %v1292
    %1919 = vmatprep.subr.bf16.mxu0 %v1289
    %1920 = vmatpush2.bf16.msra.mxu0 %v1288
    %1921 = vmatprep.subr.bf16.mxu0 %v1285
    %1922 = vmatpush2.bf16.msra.mxu0 %v1284
    %1923 = vmatprep.subr.bf16.mxu0 %v1281
    %1924 = vmatpush2.bf16.msra.mxu0 %v1280
    %1925 = vmatprep.subr.bf16.mxu0 %v1277
    %1926 = vmatpush2.bf16.msra.mxu0 %v1276
    %1927 = vmatprep.mubr.bf16.mxu0 %v397
    %1928 = vmatmul.mubr.bf16.gmra.mxu0 %v396
    %v1929 = vpop.f32.mrf.mxu0
    %v1930 = vadd.f32 %v1889, %v1929
    %v1931 = vpop.f32.mrf.mxu0
    %v1932 = vadd.f32 %v1891, %v1931
    %v1933 = vpop.f32.mrf.mxu0
    %v1934 = vpop.f32.mrf.mxu0
    %1935 = vdwg.mxu0
    %1936 = vmatprep.subr.bf16.mxu0 %v1337
    %1937 = vmatpush1.bf16.msra.mxu0 %v1336
    %1938 = vmatprep.subr.bf16.mxu0 %v1333
    %1939 = vmatpush1.bf16.msra.mxu0 %v1332
    %1940 = vmatprep.subr.bf16.mxu0 %v1329
    %1941 = vmatpush1.bf16.msra.mxu0 %v1328
    %1942 = vmatprep.subr.bf16.mxu0 %v1325
    %1943 = vmatpush1.bf16.msra.mxu0 %v1324
    %1944 = vmatprep.subr.bf16.mxu0 %v1321
    %1945 = vmatpush1.bf16.msra.mxu0 %v1320
    %1946 = vmatprep.subr.bf16.mxu0 %v1317
    %1947 = vmatpush1.bf16.msra.mxu0 %v1316
    %1948 = vmatprep.subr.bf16.mxu0 %v1313
    %1949 = vmatpush1.bf16.msra.mxu0 %v1312
    %1950 = vmatprep.subr.bf16.mxu0 %v1309
    %1951 = vmatpush1.bf16.msra.mxu0 %v1308
    %1952 = vmatprep.subr.bf16.mxu0 %v1369
    %1953 = vmatpush2.bf16.msra.mxu0 %v1368
    %1954 = vmatprep.subr.bf16.mxu0 %v1365
    %1955 = vmatpush2.bf16.msra.mxu0 %v1364
    %1956 = vmatprep.subr.bf16.mxu0 %v1361
    %1957 = vmatpush2.bf16.msra.mxu0 %v1360
    %1958 = vmatprep.subr.bf16.mxu0 %v1357
    %1959 = vmatpush2.bf16.msra.mxu0 %v1356
    %1960 = vmatprep.subr.bf16.mxu0 %v1353
    %1961 = vmatpush2.bf16.msra.mxu0 %v1352
    %1962 = vmatprep.subr.bf16.mxu0 %v1349
    %1963 = vmatpush2.bf16.msra.mxu0 %v1348
    %1964 = vmatprep.subr.bf16.mxu0 %v1345
    %1965 = vmatpush2.bf16.msra.mxu0 %v1344
    %1966 = vmatprep.subr.bf16.mxu0 %v1341
    %1967 = vmatpush2.bf16.msra.mxu0 %v1340
    %1968 = vmatprep.mubr.bf16.mxu0 %v399
    %1969 = vmatmul.mubr.bf16.gmra.mxu0 %v398
    %v1970 = vpop.f32.mrf.mxu0
    %v1971 = vadd.f32 %v1930, %v1970
    %v1972 = vpop.f32.mrf.mxu0
    %v1973 = vadd.f32 %v1932, %v1972
    %v1974 = vpop.f32.mrf.mxu0
    %v1975 = vpop.f32.mrf.mxu0
    %1976 = vdwg.mxu0
    %1977 = vmatprep.subr.bf16.mxu0 %v1401
    %1978 = vmatpush1.bf16.msra.mxu0 %v1400
    %1979 = vmatprep.subr.bf16.mxu0 %v1397
    %1980 = vmatpush1.bf16.msra.mxu0 %v1396
    %1981 = vmatprep.subr.bf16.mxu0 %v1393
    %1982 = vmatpush1.bf16.msra.mxu0 %v1392
    %1983 = vmatprep.subr.bf16.mxu0 %v1389
    %1984 = vmatpush1.bf16.msra.mxu0 %v1388
    %1985 = vmatprep.subr.bf16.mxu0 %v1385
    %1986 = vmatpush1.bf16.msra.mxu0 %v1384
    %1987 = vmatprep.subr.bf16.mxu0 %v1381
    %1988 = vmatpush1.bf16.msra.mxu0 %v1380
    %1989 = vmatprep.subr.bf16.mxu0 %v1377
    %1990 = vmatpush1.bf16.msra.mxu0 %v1376
    %1991 = vmatprep.subr.bf16.mxu0 %v1373
    %1992 = vmatpush1.bf16.msra.mxu0 %v1372
    %1993 = vmatprep.subr.bf16.mxu0 %v1433
    %1994 = vmatpush2.bf16.msra.mxu0 %v1432
    %1995 = vmatprep.subr.bf16.mxu0 %v1429
    %1996 = vmatpush2.bf16.msra.mxu0 %v1428
    %1997 = vmatprep.subr.bf16.mxu0 %v1425
    %1998 = vmatpush2.bf16.msra.mxu0 %v1424
    %1999 = vmatprep.subr.bf16.mxu0 %v1421
    %2000 = vmatpush2.bf16.msra.mxu0 %v1420
    %2001 = vmatprep.subr.bf16.mxu0 %v1417
    %2002 = vmatpush2.bf16.msra.mxu0 %v1416
    %2003 = vmatprep.subr.bf16.mxu0 %v1413
    %2004 = vmatpush2.bf16.msra.mxu0 %v1412
    %2005 = vmatprep.subr.bf16.mxu0 %v1409
    %2006 = vmatpush2.bf16.msra.mxu0 %v1408
    %2007 = vmatprep.subr.bf16.mxu0 %v1405
    %2008 = vmatpush2.bf16.msra.mxu0 %v1404
    %2009 = vmatprep.mubr.bf16.mxu0 %v401
    %2010 = vmatmul.mubr.bf16.gmra.mxu0 %v400
    %v2011 = vpop.f32.mrf.mxu0
    %v2012 = vadd.f32 %v1971, %v2011
    %v2013 = vpop.f32.mrf.mxu0
    %v2014 = vadd.f32 %v1973, %v2013
    %v2015 = vpop.f32.mrf.mxu0
    %v2016 = vpop.f32.mrf.mxu0
    %2017 = vdwg.mxu0
    %v2018 = vmax.f32 %v1848, 0.0
    %v2019 = vmax.f32 %v1850, 0.0
    %v2020 = vmax.f32 %v2012, 0.0
    %v2021 = vmax.f32 %v2014, 0.0
    %v2022 = vpack.c.bf16 %v2018, %v2018
    %v2023 = vpack.c.bf16 %v2019, %v2019
    %v2024 = vpack.c.bf16 %v2020, %v2020
    %v2025 = vpack.c.bf16 %v2021, %v2021
    %v2026 = vld [vmem:[#allocation4] sm:$0xff]
    %v2027 = vld [vmem:[#allocation4 + $0x8] sm:$0xff]
    %v2028 = vld [vmem:[#allocation4 + $0x10] sm:$0xff]
    %v2029 = vld [vmem:[#allocation4 + $0x18] sm:$0xff]
    %v2030 = vld [vmem:[#allocation4 + $0x20] sm:$0xff]
    %v2031 = vld [vmem:[#allocation4 + $0x28] sm:$0xff]
    %v2032 = vld [vmem:[#allocation4 + $0x30] sm:$0xff]
    %v2033 = vld [vmem:[#allocation4 + $0x38] sm:$0xff]
    %v2034 = vld [vmem:[#allocation4 + $0x40] sm:$0xff]
    %v2035 = vld [vmem:[#allocation4 + $0x48] sm:$0xff]
    %v2036 = vld [vmem:[#allocation4 + $0x50] sm:$0xff]
    %v2037 = vld [vmem:[#allocation4 + $0x58] sm:$0xff]
    %v2038 = vld [vmem:[#allocation4 + $0x60] sm:$0xff]
    %v2039 = vld [vmem:[#allocation4 + $0x68] sm:$0xff]
    %v2040 = vld [vmem:[#allocation4 + $0x70] sm:$0xff]
    %v2041 = vld [vmem:[#allocation4 + $0x78] sm:$0xff]
    %v2042 = vld [vmem:[#allocation4 + $0x80] sm:$0xff]
    %v2043 = vld [vmem:[#allocation4 + $0x88] sm:$0xff]
    %v2044 = vld [vmem:[#allocation4 + $0x90] sm:$0xff]
    %v2045 = vld [vmem:[#allocation4 + $0x98] sm:$0xff]
    %v2046 = vld [vmem:[#allocation4 + $0xa0] sm:$0xff]
    %v2047 = vld [vmem:[#allocation4 + $0xa8] sm:$0xff]
    %v2048 = vld [vmem:[#allocation4 + $0xb0] sm:$0xff]
    %v2049 = vld [vmem:[#allocation4 + $0xb8] sm:$0xff]
    %v2050 = vld [vmem:[#allocation4 + $0xc0] sm:$0xff]
    %v2051 = vld [vmem:[#allocation4 + $0xc8] sm:$0xff]
    %v2052 = vld [vmem:[#allocation4 + $0xd0] sm:$0xff]
    %v2053 = vld [vmem:[#allocation4 + $0xd8] sm:$0xff]
    %v2054 = vld [vmem:[#allocation4 + $0xe0] sm:$0xff]
    %v2055 = vld [vmem:[#allocation4 + $0xe8] sm:$0xff]
    %v2056 = vld [vmem:[#allocation4 + $0xf0] sm:$0xff]
    %v2057 = vld [vmem:[#allocation4 + $0xf8] sm:$0xff]
    %v2058 = vld [vmem:[#allocation4 + $0x100] sm:$0xff]
    %v2059 = vld [vmem:[#allocation4 + $0x108] sm:$0xff]
    %v2060 = vld [vmem:[#allocation4 + $0x110] sm:$0xff]
    %v2061 = vld [vmem:[#allocation4 + $0x118] sm:$0xff]
    %v2062 = vld [vmem:[#allocation4 + $0x120] sm:$0xff]
    %v2063 = vld [vmem:[#allocation4 + $0x128] sm:$0xff]
    %v2064 = vld [vmem:[#allocation4 + $0x130] sm:$0xff]
    %v2065 = vld [vmem:[#allocation4 + $0x138] sm:$0xff]
    %v2066 = vld [vmem:[#allocation4 + $0x140] sm:$0xff]
    %v2067 = vld [vmem:[#allocation4 + $0x148] sm:$0xff]
    %v2068 = vld [vmem:[#allocation4 + $0x150] sm:$0xff]
    %v2069 = vld [vmem:[#allocation4 + $0x158] sm:$0xff]
    %v2070 = vld [vmem:[#allocation4 + $0x160] sm:$0xff]
    %v2071 = vld [vmem:[#allocation4 + $0x168] sm:$0xff]
    %v2072 = vld [vmem:[#allocation4 + $0x170] sm:$0xff]
    %v2073 = vld [vmem:[#allocation4 + $0x178] sm:$0xff]
    %v2074 = vld [vmem:[#allocation4 + $0x180] sm:$0xff]
    %v2075 = vld [vmem:[#allocation4 + $0x188] sm:$0xff]
    %v2076 = vld [vmem:[#allocation4 + $0x190] sm:$0xff]
    %v2077 = vld [vmem:[#allocation4 + $0x198] sm:$0xff]
    %v2078 = vld [vmem:[#allocation4 + $0x1a0] sm:$0xff]
    %v2079 = vld [vmem:[#allocation4 + $0x1a8] sm:$0xff]
    %v2080 = vld [vmem:[#allocation4 + $0x1b0] sm:$0xff]
    %v2081 = vld [vmem:[#allocation4 + $0x1b8] sm:$0xff]
    %v2082 = vld [vmem:[#allocation4 + $0x1c0] sm:$0xff]
    %v2083 = vld [vmem:[#allocation4 + $0x1c8] sm:$0xff]
    %v2084 = vld [vmem:[#allocation4 + $0x1d0] sm:$0xff]
    %v2085 = vld [vmem:[#allocation4 + $0x1d8] sm:$0xff]
    %v2086 = vld [vmem:[#allocation4 + $0x1e0] sm:$0xff]
    %v2087 = vld [vmem:[#allocation4 + $0x1e8] sm:$0xff]
    %v2088 = vld [vmem:[#allocation4 + $0x1f0] sm:$0xff]
    %v2089 = vld [vmem:[#allocation4 + $0x1f8] sm:$0xff]
    %v2090 = vld [vmem:[%s4] sm:$0x3]
    %v2092 = vlaneseq
    %v2093 = vshrl.u32 %v2092, 7
    %v2094 = vsub.s32 0, %v2093
    %v2095 = vrot.slane %v2090, %v2094
    %v2096 = vlaneseq
    %v2097 = vshrl.u32 %v2096, 7
    %v2098 = vsub.s32 1, %v2097
    %v2099 = vrot.slane %v2090, %v2098
    %v2166 = vunpack.c.l.b16 %v2026
    %v2167 = vunpack.c.h.b16 %v2026
    %v2168 = vunpack.c.l.b16 %v2027
    %v2169 = vunpack.c.h.b16 %v2027
    %v2170 = vunpack.c.l.b16 %v2028
    %v2171 = vunpack.c.h.b16 %v2028
    %v2172 = vunpack.c.l.b16 %v2029
    %v2173 = vunpack.c.h.b16 %v2029
    %v2174 = vunpack.c.l.b16 %v2030
    %v2175 = vunpack.c.h.b16 %v2030
    %v2176 = vunpack.c.l.b16 %v2031
    %v2177 = vunpack.c.h.b16 %v2031
    %v2178 = vunpack.c.l.b16 %v2032
    %v2179 = vunpack.c.h.b16 %v2032
    %v2180 = vunpack.c.l.b16 %v2033
    %v2181 = vunpack.c.h.b16 %v2033
    %v2182 = vunpack.c.l.b16 %v2034
    %v2183 = vunpack.c.h.b16 %v2034
    %v2184 = vunpack.c.l.b16 %v2035
    %v2185 = vunpack.c.h.b16 %v2035
    %v2186 = vunpack.c.l.b16 %v2036
    %v2187 = vunpack.c.h.b16 %v2036
    %v2188 = vunpack.c.l.b16 %v2037
    %v2189 = vunpack.c.h.b16 %v2037
    %v2190 = vunpack.c.l.b16 %v2038
    %v2191 = vunpack.c.h.b16 %v2038
    %v2192 = vunpack.c.l.b16 %v2039
    %v2193 = vunpack.c.h.b16 %v2039
    %v2194 = vunpack.c.l.b16 %v2040
    %v2195 = vunpack.c.h.b16 %v2040
    %v2196 = vunpack.c.l.b16 %v2041
    %v2197 = vunpack.c.h.b16 %v2041
    %v2198 = vunpack.c.l.b16 %v2042
    %v2199 = vunpack.c.h.b16 %v2042
    %v2200 = vunpack.c.l.b16 %v2043
    %v2201 = vunpack.c.h.b16 %v2043
    %v2202 = vunpack.c.l.b16 %v2044
    %v2203 = vunpack.c.h.b16 %v2044
    %v2204 = vunpack.c.l.b16 %v2045
    %v2205 = vunpack.c.h.b16 %v2045
    %v2206 = vunpack.c.l.b16 %v2046
    %v2207 = vunpack.c.h.b16 %v2046
    %v2208 = vunpack.c.l.b16 %v2047
    %v2209 = vunpack.c.h.b16 %v2047
    %v2210 = vunpack.c.l.b16 %v2048
    %v2211 = vunpack.c.h.b16 %v2048
    %v2212 = vunpack.c.l.b16 %v2049
    %v2213 = vunpack.c.h.b16 %v2049
    %v2214 = vunpack.c.l.b16 %v2050
    %v2215 = vunpack.c.h.b16 %v2050
    %v2216 = vunpack.c.l.b16 %v2051
    %v2217 = vunpack.c.h.b16 %v2051
    %v2218 = vunpack.c.l.b16 %v2052
    %v2219 = vunpack.c.h.b16 %v2052
    %v2220 = vunpack.c.l.b16 %v2053
    %v2221 = vunpack.c.h.b16 %v2053
    %v2222 = vunpack.c.l.b16 %v2054
    %v2223 = vunpack.c.h.b16 %v2054
    %v2224 = vunpack.c.l.b16 %v2055
    %v2225 = vunpack.c.h.b16 %v2055
    %v2226 = vunpack.c.l.b16 %v2056
    %v2227 = vunpack.c.h.b16 %v2056
    %v2228 = vunpack.c.l.b16 %v2057
    %v2229 = vunpack.c.h.b16 %v2057
    %v2230 = vunpack.c.l.b16 %v2058
    %v2231 = vunpack.c.h.b16 %v2058
    %v2232 = vunpack.c.l.b16 %v2059
    %v2233 = vunpack.c.h.b16 %v2059
    %v2234 = vunpack.c.l.b16 %v2060
    %v2235 = vunpack.c.h.b16 %v2060
    %v2236 = vunpack.c.l.b16 %v2061
    %v2237 = vunpack.c.h.b16 %v2061
    %v2238 = vunpack.c.l.b16 %v2062
    %v2239 = vunpack.c.h.b16 %v2062
    %v2240 = vunpack.c.l.b16 %v2063
    %v2241 = vunpack.c.h.b16 %v2063
    %v2242 = vunpack.c.l.b16 %v2064
    %v2243 = vunpack.c.h.b16 %v2064
    %v2244 = vunpack.c.l.b16 %v2065
    %v2245 = vunpack.c.h.b16 %v2065
    %v2246 = vunpack.c.l.b16 %v2066
    %v2247 = vunpack.c.h.b16 %v2066
    %v2248 = vunpack.c.l.b16 %v2067
    %v2249 = vunpack.c.h.b16 %v2067
    %v2250 = vunpack.c.l.b16 %v2068
    %v2251 = vunpack.c.h.b16 %v2068
    %v2252 = vunpack.c.l.b16 %v2069
    %v2253 = vunpack.c.h.b16 %v2069
    %v2254 = vunpack.c.l.b16 %v2070
    %v2255 = vunpack.c.h.b16 %v2070
    %v2256 = vunpack.c.l.b16 %v2071
    %v2257 = vunpack.c.h.b16 %v2071
    %v2258 = vunpack.c.l.b16 %v2072
    %v2259 = vunpack.c.h.b16 %v2072
    %v2260 = vunpack.c.l.b16 %v2073
    %v2261 = vunpack.c.h.b16 %v2073
    %v2262 = vunpack.c.l.b16 %v2074
    %v2263 = vunpack.c.h.b16 %v2074
    %v2264 = vunpack.c.l.b16 %v2075
    %v2265 = vunpack.c.h.b16 %v2075
    %v2266 = vunpack.c.l.b16 %v2076
    %v2267 = vunpack.c.h.b16 %v2076
    %v2268 = vunpack.c.l.b16 %v2077
    %v2269 = vunpack.c.h.b16 %v2077
    %v2270 = vunpack.c.l.b16 %v2078
    %v2271 = vunpack.c.h.b16 %v2078
    %v2272 = vunpack.c.l.b16 %v2079
    %v2273 = vunpack.c.h.b16 %v2079
    %v2274 = vunpack.c.l.b16 %v2080
    %v2275 = vunpack.c.h.b16 %v2080
    %v2276 = vunpack.c.l.b16 %v2081
    %v2277 = vunpack.c.h.b16 %v2081
    %v2278 = vunpack.c.l.b16 %v2082
    %v2279 = vunpack.c.h.b16 %v2082
    %v2280 = vunpack.c.l.b16 %v2083
    %v2281 = vunpack.c.h.b16 %v2083
    %v2282 = vunpack.c.l.b16 %v2084
    %v2283 = vunpack.c.h.b16 %v2084
    %v2284 = vunpack.c.l.b16 %v2085
    %v2285 = vunpack.c.h.b16 %v2085
    %v2286 = vunpack.c.l.b16 %v2086
    %v2287 = vunpack.c.h.b16 %v2086
    %v2288 = vunpack.c.l.b16 %v2087
    %v2289 = vunpack.c.h.b16 %v2087
    %v2290 = vunpack.c.l.b16 %v2088
    %v2291 = vunpack.c.h.b16 %v2088
    %v2292 = vunpack.c.l.b16 %v2089
    %v2293 = vunpack.c.h.b16 %v2089
    %v2294 = vpack.c.b16 %v2168, %v2166
    %v2295 = vpack.c.b16 %v2169, %v2167
    %v2296 = vpack.c.b16 %v2172, %v2170
    %v2297 = vpack.c.b16 %v2173, %v2171
    %v2298 = vpack.c.b16 %v2176, %v2174
    %v2299 = vpack.c.b16 %v2177, %v2175
    %v2300 = vpack.c.b16 %v2180, %v2178
    %v2301 = vpack.c.b16 %v2181, %v2179
    %v2302 = vpack.c.b16 %v2184, %v2182
    %v2303 = vpack.c.b16 %v2185, %v2183
    %v2304 = vpack.c.b16 %v2188, %v2186
    %v2305 = vpack.c.b16 %v2189, %v2187
    %v2306 = vpack.c.b16 %v2192, %v2190
    %v2307 = vpack.c.b16 %v2193, %v2191
    %v2308 = vpack.c.b16 %v2196, %v2194
    %v2309 = vpack.c.b16 %v2197, %v2195
    %v2310 = vpack.c.b16 %v2200, %v2198
    %v2311 = vpack.c.b16 %v2201, %v2199
    %v2312 = vpack.c.b16 %v2204, %v2202
    %v2313 = vpack.c.b16 %v2205, %v2203
    %v2314 = vpack.c.b16 %v2208, %v2206
    %v2315 = vpack.c.b16 %v2209, %v2207
    %v2316 = vpack.c.b16 %v2212, %v2210
    %v2317 = vpack.c.b16 %v2213, %v2211
    %v2318 = vpack.c.b16 %v2216, %v2214
    %v2319 = vpack.c.b16 %v2217, %v2215
    %v2320 = vpack.c.b16 %v2220, %v2218
    %v2321 = vpack.c.b16 %v2221, %v2219
    %v2322 = vpack.c.b16 %v2224, %v2222
    %v2323 = vpack.c.b16 %v2225, %v2223
    %v2324 = vpack.c.b16 %v2228, %v2226
    %v2325 = vpack.c.b16 %v2229, %v2227
    %v2326 = vpack.c.b16 %v2232, %v2230
    %v2327 = vpack.c.b16 %v2233, %v2231
    %v2328 = vpack.c.b16 %v2236, %v2234
    %v2329 = vpack.c.b16 %v2237, %v2235
    %v2330 = vpack.c.b16 %v2240, %v2238
    %v2331 = vpack.c.b16 %v2241, %v2239
    %v2332 = vpack.c.b16 %v2244, %v2242
    %v2333 = vpack.c.b16 %v2245, %v2243
    %v2334 = vpack.c.b16 %v2248, %v2246
    %v2335 = vpack.c.b16 %v2249, %v2247
    %v2336 = vpack.c.b16 %v2252, %v2250
    %v2337 = vpack.c.b16 %v2253, %v2251
    %v2338 = vpack.c.b16 %v2256, %v2254
    %v2339 = vpack.c.b16 %v2257, %v2255
    %v2340 = vpack.c.b16 %v2260, %v2258
    %v2341 = vpack.c.b16 %v2261, %v2259
    %v2342 = vpack.c.b16 %v2264, %v2262
    %v2343 = vpack.c.b16 %v2265, %v2263
    %v2344 = vpack.c.b16 %v2268, %v2266
    %v2345 = vpack.c.b16 %v2269, %v2267
    %v2346 = vpack.c.b16 %v2272, %v2270
    %v2347 = vpack.c.b16 %v2273, %v2271
    %v2348 = vpack.c.b16 %v2276, %v2274
    %v2349 = vpack.c.b16 %v2277, %v2275
    %v2350 = vpack.c.b16 %v2280, %v2278
    %v2351 = vpack.c.b16 %v2281, %v2279
    %v2352 = vpack.c.b16 %v2284, %v2282
    %v2353 = vpack.c.b16 %v2285, %v2283
    %v2354 = vpack.c.b16 %v2288, %v2286
    %v2355 = vpack.c.b16 %v2289, %v2287
    %v2356 = vpack.c.b16 %v2292, %v2290
    %v2357 = vpack.c.b16 %v2293, %v2291
    %2422 = vmatprep.subr.bf16.mxu0 %v2309
    %2423 = vmatpush1.bf16.msra.mxu0 %v2308
    %2424 = vmatprep.subr.bf16.mxu0 %v2307
    %2425 = vmatpush1.bf16.msra.mxu0 %v2306
    %2426 = vmatprep.subr.bf16.mxu0 %v2305
    %2427 = vmatpush1.bf16.msra.mxu0 %v2304
    %2428 = vmatprep.subr.bf16.mxu0 %v2303
    %2429 = vmatpush1.bf16.msra.mxu0 %v2302
    %2430 = vmatprep.subr.bf16.mxu0 %v2301
    %2431 = vmatpush1.bf16.msra.mxu0 %v2300
    %2432 = vmatprep.subr.bf16.mxu0 %v2299
    %2433 = vmatpush1.bf16.msra.mxu0 %v2298
    %2434 = vmatprep.subr.bf16.mxu0 %v2297
    %2435 = vmatpush1.bf16.msra.mxu0 %v2296
    %2436 = vmatprep.subr.bf16.mxu0 %v2295
    %2437 = vmatpush1.bf16.msra.mxu0 %v2294
    %2438 = vmatprep.subr.bf16.mxu0 %v2325
    %2439 = vmatpush2.bf16.msra.mxu0 %v2324
    %2440 = vmatprep.subr.bf16.mxu0 %v2323
    %2441 = vmatpush2.bf16.msra.mxu0 %v2322
    %2442 = vmatprep.subr.bf16.mxu0 %v2321
    %2443 = vmatpush2.bf16.msra.mxu0 %v2320
    %2444 = vmatprep.subr.bf16.mxu0 %v2319
    %2445 = vmatpush2.bf16.msra.mxu0 %v2318
    %2446 = vmatprep.subr.bf16.mxu0 %v2317
    %2447 = vmatpush2.bf16.msra.mxu0 %v2316
    %2448 = vmatprep.subr.bf16.mxu0 %v2315
    %2449 = vmatpush2.bf16.msra.mxu0 %v2314
    %2450 = vmatprep.subr.bf16.mxu0 %v2313
    %2451 = vmatpush2.bf16.msra.mxu0 %v2312
    %2452 = vmatprep.subr.bf16.mxu0 %v2311
    %2453 = vmatpush2.bf16.msra.mxu0 %v2310
    %2454 = vmatprep.mubr.bf16.mxu0 %v2023
    %2455 = vmatmul.mubr.bf16.gmra.mxu0 %v2022
    %v2456 = vpop.f32.mrf.mxu0
    %v2457 = vadd.f32 %v2095, %v2456
    %v2458 = vpop.f32.mrf.mxu0
    %v2459 = vadd.f32 %v2099, %v2458
    %v2460 = vpop.f32.mrf.mxu0
    %v2461 = vpop.f32.mrf.mxu0
    %2462 = vdwg.mxu0
    %2463 = vmatprep.subr.bf16.mxu0 %v2341
    %2464 = vmatpush1.bf16.msra.mxu0 %v2340
    %2465 = vmatprep.subr.bf16.mxu0 %v2339
    %2466 = vmatpush1.bf16.msra.mxu0 %v2338
    %2467 = vmatprep.subr.bf16.mxu0 %v2337
    %2468 = vmatpush1.bf16.msra.mxu0 %v2336
    %2469 = vmatprep.subr.bf16.mxu0 %v2335
    %2470 = vmatpush1.bf16.msra.mxu0 %v2334
    %2471 = vmatprep.subr.bf16.mxu0 %v2333
    %2472 = vmatpush1.bf16.msra.mxu0 %v2332
    %2473 = vmatprep.subr.bf16.mxu0 %v2331
    %2474 = vmatpush1.bf16.msra.mxu0 %v2330
    %2475 = vmatprep.subr.bf16.mxu0 %v2329
    %2476 = vmatpush1.bf16.msra.mxu0 %v2328
    %2477 = vmatprep.subr.bf16.mxu0 %v2327
    %2478 = vmatpush1.bf16.msra.mxu0 %v2326
    %2479 = vmatprep.subr.bf16.mxu0 %v2357
    %2480 = vmatpush2.bf16.msra.mxu0 %v2356
    %2481 = vmatprep.subr.bf16.mxu0 %v2355
    %2482 = vmatpush2.bf16.msra.mxu0 %v2354
    %2483 = vmatprep.subr.bf16.mxu0 %v2353
    %2484 = vmatpush2.bf16.msra.mxu0 %v2352
    %2485 = vmatprep.subr.bf16.mxu0 %v2351
    %2486 = vmatpush2.bf16.msra.mxu0 %v2350
    %2487 = vmatprep.subr.bf16.mxu0 %v2349
    %2488 = vmatpush2.bf16.msra.mxu0 %v2348
    %2489 = vmatprep.subr.bf16.mxu0 %v2347
    %2490 = vmatpush2.bf16.msra.mxu0 %v2346
    %2491 = vmatprep.subr.bf16.mxu0 %v2345
    %2492 = vmatpush2.bf16.msra.mxu0 %v2344
    %2493 = vmatprep.subr.bf16.mxu0 %v2343
    %2494 = vmatpush2.bf16.msra.mxu0 %v2342
    %2495 = vmatprep.mubr.bf16.mxu0 %v2025
    %2496 = vmatmul.mubr.bf16.gmra.mxu0 %v2024
    %v2497 = vpop.f32.mrf.mxu0
    %v2498 = vadd.f32 %v2457, %v2497
    %v2499 = vpop.f32.mrf.mxu0
    %v2500 = vadd.f32 %v2459, %v2499
    %v2501 = vpop.f32.mrf.mxu0
    %v2502 = vpop.f32.mrf.mxu0
    %2503 = vdwg.mxu0
    %v2504 = vmax.f32 %v2498, 0.0
    %v2505 = vmax.f32 %v2500, 0.0
    %v2506 = vpack.c.bf16 %v2504, %v2504
    %v2507 = vpack.c.bf16 %v2505, %v2505
    %v2508 = vld [vmem:[%s5] sm:$0xf]
    %v2509 = vld [vmem:[%s5 + $0x4] sm:$0xf]
    %v2510 = vld [vmem:[%s5 + $0x8] sm:$0xf]
    %v2511 = vld [vmem:[%s5 + $0xc] sm:$0xf]
    %v2512 = vld [vmem:[%s5 + $0x10] sm:$0xf]
    %v2513 = vld [vmem:[%s5 + $0x14] sm:$0xf]
    %v2514 = vld [vmem:[%s5 + $0x18] sm:$0xf]
    %v2515 = vld [vmem:[%s5 + $0x1c] sm:$0xf]
    %v2516 = vld [vmem:[%s5 + $0x20] sm:$0xf]
    %v2517 = vld [vmem:[%s5 + $0x24] sm:$0xf]
    %v2518 = vld [vmem:[%s5 + $0x28] sm:$0xf]
    %v2519 = vld [vmem:[%s5 + $0x2c] sm:$0xf]
    %v2520 = vld [vmem:[%s5 + $0x30] sm:$0xf]
    %v2521 = vld [vmem:[%s5 + $0x34] sm:$0xf]
    %v2522 = vld [vmem:[%s5 + $0x38] sm:$0xf]
    %v2523 = vld [vmem:[%s5 + $0x3c] sm:$0xf]
    %v2524 = vld [vmem:[%s5 + $0x40] sm:$0xf]
    %v2525 = vld [vmem:[%s5 + $0x44] sm:$0xf]
    %v2526 = vld [vmem:[%s5 + $0x48] sm:$0xf]
    %v2527 = vld [vmem:[%s5 + $0x4c] sm:$0xf]
    %v2528 = vld [vmem:[%s5 + $0x50] sm:$0xf]
    %v2529 = vld [vmem:[%s5 + $0x54] sm:$0xf]
    %v2530 = vld [vmem:[%s5 + $0x58] sm:$0xf]
    %v2531 = vld [vmem:[%s5 + $0x5c] sm:$0xf]
    %v2532 = vld [vmem:[%s5 + $0x60] sm:$0xf]
    %v2533 = vld [vmem:[%s5 + $0x64] sm:$0xf]
    %v2534 = vld [vmem:[%s5 + $0x68] sm:$0xf]
    %v2535 = vld [vmem:[%s5 + $0x6c] sm:$0xf]
    %v2536 = vld [vmem:[%s5 + $0x70] sm:$0xf]
    %v2537 = vld [vmem:[%s5 + $0x74] sm:$0xf]
    %v2538 = vld [vmem:[%s5 + $0x78] sm:$0xf]
    %v2539 = vld [vmem:[%s5 + $0x7c] sm:$0xf]
    %v2540 = vld [vmem:[%s6] sm:$0x1]
    %v2542 = vlaneseq
    %v2543 = vshrl.u32 %v2542, 7
    %v2544 = vsub.s32 0, %v2543
    %v2545 = vrot.slane %v2540, %v2544
    %v2579 = vunpack.c.l.b16 %v2508
    %v2580 = vunpack.c.l.b16 %v2509
    %v2581 = vunpack.c.l.b16 %v2510
    %v2582 = vunpack.c.l.b16 %v2511
    %v2583 = vunpack.c.l.b16 %v2512
    %v2584 = vunpack.c.l.b16 %v2513
    %v2585 = vunpack.c.l.b16 %v2514
    %v2586 = vunpack.c.l.b16 %v2515
    %v2587 = vunpack.c.l.b16 %v2516
    %v2588 = vunpack.c.l.b16 %v2517
    %v2589 = vunpack.c.l.b16 %v2518
    %v2590 = vunpack.c.l.b16 %v2519
    %v2591 = vunpack.c.l.b16 %v2520
    %v2592 = vunpack.c.l.b16 %v2521
    %v2593 = vunpack.c.l.b16 %v2522
    %v2594 = vunpack.c.l.b16 %v2523
    %v2595 = vunpack.c.l.b16 %v2524
    %v2596 = vunpack.c.l.b16 %v2525
    %v2597 = vunpack.c.l.b16 %v2526
    %v2598 = vunpack.c.l.b16 %v2527
    %v2599 = vunpack.c.l.b16 %v2528
    %v2600 = vunpack.c.l.b16 %v2529
    %v2601 = vunpack.c.l.b16 %v2530
    %v2602 = vunpack.c.l.b16 %v2531
    %v2603 = vunpack.c.l.b16 %v2532
    %v2604 = vunpack.c.l.b16 %v2533
    %v2605 = vunpack.c.l.b16 %v2534
    %v2606 = vunpack.c.l.b16 %v2535
    %v2607 = vunpack.c.l.b16 %v2536
    %v2608 = vunpack.c.l.b16 %v2537
    %v2609 = vunpack.c.l.b16 %v2538
    %v2610 = vunpack.c.l.b16 %v2539
    %v2611 = vpack.c.b16 %v2580, %v2579
    %v2612 = vpack.c.b16 %v2582, %v2581
    %v2613 = vpack.c.b16 %v2584, %v2583
    %v2614 = vpack.c.b16 %v2586, %v2585
    %v2615 = vpack.c.b16 %v2588, %v2587
    %v2616 = vpack.c.b16 %v2590, %v2589
    %v2617 = vpack.c.b16 %v2592, %v2591
    %v2618 = vpack.c.b16 %v2594, %v2593
    %v2619 = vpack.c.b16 %v2596, %v2595
    %v2620 = vpack.c.b16 %v2598, %v2597
    %v2621 = vpack.c.b16 %v2600, %v2599
    %v2622 = vpack.c.b16 %v2602, %v2601
    %v2623 = vpack.c.b16 %v2604, %v2603
    %v2624 = vpack.c.b16 %v2606, %v2605
    %v2625 = vpack.c.b16 %v2608, %v2607
    %v2626 = vpack.c.b16 %v2610, %v2609
    %2643 = vmatprep.subr.bf16.mxu0 0
    %2644 = vmatpush1.bf16.msra.mxu0 %v2618
    %2645 = vmatprep.subr.bf16.mxu0 0
    %2646 = vmatpush1.bf16.msra.mxu0 %v2617
    %2647 = vmatprep.subr.bf16.mxu0 0
    %2648 = vmatpush1.bf16.msra.mxu0 %v2616
    %2649 = vmatprep.subr.bf16.mxu0 0
    %2650 = vmatpush1.bf16.msra.mxu0 %v2615
    %2651 = vmatprep.subr.bf16.mxu0 0
    %2652 = vmatpush1.bf16.msra.mxu0 %v2614
    %2653 = vmatprep.subr.bf16.mxu0 0
    %2654 = vmatpush1.bf16.msra.mxu0 %v2613
    %2655 = vmatprep.subr.bf16.mxu0 0
    %2656 = vmatpush1.bf16.msra.mxu0 %v2612
    %2657 = vmatprep.subr.bf16.mxu0 0
    %2658 = vmatpush1.bf16.msra.mxu0 %v2611
    %2659 = vmatprep.subr.bf16.mxu0 0
    %2660 = vmatpush2.bf16.msra.mxu0 %v2626
    %2661 = vmatprep.subr.bf16.mxu0 0
    %2662 = vmatpush2.bf16.msra.mxu0 %v2625
    %2663 = vmatprep.subr.bf16.mxu0 0
    %2664 = vmatpush2.bf16.msra.mxu0 %v2624
    %2665 = vmatprep.subr.bf16.mxu0 0
    %2666 = vmatpush2.bf16.msra.mxu0 %v2623
    %2667 = vmatprep.subr.bf16.mxu0 0
    %2668 = vmatpush2.bf16.msra.mxu0 %v2622
    %2669 = vmatprep.subr.bf16.mxu0 0
    %2670 = vmatpush2.bf16.msra.mxu0 %v2621
    %2671 = vmatprep.subr.bf16.mxu0 0
    %2672 = vmatpush2.bf16.msra.mxu0 %v2620
    %2673 = vmatprep.subr.bf16.mxu0 0
    %2674 = vmatpush2.bf16.msra.mxu0 %v2619
    %2675 = vmatprep.mubr.bf16.mxu0 %v2507
    %2676 = vmatmul.mubr.bf16.gmra.mxu0 %v2506
    %v2677 = vpop.f32.mrf.mxu0
    %v2678 = vadd.f32 %v2545, %v2677
    %v2679 = vpop.f32.mrf.mxu0
    %v2680 = vpop.f32.mrf.mxu0
    %v2681 = vpop.f32.mrf.mxu0
    %2682 = vdwg.mxu0
    %v2683 = vpack.c.bf16 %v2678, %v2678
    %v2684 = vld [vmem:[%s7] sm:$0xff]
    %v2685 = vld [vmem:[%s7 + $0x8] sm:$0xff]
    %v2686 = vld [vmem:[%s7 + $0x10] sm:$0xff]
    %v2687 = vld [vmem:[%s7 + $0x18] sm:$0xff]
    %v2688 = vld [vmem:[%s8] sm:$0x3]
    %v2690 = vlaneseq
    %v2691 = vshrl.u32 %v2690, 7
    %v2692 = vsub.s32 0, %v2691
    %v2693 = vrot.slane %v2688, %v2692
    %v2694 = vlaneseq
    %v2695 = vshrl.u32 %v2694, 7
    %v2696 = vsub.s32 1, %v2695
    %v2697 = vrot.slane %v2688, %v2696
    %v2704 = vunpack.c.l.b16 %v2684
    %v2705 = vunpack.c.h.b16 %v2684
    %v2706 = vunpack.c.l.b16 %v2685
    %v2707 = vunpack.c.h.b16 %v2685
    %v2708 = vunpack.c.l.b16 %v2686
    %v2709 = vunpack.c.h.b16 %v2686
    %v2710 = vunpack.c.l.b16 %v2687
    %v2711 = vunpack.c.h.b16 %v2687
    %v2712 = vpack.c.b16 %v2706, %v2704
    %v2713 = vpack.c.b16 %v2707, %v2705
    %v2714 = vpack.c.b16 %v2710, %v2708
    %v2715 = vpack.c.b16 %v2711, %v2709
    %vm2720 = vcmask 261120
    %v2722 = vsel %vm2720, %v2683, 0
    %2724 = vmatprep.subr.bf16.mxu0 0
    %2725 = vmatpush1.bf16.msra.mxu0 0
    %2726 = vmatprep.subr.bf16.mxu0 0
    %2727 = vmatpush1.bf16.msra.mxu0 0
    %2728 = vmatprep.subr.bf16.mxu0 0
    %2729 = vmatpush1.bf16.msra.mxu0 0
    %2730 = vmatprep.subr.bf16.mxu0 0
    %2731 = vmatpush1.bf16.msra.mxu0 0
    %2732 = vmatprep.subr.bf16.mxu0 0
    %2733 = vmatpush1.bf16.msra.mxu0 0
    %2734 = vmatprep.subr.bf16.mxu0 0
    %2735 = vmatpush1.bf16.msra.mxu0 0
    %2736 = vmatprep.subr.bf16.mxu0 %v2715
    %2737 = vmatpush1.bf16.msra.mxu0 %v2714
    %2738 = vmatprep.subr.bf16.mxu0 %v2713
    %2739 = vmatpush1.bf16.msra.mxu0 %v2712
    %2740 = vmatprep.subr.bf16.mxu0 0
    %2741 = vmatpush2.bf16.msra.mxu0 0
    %2742 = vmatprep.subr.bf16.mxu0 0
    %2743 = vmatpush2.bf16.msra.mxu0 0
    %2744 = vmatprep.subr.bf16.mxu0 0
    %2745 = vmatpush2.bf16.msra.mxu0 0
    %2746 = vmatprep.subr.bf16.mxu0 0
    %2747 = vmatpush2.bf16.msra.mxu0 0
    %2748 = vmatprep.subr.bf16.mxu0 0
    %2749 = vmatpush2.bf16.msra.mxu0 0
    %2750 = vmatprep.subr.bf16.mxu0 0
    %2751 = vmatpush2.bf16.msra.mxu0 0
    %2752 = vmatprep.subr.bf16.mxu0 0
    %2753 = vmatpush2.bf16.msra.mxu0 0
    %2754 = vmatprep.subr.bf16.mxu0 0
    %2755 = vmatpush2.bf16.msra.mxu0 0
    %2756 = vmatprep.mubr.bf16.mxu0 0
    %2757 = vmatmul.mubr.bf16.gmra.mxu0 %v2722
    %v2758 = vpop.f32.mrf.mxu0
    %v2759 = vadd.f32 %v2693, %v2758
    %v2760 = vpop.f32.mrf.mxu0
    %v2761 = vadd.f32 %v2697, %v2760
    %v2762 = vpop.f32.mrf.mxu0
    %v2763 = vpop.f32.mrf.mxu0
    %2764 = vdwg.mxu0
    %v2765 = vmax.f32 %v2759, 0.0
    %v2766 = vmax.f32 %v2761, 0.0
    %v2767 = vpack.c.bf16 %v2765, %v2765
    %v2768 = vpack.c.bf16 %v2766, %v2766
    %v2769 = vld [vmem:[#allocation6] sm:$0xff]
    %v2770 = vld [vmem:[#allocation6 + $0x8] sm:$0xff]
    %v2771 = vld [vmem:[#allocation6 + $0x10] sm:$0xff]
    %v2772 = vld [vmem:[#allocation6 + $0x18] sm:$0xff]
    %v2773 = vld [vmem:[#allocation6 + $0x20] sm:$0xff]
    %v2774 = vld [vmem:[#allocation6 + $0x28] sm:$0xff]
    %v2775 = vld [vmem:[#allocation6 + $0x30] sm:$0xff]
    %v2776 = vld [vmem:[#allocation6 + $0x38] sm:$0xff]
    %v2777 = vld [vmem:[#allocation6 + $0x40] sm:$0xff]
    %v2778 = vld [vmem:[#allocation6 + $0x48] sm:$0xff]
    %v2779 = vld [vmem:[#allocation6 + $0x50] sm:$0xff]
    %v2780 = vld [vmem:[#allocation6 + $0x58] sm:$0xff]
    %v2781 = vld [vmem:[#allocation6 + $0x60] sm:$0xff]
    %v2782 = vld [vmem:[#allocation6 + $0x68] sm:$0xff]
    %v2783 = vld [vmem:[#allocation6 + $0x70] sm:$0xff]
    %v2784 = vld [vmem:[#allocation6 + $0x78] sm:$0xff]
    %v2785 = vld [vmem:[#allocation6 + $0x80] sm:$0xff]
    %v2786 = vld [vmem:[#allocation6 + $0x88] sm:$0xff]
    %v2787 = vld [vmem:[#allocation6 + $0x90] sm:$0xff]
    %v2788 = vld [vmem:[#allocation6 + $0x98] sm:$0xff]
    %v2789 = vld [vmem:[#allocation6 + $0xa0] sm:$0xff]
    %v2790 = vld [vmem:[#allocation6 + $0xa8] sm:$0xff]
    %v2791 = vld [vmem:[#allocation6 + $0xb0] sm:$0xff]
    %v2792 = vld [vmem:[#allocation6 + $0xb8] sm:$0xff]
    %v2793 = vld [vmem:[#allocation6 + $0xc0] sm:$0xff]
    %v2794 = vld [vmem:[#allocation6 + $0xc8] sm:$0xff]
    %v2795 = vld [vmem:[#allocation6 + $0xd0] sm:$0xff]
    %v2796 = vld [vmem:[#allocation6 + $0xd8] sm:$0xff]
    %v2797 = vld [vmem:[#allocation6 + $0xe0] sm:$0xff]
    %v2798 = vld [vmem:[#allocation6 + $0xe8] sm:$0xff]
    %v2799 = vld [vmem:[#allocation6 + $0xf0] sm:$0xff]
    %v2800 = vld [vmem:[#allocation6 + $0xf8] sm:$0xff]
    %v2801 = vld [vmem:[#allocation6 + $0x100] sm:$0xff]
    %v2802 = vld [vmem:[#allocation6 + $0x108] sm:$0xff]
    %v2803 = vld [vmem:[#allocation6 + $0x110] sm:$0xff]
    %v2804 = vld [vmem:[#allocation6 + $0x118] sm:$0xff]
    %v2805 = vld [vmem:[#allocation6 + $0x120] sm:$0xff]
    %v2806 = vld [vmem:[#allocation6 + $0x128] sm:$0xff]
    %v2807 = vld [vmem:[#allocation6 + $0x130] sm:$0xff]
    %v2808 = vld [vmem:[#allocation6 + $0x138] sm:$0xff]
    %v2809 = vld [vmem:[#allocation6 + $0x140] sm:$0xff]
    %v2810 = vld [vmem:[#allocation6 + $0x148] sm:$0xff]
    %v2811 = vld [vmem:[#allocation6 + $0x150] sm:$0xff]
    %v2812 = vld [vmem:[#allocation6 + $0x158] sm:$0xff]
    %v2813 = vld [vmem:[#allocation6 + $0x160] sm:$0xff]
    %v2814 = vld [vmem:[#allocation6 + $0x168] sm:$0xff]
    %v2815 = vld [vmem:[#allocation6 + $0x170] sm:$0xff]
    %v2816 = vld [vmem:[#allocation6 + $0x178] sm:$0xff]
    %v2817 = vld [vmem:[#allocation6 + $0x180] sm:$0xff]
    %v2818 = vld [vmem:[#allocation6 + $0x188] sm:$0xff]
    %v2819 = vld [vmem:[#allocation6 + $0x190] sm:$0xff]
    %v2820 = vld [vmem:[#allocation6 + $0x198] sm:$0xff]
    %v2821 = vld [vmem:[#allocation6 + $0x1a0] sm:$0xff]
    %v2822 = vld [vmem:[#allocation6 + $0x1a8] sm:$0xff]
    %v2823 = vld [vmem:[#allocation6 + $0x1b0] sm:$0xff]
    %v2824 = vld [vmem:[#allocation6 + $0x1b8] sm:$0xff]
    %v2825 = vld [vmem:[#allocation6 + $0x1c0] sm:$0xff]
    %v2826 = vld [vmem:[#allocation6 + $0x1c8] sm:$0xff]
    %v2827 = vld [vmem:[#allocation6 + $0x1d0] sm:$0xff]
    %v2828 = vld [vmem:[#allocation6 + $0x1d8] sm:$0xff]
    %v2829 = vld [vmem:[#allocation6 + $0x1e0] sm:$0xff]
    %v2830 = vld [vmem:[#allocation6 + $0x1e8] sm:$0xff]
    %v2831 = vld [vmem:[#allocation6 + $0x1f0] sm:$0xff]
    %v2832 = vld [vmem:[#allocation6 + $0x1f8] sm:$0xff]
    %v2833 = vld [vmem:[%s10] sm:$0xf]
    %v2835 = vlaneseq
    %v2836 = vshrl.u32 %v2835, 7
    %v2837 = vsub.s32 0, %v2836
    %v2838 = vrot.slane %v2833, %v2837
    %v2839 = vlaneseq
    %v2840 = vshrl.u32 %v2839, 7
    %v2841 = vsub.s32 1, %v2840
    %v2842 = vrot.slane %v2833, %v2841
    %v2843 = vlaneseq
    %v2844 = vshrl.u32 %v2843, 7
    %v2845 = vsub.s32 2, %v2844
    %v2846 = vrot.slane %v2833, %v2845
    %v2847 = vlaneseq
    %v2848 = vshrl.u32 %v2847, 7
    %v2849 = vsub.s32 3, %v2848
    %v2850 = vrot.slane %v2833, %v2849
    %v2919 = vunpack.c.l.b16 %v2769
    %v2920 = vunpack.c.h.b16 %v2769
    %v2921 = vunpack.c.l.b16 %v2770
    %v2922 = vunpack.c.h.b16 %v2770
    %v2923 = vunpack.c.l.b16 %v2771
    %v2924 = vunpack.c.h.b16 %v2771
    %v2925 = vunpack.c.l.b16 %v2772
    %v2926 = vunpack.c.h.b16 %v2772
    %v2927 = vunpack.c.l.b16 %v2773
    %v2928 = vunpack.c.h.b16 %v2773
    %v2929 = vunpack.c.l.b16 %v2774
    %v2930 = vunpack.c.h.b16 %v2774
    %v2931 = vunpack.c.l.b16 %v2775
    %v2932 = vunpack.c.h.b16 %v2775
    %v2933 = vunpack.c.l.b16 %v2776
    %v2934 = vunpack.c.h.b16 %v2776
    %v2935 = vunpack.c.l.b16 %v2777
    %v2936 = vunpack.c.h.b16 %v2777
    %v2937 = vunpack.c.l.b16 %v2778
    %v2938 = vunpack.c.h.b16 %v2778
    %v2939 = vunpack.c.l.b16 %v2779
    %v2940 = vunpack.c.h.b16 %v2779
    %v2941 = vunpack.c.l.b16 %v2780
    %v2942 = vunpack.c.h.b16 %v2780
    %v2943 = vunpack.c.l.b16 %v2781
    %v2944 = vunpack.c.h.b16 %v2781
    %v2945 = vunpack.c.l.b16 %v2782
    %v2946 = vunpack.c.h.b16 %v2782
    %v2947 = vunpack.c.l.b16 %v2783
    %v2948 = vunpack.c.h.b16 %v2783
    %v2949 = vunpack.c.l.b16 %v2784
    %v2950 = vunpack.c.h.b16 %v2784
    %v2951 = vunpack.c.l.b16 %v2785
    %v2952 = vunpack.c.h.b16 %v2785
    %v2953 = vunpack.c.l.b16 %v2786
    %v2954 = vunpack.c.h.b16 %v2786
    %v2955 = vunpack.c.l.b16 %v2787
    %v2956 = vunpack.c.h.b16 %v2787
    %v2957 = vunpack.c.l.b16 %v2788
    %v2958 = vunpack.c.h.b16 %v2788
    %v2959 = vunpack.c.l.b16 %v2789
    %v2960 = vunpack.c.h.b16 %v2789
    %v2961 = vunpack.c.l.b16 %v2790
    %v2962 = vunpack.c.h.b16 %v2790
    %v2963 = vunpack.c.l.b16 %v2791
    %v2964 = vunpack.c.h.b16 %v2791
    %v2965 = vunpack.c.l.b16 %v2792
    %v2966 = vunpack.c.h.b16 %v2792
    %v2967 = vunpack.c.l.b16 %v2793
    %v2968 = vunpack.c.h.b16 %v2793
    %v2969 = vunpack.c.l.b16 %v2794
    %v2970 = vunpack.c.h.b16 %v2794
    %v2971 = vunpack.c.l.b16 %v2795
    %v2972 = vunpack.c.h.b16 %v2795
    %v2973 = vunpack.c.l.b16 %v2796
    %v2974 = vunpack.c.h.b16 %v2796
    %v2975 = vunpack.c.l.b16 %v2797
    %v2976 = vunpack.c.h.b16 %v2797
    %v2977 = vunpack.c.l.b16 %v2798
    %v2978 = vunpack.c.h.b16 %v2798
    %v2979 = vunpack.c.l.b16 %v2799
    %v2980 = vunpack.c.h.b16 %v2799
    %v2981 = vunpack.c.l.b16 %v2800
    %v2982 = vunpack.c.h.b16 %v2800
    %v2983 = vunpack.c.l.b16 %v2801
    %v2984 = vunpack.c.h.b16 %v2801
    %v2985 = vunpack.c.l.b16 %v2802
    %v2986 = vunpack.c.h.b16 %v2802
    %v2987 = vunpack.c.l.b16 %v2803
    %v2988 = vunpack.c.h.b16 %v2803
    %v2989 = vunpack.c.l.b16 %v2804
    %v2990 = vunpack.c.h.b16 %v2804
    %v2991 = vunpack.c.l.b16 %v2805
    %v2992 = vunpack.c.h.b16 %v2805
    %v2993 = vunpack.c.l.b16 %v2806
    %v2994 = vunpack.c.h.b16 %v2806
    %v2995 = vunpack.c.l.b16 %v2807
    %v2996 = vunpack.c.h.b16 %v2807
    %v2997 = vunpack.c.l.b16 %v2808
    %v2998 = vunpack.c.h.b16 %v2808
    %v2999 = vunpack.c.l.b16 %v2809
    %v3000 = vunpack.c.h.b16 %v2809
    %v3001 = vunpack.c.l.b16 %v2810
    %v3002 = vunpack.c.h.b16 %v2810
    %v3003 = vunpack.c.l.b16 %v2811
    %v3004 = vunpack.c.h.b16 %v2811
    %v3005 = vunpack.c.l.b16 %v2812
    %v3006 = vunpack.c.h.b16 %v2812
    %v3007 = vunpack.c.l.b16 %v2813
    %v3008 = vunpack.c.h.b16 %v2813
    %v3009 = vunpack.c.l.b16 %v2814
    %v3010 = vunpack.c.h.b16 %v2814
    %v3011 = vunpack.c.l.b16 %v2815
    %v3012 = vunpack.c.h.b16 %v2815
    %v3013 = vunpack.c.l.b16 %v2816
    %v3014 = vunpack.c.h.b16 %v2816
    %v3015 = vunpack.c.l.b16 %v2817
    %v3016 = vunpack.c.h.b16 %v2817
    %v3017 = vunpack.c.l.b16 %v2818
    %v3018 = vunpack.c.h.b16 %v2818
    %v3019 = vunpack.c.l.b16 %v2819
    %v3020 = vunpack.c.h.b16 %v2819
    %v3021 = vunpack.c.l.b16 %v2820
    %v3022 = vunpack.c.h.b16 %v2820
    %v3023 = vunpack.c.l.b16 %v2821
    %v3024 = vunpack.c.h.b16 %v2821
    %v3025 = vunpack.c.l.b16 %v2822
    %v3026 = vunpack.c.h.b16 %v2822
    %v3027 = vunpack.c.l.b16 %v2823
    %v3028 = vunpack.c.h.b16 %v2823
    %v3029 = vunpack.c.l.b16 %v2824
    %v3030 = vunpack.c.h.b16 %v2824
    %v3031 = vunpack.c.l.b16 %v2825
    %v3032 = vunpack.c.h.b16 %v2825
    %v3033 = vunpack.c.l.b16 %v2826
    %v3034 = vunpack.c.h.b16 %v2826
    %v3035 = vunpack.c.l.b16 %v2827
    %v3036 = vunpack.c.h.b16 %v2827
    %v3037 = vunpack.c.l.b16 %v2828
    %v3038 = vunpack.c.h.b16 %v2828
    %v3039 = vunpack.c.l.b16 %v2829
    %v3040 = vunpack.c.h.b16 %v2829
    %v3041 = vunpack.c.l.b16 %v2830
    %v3042 = vunpack.c.h.b16 %v2830
    %v3043 = vunpack.c.l.b16 %v2831
    %v3044 = vunpack.c.h.b16 %v2831
    %v3045 = vunpack.c.l.b16 %v2832
    %v3046 = vunpack.c.h.b16 %v2832
    %v3047 = vpack.c.b16 %v2923, %v2919
    %v3048 = vpack.c.b16 %v2924, %v2920
    %v3049 = vpack.c.b16 %v2925, %v2921
    %v3050 = vpack.c.b16 %v2926, %v2922
    %v3051 = vpack.c.b16 %v2931, %v2927
    %v3052 = vpack.c.b16 %v2932, %v2928
    %v3053 = vpack.c.b16 %v2933, %v2929
    %v3054 = vpack.c.b16 %v2934, %v2930
    %v3055 = vpack.c.b16 %v2939, %v2935
    %v3056 = vpack.c.b16 %v2940, %v2936
    %v3057 = vpack.c.b16 %v2941, %v2937
    %v3058 = vpack.c.b16 %v2942, %v2938
    %v3059 = vpack.c.b16 %v2947, %v2943
    %v3060 = vpack.c.b16 %v2948, %v2944
    %v3061 = vpack.c.b16 %v2949, %v2945
    %v3062 = vpack.c.b16 %v2950, %v2946
    %v3063 = vpack.c.b16 %v2955, %v2951
    %v3064 = vpack.c.b16 %v2956, %v2952
    %v3065 = vpack.c.b16 %v2957, %v2953
    %v3066 = vpack.c.b16 %v2958, %v2954
    %v3067 = vpack.c.b16 %v2963, %v2959
    %v3068 = vpack.c.b16 %v2964, %v2960
    %v3069 = vpack.c.b16 %v2965, %v2961
    %v3070 = vpack.c.b16 %v2966, %v2962
    %v3071 = vpack.c.b16 %v2971, %v2967
    %v3072 = vpack.c.b16 %v2972, %v2968
    %v3073 = vpack.c.b16 %v2973, %v2969
    %v3074 = vpack.c.b16 %v2974, %v2970
    %v3075 = vpack.c.b16 %v2979, %v2975
    %v3076 = vpack.c.b16 %v2980, %v2976
    %v3077 = vpack.c.b16 %v2981, %v2977
    %v3078 = vpack.c.b16 %v2982, %v2978
    %v3079 = vpack.c.b16 %v2987, %v2983
    %v3080 = vpack.c.b16 %v2988, %v2984
    %v3081 = vpack.c.b16 %v2989, %v2985
    %v3082 = vpack.c.b16 %v2990, %v2986
    %v3083 = vpack.c.b16 %v2995, %v2991
    %v3084 = vpack.c.b16 %v2996, %v2992
    %v3085 = vpack.c.b16 %v2997, %v2993
    %v3086 = vpack.c.b16 %v2998, %v2994
    %v3087 = vpack.c.b16 %v3003, %v2999
    %v3088 = vpack.c.b16 %v3004, %v3000
    %v3089 = vpack.c.b16 %v3005, %v3001
    %v3090 = vpack.c.b16 %v3006, %v3002
    %v3091 = vpack.c.b16 %v3011, %v3007
    %v3092 = vpack.c.b16 %v3012, %v3008
    %v3093 = vpack.c.b16 %v3013, %v3009
    %v3094 = vpack.c.b16 %v3014, %v3010
    %v3095 = vpack.c.b16 %v3019, %v3015
    %v3096 = vpack.c.b16 %v3020, %v3016
    %v3097 = vpack.c.b16 %v3021, %v3017
    %v3098 = vpack.c.b16 %v3022, %v3018
    %v3099 = vpack.c.b16 %v3027, %v3023
    %v3100 = vpack.c.b16 %v3028, %v3024
    %v3101 = vpack.c.b16 %v3029, %v3025
    %v3102 = vpack.c.b16 %v3030, %v3026
    %v3103 = vpack.c.b16 %v3035, %v3031
    %v3104 = vpack.c.b16 %v3036, %v3032
    %v3105 = vpack.c.b16 %v3037, %v3033
    %v3106 = vpack.c.b16 %v3038, %v3034
    %v3107 = vpack.c.b16 %v3043, %v3039
    %v3108 = vpack.c.b16 %v3044, %v3040
    %v3109 = vpack.c.b16 %v3045, %v3041
    %v3110 = vpack.c.b16 %v3046, %v3042
    %3175 = vmatprep.subr.bf16.mxu0 %v3076
    %3176 = vmatpush1.bf16.msra.mxu0 %v3075
    %3177 = vmatprep.subr.bf16.mxu0 %v3072
    %3178 = vmatpush1.bf16.msra.mxu0 %v3071
    %3179 = vmatprep.subr.bf16.mxu0 %v3068
    %3180 = vmatpush1.bf16.msra.mxu0 %v3067
    %3181 = vmatprep.subr.bf16.mxu0 %v3064
    %3182 = vmatpush1.bf16.msra.mxu0 %v3063
    %3183 = vmatprep.subr.bf16.mxu0 %v3060
    %3184 = vmatpush1.bf16.msra.mxu0 %v3059
    %3185 = vmatprep.subr.bf16.mxu0 %v3056
    %3186 = vmatpush1.bf16.msra.mxu0 %v3055
    %3187 = vmatprep.subr.bf16.mxu0 %v3052
    %3188 = vmatpush1.bf16.msra.mxu0 %v3051
    %3189 = vmatprep.subr.bf16.mxu0 %v3048
    %3190 = vmatpush1.bf16.msra.mxu0 %v3047
    %3191 = vmatprep.subr.bf16.mxu0 %v3108
    %3192 = vmatpush2.bf16.msra.mxu0 %v3107
    %3193 = vmatprep.subr.bf16.mxu0 %v3104
    %3194 = vmatpush2.bf16.msra.mxu0 %v3103
    %3195 = vmatprep.subr.bf16.mxu0 %v3100
    %3196 = vmatpush2.bf16.msra.mxu0 %v3099
    %3197 = vmatprep.subr.bf16.mxu0 %v3096
    %3198 = vmatpush2.bf16.msra.mxu0 %v3095
    %3199 = vmatprep.subr.bf16.mxu0 %v3092
    %3200 = vmatpush2.bf16.msra.mxu0 %v3091
    %3201 = vmatprep.subr.bf16.mxu0 %v3088
    %3202 = vmatpush2.bf16.msra.mxu0 %v3087
    %3203 = vmatprep.subr.bf16.mxu0 %v3084
    %3204 = vmatpush2.bf16.msra.mxu0 %v3083
    %3205 = vmatprep.subr.bf16.mxu0 %v3080
    %3206 = vmatpush2.bf16.msra.mxu0 %v3079
    %3207 = vmatprep.mubr.bf16.mxu0 %v2768
    %3208 = vmatmul.mubr.bf16.gmra.mxu0 %v2767
    %v3209 = vpop.f32.mrf.mxu0
    %v3210 = vadd.f32 %v2838, %v3209
    %v3211 = vpop.f32.mrf.mxu0
    %v3212 = vadd.f32 %v2842, %v3211
    %v3213 = vpop.f32.mrf.mxu0
    %v3214 = vpop.f32.mrf.mxu0
    %3215 = vdwg.mxu0
    %3216 = vmatprep.subr.bf16.mxu0 %v3078
    %3217 = vmatpush1.bf16.msra.mxu0 %v3077
    %3218 = vmatprep.subr.bf16.mxu0 %v3074
    %3219 = vmatpush1.bf16.msra.mxu0 %v3073
    %3220 = vmatprep.subr.bf16.mxu0 %v3070
    %3221 = vmatpush1.bf16.msra.mxu0 %v3069
    %3222 = vmatprep.subr.bf16.mxu0 %v3066
    %3223 = vmatpush1.bf16.msra.mxu0 %v3065
    %3224 = vmatprep.subr.bf16.mxu0 %v3062
    %3225 = vmatpush1.bf16.msra.mxu0 %v3061
    %3226 = vmatprep.subr.bf16.mxu0 %v3058
    %3227 = vmatpush1.bf16.msra.mxu0 %v3057
    %3228 = vmatprep.subr.bf16.mxu0 %v3054
    %3229 = vmatpush1.bf16.msra.mxu0 %v3053
    %3230 = vmatprep.subr.bf16.mxu0 %v3050
    %3231 = vmatpush1.bf16.msra.mxu0 %v3049
    %3232 = vmatprep.subr.bf16.mxu0 %v3110
    %3233 = vmatpush2.bf16.msra.mxu0 %v3109
    %3234 = vmatprep.subr.bf16.mxu0 %v3106
    %3235 = vmatpush2.bf16.msra.mxu0 %v3105
    %3236 = vmatprep.subr.bf16.mxu0 %v3102
    %3237 = vmatpush2.bf16.msra.mxu0 %v3101
    %3238 = vmatprep.subr.bf16.mxu0 %v3098
    %3239 = vmatpush2.bf16.msra.mxu0 %v3097
    %3240 = vmatprep.subr.bf16.mxu0 %v3094
    %3241 = vmatpush2.bf16.msra.mxu0 %v3093
    %3242 = vmatprep.subr.bf16.mxu0 %v3090
    %3243 = vmatpush2.bf16.msra.mxu0 %v3089
    %3244 = vmatprep.subr.bf16.mxu0 %v3086
    %3245 = vmatpush2.bf16.msra.mxu0 %v3085
    %3246 = vmatprep.subr.bf16.mxu0 %v3082
    %3247 = vmatpush2.bf16.msra.mxu0 %v3081
    %3248 = vmatprep.mubr.bf16.mxu0 %v2768
    %3249 = vmatmul.mubr.bf16.gmra.mxu0 %v2767
    %v3250 = vpop.f32.mrf.mxu0
    %v3251 = vadd.f32 %v2846, %v3250
    %v3252 = vpop.f32.mrf.mxu0
    %v3253 = vadd.f32 %v2850, %v3252
    %v3254 = vpop.f32.mrf.mxu0
    %v3255 = vpop.f32.mrf.mxu0
    %3256 = vdwg.mxu0
    %v3257 = vmax.f32 %v3210, 0.0
    %v3258 = vmax.f32 %v3212, 0.0
    %v3259 = vmax.f32 %v3251, 0.0
    %v3260 = vmax.f32 %v3253, 0.0
    %v3261 = vpack.c.bf16 %v3257, %v3257
    %v3262 = vpack.c.bf16 %v3258, %v3258
    %v3263 = vpack.c.bf16 %v3259, %v3259
    %v3264 = vpack.c.bf16 %v3260, %v3260
    %v3265 = vld [vmem:[#allocation7] sm:$0xff]
    %v3266 = vld [vmem:[#allocation7 + $0x8] sm:$0xff]
    %v3267 = vld [vmem:[#allocation7 + $0x10] sm:$0xff]
    %v3268 = vld [vmem:[#allocation7 + $0x18] sm:$0xff]
    %v3269 = vld [vmem:[#allocation7 + $0x20] sm:$0xff]
    %v3270 = vld [vmem:[#allocation7 + $0x28] sm:$0xff]
    %v3271 = vld [vmem:[#allocation7 + $0x30] sm:$0xff]
    %v3272 = vld [vmem:[#allocation7 + $0x38] sm:$0xff]
    %v3273 = vld [vmem:[#allocation7 + $0x40] sm:$0xff]
    %v3274 = vld [vmem:[#allocation7 + $0x48] sm:$0xff]
    %v3275 = vld [vmem:[#allocation7 + $0x50] sm:$0xff]
    %v3276 = vld [vmem:[#allocation7 + $0x58] sm:$0xff]
    %v3277 = vld [vmem:[#allocation7 + $0x60] sm:$0xff]
    %v3278 = vld [vmem:[#allocation7 + $0x68] sm:$0xff]
    %v3279 = vld [vmem:[#allocation7 + $0x70] sm:$0xff]
    %v3280 = vld [vmem:[#allocation7 + $0x78] sm:$0xff]
    %v3281 = vld [vmem:[#allocation7 + $0x80] sm:$0xff]
    %v3282 = vld [vmem:[#allocation7 + $0x88] sm:$0xff]
    %v3283 = vld [vmem:[#allocation7 + $0x90] sm:$0xff]
    %v3284 = vld [vmem:[#allocation7 + $0x98] sm:$0xff]
    %v3285 = vld [vmem:[#allocation7 + $0xa0] sm:$0xff]
    %v3286 = vld [vmem:[#allocation7 + $0xa8] sm:$0xff]
    %v3287 = vld [vmem:[#allocation7 + $0xb0] sm:$0xff]
    %v3288 = vld [vmem:[#allocation7 + $0xb8] sm:$0xff]
    %v3289 = vld [vmem:[#allocation7 + $0xc0] sm:$0xff]
    %v3290 = vld [vmem:[#allocation7 + $0xc8] sm:$0xff]
    %v3291 = vld [vmem:[#allocation7 + $0xd0] sm:$0xff]
    %v3292 = vld [vmem:[#allocation7 + $0xd8] sm:$0xff]
    %v3293 = vld [vmem:[#allocation7 + $0xe0] sm:$0xff]
    %v3294 = vld [vmem:[#allocation7 + $0xe8] sm:$0xff]
    %v3295 = vld [vmem:[#allocation7 + $0xf0] sm:$0xff]
    %v3296 = vld [vmem:[#allocation7 + $0xf8] sm:$0xff]
    %v3297 = vld [vmem:[#allocation7 + $0x100] sm:$0xff]
    %v3298 = vld [vmem:[#allocation7 + $0x108] sm:$0xff]
    %v3299 = vld [vmem:[#allocation7 + $0x110] sm:$0xff]
    %v3300 = vld [vmem:[#allocation7 + $0x118] sm:$0xff]
    %v3301 = vld [vmem:[#allocation7 + $0x120] sm:$0xff]
    %v3302 = vld [vmem:[#allocation7 + $0x128] sm:$0xff]
    %v3303 = vld [vmem:[#allocation7 + $0x130] sm:$0xff]
    %v3304 = vld [vmem:[#allocation7 + $0x138] sm:$0xff]
    %v3305 = vld [vmem:[#allocation7 + $0x140] sm:$0xff]
    %v3306 = vld [vmem:[#allocation7 + $0x148] sm:$0xff]
    %v3307 = vld [vmem:[#allocation7 + $0x150] sm:$0xff]
    %v3308 = vld [vmem:[#allocation7 + $0x158] sm:$0xff]
    %v3309 = vld [vmem:[#allocation7 + $0x160] sm:$0xff]
    %v3310 = vld [vmem:[#allocation7 + $0x168] sm:$0xff]
    %v3311 = vld [vmem:[#allocation7 + $0x170] sm:$0xff]
    %v3312 = vld [vmem:[#allocation7 + $0x178] sm:$0xff]
    %v3313 = vld [vmem:[#allocation7 + $0x180] sm:$0xff]
    %v3314 = vld [vmem:[#allocation7 + $0x188] sm:$0xff]
    %v3315 = vld [vmem:[#allocation7 + $0x190] sm:$0xff]
    %v3316 = vld [vmem:[#allocation7 + $0x198] sm:$0xff]
    %v3317 = vld [vmem:[#allocation7 + $0x1a0] sm:$0xff]
    %v3318 = vld [vmem:[#allocation7 + $0x1a8] sm:$0xff]
    %v3319 = vld [vmem:[#allocation7 + $0x1b0] sm:$0xff]
    %v3320 = vld [vmem:[#allocation7 + $0x1b8] sm:$0xff]
    %v3321 = vld [vmem:[#allocation7 + $0x1c0] sm:$0xff]
    %v3322 = vld [vmem:[#allocation7 + $0x1c8] sm:$0xff]
    %v3323 = vld [vmem:[#allocation7 + $0x1d0] sm:$0xff]
    %v3324 = vld [vmem:[#allocation7 + $0x1d8] sm:$0xff]
    %v3325 = vld [vmem:[#allocation7 + $0x1e0] sm:$0xff]
    %v3326 = vld [vmem:[#allocation7 + $0x1e8] sm:$0xff]
    %v3327 = vld [vmem:[#allocation7 + $0x1f0] sm:$0xff]
    %v3328 = vld [vmem:[#allocation7 + $0x1f8] sm:$0xff]
    %v3329 = vld [vmem:[#allocation7 + $0x200] sm:$0xff]
    %v3330 = vld [vmem:[#allocation7 + $0x208] sm:$0xff]
    %v3331 = vld [vmem:[#allocation7 + $0x210] sm:$0xff]
    %v3332 = vld [vmem:[#allocation7 + $0x218] sm:$0xff]
    %v3333 = vld [vmem:[#allocation7 + $0x220] sm:$0xff]
    %v3334 = vld [vmem:[#allocation7 + $0x228] sm:$0xff]
    %v3335 = vld [vmem:[#allocation7 + $0x230] sm:$0xff]
    %v3336 = vld [vmem:[#allocation7 + $0x238] sm:$0xff]
    %v3337 = vld [vmem:[#allocation7 + $0x240] sm:$0xff]
    %v3338 = vld [vmem:[#allocation7 + $0x248] sm:$0xff]
    %v3339 = vld [vmem:[#allocation7 + $0x250] sm:$0xff]
    %v3340 = vld [vmem:[#allocation7 + $0x258] sm:$0xff]
    %v3341 = vld [vmem:[#allocation7 + $0x260] sm:$0xff]
    %v3342 = vld [vmem:[#allocation7 + $0x268] sm:$0xff]
    %v3343 = vld [vmem:[#allocation7 + $0x270] sm:$0xff]
    %v3344 = vld [vmem:[#allocation7 + $0x278] sm:$0xff]
    %v3345 = vld [vmem:[#allocation7 + $0x280] sm:$0xff]
    %v3346 = vld [vmem:[#allocation7 + $0x288] sm:$0xff]
    %v3347 = vld [vmem:[#allocation7 + $0x290] sm:$0xff]
    %v3348 = vld [vmem:[#allocation7 + $0x298] sm:$0xff]
    %v3349 = vld [vmem:[#allocation7 + $0x2a0] sm:$0xff]
    %v3350 = vld [vmem:[#allocation7 + $0x2a8] sm:$0xff]
    %v3351 = vld [vmem:[#allocation7 + $0x2b0] sm:$0xff]
    %v3352 = vld [vmem:[#allocation7 + $0x2b8] sm:$0xff]
    %v3353 = vld [vmem:[#allocation7 + $0x2c0] sm:$0xff]
    %v3354 = vld [vmem:[#allocation7 + $0x2c8] sm:$0xff]
    %v3355 = vld [vmem:[#allocation7 + $0x2d0] sm:$0xff]
    %v3356 = vld [vmem:[#allocation7 + $0x2d8] sm:$0xff]
    %v3357 = vld [vmem:[#allocation7 + $0x2e0] sm:$0xff]
    %v3358 = vld [vmem:[#allocation7 + $0x2e8] sm:$0xff]
    %v3359 = vld [vmem:[#allocation7 + $0x2f0] sm:$0xff]
    %v3360 = vld [vmem:[#allocation7 + $0x2f8] sm:$0xff]
    %v3361 = vld [vmem:[#allocation7 + $0x300] sm:$0xff]
    %v3362 = vld [vmem:[#allocation7 + $0x308] sm:$0xff]
    %v3363 = vld [vmem:[#allocation7 + $0x310] sm:$0xff]
    %v3364 = vld [vmem:[#allocation7 + $0x318] sm:$0xff]
    %v3365 = vld [vmem:[#allocation7 + $0x320] sm:$0xff]
    %v3366 = vld [vmem:[#allocation7 + $0x328] sm:$0xff]
    %v3367 = vld [vmem:[#allocation7 + $0x330] sm:$0xff]
    %v3368 = vld [vmem:[#allocation7 + $0x338] sm:$0xff]
    %v3369 = vld [vmem:[#allocation7 + $0x340] sm:$0xff]
    %v3370 = vld [vmem:[#allocation7 + $0x348] sm:$0xff]
    %v3371 = vld [vmem:[#allocation7 + $0x350] sm:$0xff]
    %v3372 = vld [vmem:[#allocation7 + $0x358] sm:$0xff]
    %v3373 = vld [vmem:[#allocation7 + $0x360] sm:$0xff]
    %v3374 = vld [vmem:[#allocation7 + $0x368] sm:$0xff]
    %v3375 = vld [vmem:[#allocation7 + $0x370] sm:$0xff]
    %v3376 = vld [vmem:[#allocation7 + $0x378] sm:$0xff]
    %v3377 = vld [vmem:[#allocation7 + $0x380] sm:$0xff]
    %v3378 = vld [vmem:[#allocation7 + $0x388] sm:$0xff]
    %v3379 = vld [vmem:[#allocation7 + $0x390] sm:$0xff]
    %v3380 = vld [vmem:[#allocation7 + $0x398] sm:$0xff]
    %v3381 = vld [vmem:[#allocation7 + $0x3a0] sm:$0xff]
    %v3382 = vld [vmem:[#allocation7 + $0x3a8] sm:$0xff]
    %v3383 = vld [vmem:[#allocation7 + $0x3b0] sm:$0xff]
    %v3384 = vld [vmem:[#allocation7 + $0x3b8] sm:$0xff]
    %v3385 = vld [vmem:[#allocation7 + $0x3c0] sm:$0xff]
    %v3386 = vld [vmem:[#allocation7 + $0x3c8] sm:$0xff]
    %v3387 = vld [vmem:[#allocation7 + $0x3d0] sm:$0xff]
    %v3388 = vld [vmem:[#allocation7 + $0x3d8] sm:$0xff]
    %v3389 = vld [vmem:[#allocation7 + $0x3e0] sm:$0xff]
    %v3390 = vld [vmem:[#allocation7 + $0x3e8] sm:$0xff]
    %v3391 = vld [vmem:[#allocation7 + $0x3f0] sm:$0xff]
    %v3392 = vld [vmem:[#allocation7 + $0x3f8] sm:$0xff]
    %v3393 = vld [vmem:[#allocation7 + $0x400] sm:$0xff]
    %v3394 = vld [vmem:[#allocation7 + $0x408] sm:$0xff]
    %v3395 = vld [vmem:[#allocation7 + $0x410] sm:$0xff]
    %v3396 = vld [vmem:[#allocation7 + $0x418] sm:$0xff]
    %v3397 = vld [vmem:[#allocation7 + $0x420] sm:$0xff]
    %v3398 = vld [vmem:[#allocation7 + $0x428] sm:$0xff]
    %v3399 = vld [vmem:[#allocation7 + $0x430] sm:$0xff]
    %v3400 = vld [vmem:[#allocation7 + $0x438] sm:$0xff]
    %v3401 = vld [vmem:[#allocation7 + $0x440] sm:$0xff]
    %v3402 = vld [vmem:[#allocation7 + $0x448] sm:$0xff]
    %v3403 = vld [vmem:[#allocation7 + $0x450] sm:$0xff]
    %v3404 = vld [vmem:[#allocation7 + $0x458] sm:$0xff]
    %v3405 = vld [vmem:[#allocation7 + $0x460] sm:$0xff]
    %v3406 = vld [vmem:[#allocation7 + $0x468] sm:$0xff]
    %v3407 = vld [vmem:[#allocation7 + $0x470] sm:$0xff]
    %v3408 = vld [vmem:[#allocation7 + $0x478] sm:$0xff]
    %v3409 = vld [vmem:[#allocation7 + $0x480] sm:$0xff]
    %v3410 = vld [vmem:[#allocation7 + $0x488] sm:$0xff]
    %v3411 = vld [vmem:[#allocation7 + $0x490] sm:$0xff]
    %v3412 = vld [vmem:[#allocation7 + $0x498] sm:$0xff]
    %v3413 = vld [vmem:[#allocation7 + $0x4a0] sm:$0xff]
    %v3414 = vld [vmem:[#allocation7 + $0x4a8] sm:$0xff]
    %v3415 = vld [vmem:[#allocation7 + $0x4b0] sm:$0xff]
    %v3416 = vld [vmem:[#allocation7 + $0x4b8] sm:$0xff]
    %v3417 = vld [vmem:[#allocation7 + $0x4c0] sm:$0xff]
    %v3418 = vld [vmem:[#allocation7 + $0x4c8] sm:$0xff]
    %v3419 = vld [vmem:[#allocation7 + $0x4d0] sm:$0xff]
    %v3420 = vld [vmem:[#allocation7 + $0x4d8] sm:$0xff]
    %v3421 = vld [vmem:[#allocation7 + $0x4e0] sm:$0xff]
    %v3422 = vld [vmem:[#allocation7 + $0x4e8] sm:$0xff]
    %v3423 = vld [vmem:[#allocation7 + $0x4f0] sm:$0xff]
    %v3424 = vld [vmem:[#allocation7 + $0x4f8] sm:$0xff]
    %v3425 = vld [vmem:[#allocation7 + $0x500] sm:$0xff]
    %v3426 = vld [vmem:[#allocation7 + $0x508] sm:$0xff]
    %v3427 = vld [vmem:[#allocation7 + $0x510] sm:$0xff]
    %v3428 = vld [vmem:[#allocation7 + $0x518] sm:$0xff]
    %v3429 = vld [vmem:[#allocation7 + $0x520] sm:$0xff]
    %v3430 = vld [vmem:[#allocation7 + $0x528] sm:$0xff]
    %v3431 = vld [vmem:[#allocation7 + $0x530] sm:$0xff]
    %v3432 = vld [vmem:[#allocation7 + $0x538] sm:$0xff]
    %v3433 = vld [vmem:[#allocation7 + $0x540] sm:$0xff]
    %v3434 = vld [vmem:[#allocation7 + $0x548] sm:$0xff]
    %v3435 = vld [vmem:[#allocation7 + $0x550] sm:$0xff]
    %v3436 = vld [vmem:[#allocation7 + $0x558] sm:$0xff]
    %v3437 = vld [vmem:[#allocation7 + $0x560] sm:$0xff]
    %v3438 = vld [vmem:[#allocation7 + $0x568] sm:$0xff]
    %v3439 = vld [vmem:[#allocation7 + $0x570] sm:$0xff]
    %v3440 = vld [vmem:[#allocation7 + $0x578] sm:$0xff]
    %v3441 = vld [vmem:[#allocation7 + $0x580] sm:$0xff]
    %v3442 = vld [vmem:[#allocation7 + $0x588] sm:$0xff]
    %v3443 = vld [vmem:[#allocation7 + $0x590] sm:$0xff]
    %v3444 = vld [vmem:[#allocation7 + $0x598] sm:$0xff]
    %v3445 = vld [vmem:[#allocation7 + $0x5a0] sm:$0xff]
    %v3446 = vld [vmem:[#allocation7 + $0x5a8] sm:$0xff]
    %v3447 = vld [vmem:[#allocation7 + $0x5b0] sm:$0xff]
    %v3448 = vld [vmem:[#allocation7 + $0x5b8] sm:$0xff]
    %v3449 = vld [vmem:[#allocation7 + $0x5c0] sm:$0xff]
    %v3450 = vld [vmem:[#allocation7 + $0x5c8] sm:$0xff]
    %v3451 = vld [vmem:[#allocation7 + $0x5d0] sm:$0xff]
    %v3452 = vld [vmem:[#allocation7 + $0x5d8] sm:$0xff]
    %v3453 = vld [vmem:[#allocation7 + $0x5e0] sm:$0xff]
    %v3454 = vld [vmem:[#allocation7 + $0x5e8] sm:$0xff]
    %v3455 = vld [vmem:[#allocation7 + $0x5f0] sm:$0xff]
    %v3456 = vld [vmem:[#allocation7 + $0x5f8] sm:$0xff]
    %v3457 = vld [vmem:[#allocation7 + $0x600] sm:$0xff]
    %v3458 = vld [vmem:[#allocation7 + $0x608] sm:$0xff]
    %v3459 = vld [vmem:[#allocation7 + $0x610] sm:$0xff]
    %v3460 = vld [vmem:[#allocation7 + $0x618] sm:$0xff]
    %v3461 = vld [vmem:[#allocation7 + $0x620] sm:$0xff]
    %v3462 = vld [vmem:[#allocation7 + $0x628] sm:$0xff]
    %v3463 = vld [vmem:[#allocation7 + $0x630] sm:$0xff]
    %v3464 = vld [vmem:[#allocation7 + $0x638] sm:$0xff]
    %v3465 = vld [vmem:[#allocation7 + $0x640] sm:$0xff]
    %v3466 = vld [vmem:[#allocation7 + $0x648] sm:$0xff]
    %v3467 = vld [vmem:[#allocation7 + $0x650] sm:$0xff]
    %v3468 = vld [vmem:[#allocation7 + $0x658] sm:$0xff]
    %v3469 = vld [vmem:[#allocation7 + $0x660] sm:$0xff]
    %v3470 = vld [vmem:[#allocation7 + $0x668] sm:$0xff]
    %v3471 = vld [vmem:[#allocation7 + $0x670] sm:$0xff]
    %v3472 = vld [vmem:[#allocation7 + $0x678] sm:$0xff]
    %v3473 = vld [vmem:[#allocation7 + $0x680] sm:$0xff]
    %v3474 = vld [vmem:[#allocation7 + $0x688] sm:$0xff]
    %v3475 = vld [vmem:[#allocation7 + $0x690] sm:$0xff]
    %v3476 = vld [vmem:[#allocation7 + $0x698] sm:$0xff]
    %v3477 = vld [vmem:[#allocation7 + $0x6a0] sm:$0xff]
    %v3478 = vld [vmem:[#allocation7 + $0x6a8] sm:$0xff]
    %v3479 = vld [vmem:[#allocation7 + $0x6b0] sm:$0xff]
    %v3480 = vld [vmem:[#allocation7 + $0x6b8] sm:$0xff]
    %v3481 = vld [vmem:[#allocation7 + $0x6c0] sm:$0xff]
    %v3482 = vld [vmem:[#allocation7 + $0x6c8] sm:$0xff]
    %v3483 = vld [vmem:[#allocation7 + $0x6d0] sm:$0xff]
    %v3484 = vld [vmem:[#allocation7 + $0x6d8] sm:$0xff]
    %v3485 = vld [vmem:[#allocation7 + $0x6e0] sm:$0xff]
    %v3486 = vld [vmem:[#allocation7 + $0x6e8] sm:$0xff]
    %v3487 = vld [vmem:[#allocation7 + $0x6f0] sm:$0xff]
    %v3488 = vld [vmem:[#allocation7 + $0x6f8] sm:$0xff]
    %v3489 = vld [vmem:[#allocation7 + $0x700] sm:$0xff]
    %v3490 = vld [vmem:[#allocation7 + $0x708] sm:$0xff]
    %v3491 = vld [vmem:[#allocation7 + $0x710] sm:$0xff]
    %v3492 = vld [vmem:[#allocation7 + $0x718] sm:$0xff]
    %v3493 = vld [vmem:[#allocation7 + $0x720] sm:$0xff]
    %v3494 = vld [vmem:[#allocation7 + $0x728] sm:$0xff]
    %v3495 = vld [vmem:[#allocation7 + $0x730] sm:$0xff]
    %v3496 = vld [vmem:[#allocation7 + $0x738] sm:$0xff]
    %v3497 = vld [vmem:[#allocation7 + $0x740] sm:$0xff]
    %v3498 = vld [vmem:[#allocation7 + $0x748] sm:$0xff]
    %v3499 = vld [vmem:[#allocation7 + $0x750] sm:$0xff]
    %v3500 = vld [vmem:[#allocation7 + $0x758] sm:$0xff]
    %v3501 = vld [vmem:[#allocation7 + $0x760] sm:$0xff]
    %v3502 = vld [vmem:[#allocation7 + $0x768] sm:$0xff]
    %v3503 = vld [vmem:[#allocation7 + $0x770] sm:$0xff]
    %v3504 = vld [vmem:[#allocation7 + $0x778] sm:$0xff]
    %v3505 = vld [vmem:[#allocation7 + $0x780] sm:$0xff]
    %v3506 = vld [vmem:[#allocation7 + $0x788] sm:$0xff]
    %v3507 = vld [vmem:[#allocation7 + $0x790] sm:$0xff]
    %v3508 = vld [vmem:[#allocation7 + $0x798] sm:$0xff]
    %v3509 = vld [vmem:[#allocation7 + $0x7a0] sm:$0xff]
    %v3510 = vld [vmem:[#allocation7 + $0x7a8] sm:$0xff]
    %v3511 = vld [vmem:[#allocation7 + $0x7b0] sm:$0xff]
    %v3512 = vld [vmem:[#allocation7 + $0x7b8] sm:$0xff]
    %v3513 = vld [vmem:[#allocation7 + $0x7c0] sm:$0xff]
    %v3514 = vld [vmem:[#allocation7 + $0x7c8] sm:$0xff]
    %v3515 = vld [vmem:[#allocation7 + $0x7d0] sm:$0xff]
    %v3516 = vld [vmem:[#allocation7 + $0x7d8] sm:$0xff]
    %v3517 = vld [vmem:[#allocation7 + $0x7e0] sm:$0xff]
    %v3518 = vld [vmem:[#allocation7 + $0x7e8] sm:$0xff]
    %v3519 = vld [vmem:[#allocation7 + $0x7f0] sm:$0xff]
    %v3520 = vld [vmem:[#allocation7 + $0x7f8] sm:$0xff]
    %v3521 = vld [vmem:[%s12] sm:$0xff]
    %v3523 = vlaneseq
    %v3524 = vshrl.u32 %v3523, 7
    %v3525 = vsub.s32 0, %v3524
    %v3526 = vrot.slane %v3521, %v3525
    %v3527 = vlaneseq
    %v3528 = vshrl.u32 %v3527, 7
    %v3529 = vsub.s32 1, %v3528
    %v3530 = vrot.slane %v3521, %v3529
    %v3531 = vlaneseq
    %v3532 = vshrl.u32 %v3531, 7
    %v3533 = vsub.s32 2, %v3532
    %v3534 = vrot.slane %v3521, %v3533
    %v3535 = vlaneseq
    %v3536 = vshrl.u32 %v3535, 7
    %v3537 = vsub.s32 3, %v3536
    %v3538 = vrot.slane %v3521, %v3537
    %v3539 = vlaneseq
    %v3540 = vshrl.u32 %v3539, 7
    %v3541 = vsub.s32 4, %v3540
    %v3542 = vrot.slane %v3521, %v3541
    %v3543 = vlaneseq
    %v3544 = vshrl.u32 %v3543, 7
    %v3545 = vsub.s32 5, %v3544
    %v3546 = vrot.slane %v3521, %v3545
    %v3547 = vlaneseq
    %v3548 = vshrl.u32 %v3547, 7
    %v3549 = vsub.s32 6, %v3548
    %v3550 = vrot.slane %v3521, %v3549
    %v3551 = vlaneseq
    %v3552 = vshrl.u32 %v3551, 7
    %v3553 = vsub.s32 7, %v3552
    %v3554 = vrot.slane %v3521, %v3553
    %v3819 = vunpack.c.l.b16 %v3265
    %v3820 = vunpack.c.h.b16 %v3265
    %v3821 = vunpack.c.l.b16 %v3266
    %v3822 = vunpack.c.h.b16 %v3266
    %v3823 = vunpack.c.l.b16 %v3267
    %v3824 = vunpack.c.h.b16 %v3267
    %v3825 = vunpack.c.l.b16 %v3268
    %v3826 = vunpack.c.h.b16 %v3268
    %v3827 = vunpack.c.l.b16 %v3269
    %v3828 = vunpack.c.h.b16 %v3269
    %v3829 = vunpack.c.l.b16 %v3270
    %v3830 = vunpack.c.h.b16 %v3270
    %v3831 = vunpack.c.l.b16 %v3271
    %v3832 = vunpack.c.h.b16 %v3271
    %v3833 = vunpack.c.l.b16 %v3272
    %v3834 = vunpack.c.h.b16 %v3272
    %v3835 = vunpack.c.l.b16 %v3273
    %v3836 = vunpack.c.h.b16 %v3273
    %v3837 = vunpack.c.l.b16 %v3274
    %v3838 = vunpack.c.h.b16 %v3274
    %v3839 = vunpack.c.l.b16 %v3275
    %v3840 = vunpack.c.h.b16 %v3275
    %v3841 = vunpack.c.l.b16 %v3276
    %v3842 = vunpack.c.h.b16 %v3276
    %v3843 = vunpack.c.l.b16 %v3277
    %v3844 = vunpack.c.h.b16 %v3277
    %v3845 = vunpack.c.l.b16 %v3278
    %v3846 = vunpack.c.h.b16 %v3278
    %v3847 = vunpack.c.l.b16 %v3279
    %v3848 = vunpack.c.h.b16 %v3279
    %v3849 = vunpack.c.l.b16 %v3280
    %v3850 = vunpack.c.h.b16 %v3280
    %v3851 = vunpack.c.l.b16 %v3281
    %v3852 = vunpack.c.h.b16 %v3281
    %v3853 = vunpack.c.l.b16 %v3282
    %v3854 = vunpack.c.h.b16 %v3282
    %v3855 = vunpack.c.l.b16 %v3283
    %v3856 = vunpack.c.h.b16 %v3283
    %v3857 = vunpack.c.l.b16 %v3284
    %v3858 = vunpack.c.h.b16 %v3284
    %v3859 = vunpack.c.l.b16 %v3285
    %v3860 = vunpack.c.h.b16 %v3285
    %v3861 = vunpack.c.l.b16 %v3286
    %v3862 = vunpack.c.h.b16 %v3286
    %v3863 = vunpack.c.l.b16 %v3287
    %v3864 = vunpack.c.h.b16 %v3287
    %v3865 = vunpack.c.l.b16 %v3288
    %v3866 = vunpack.c.h.b16 %v3288
    %v3867 = vunpack.c.l.b16 %v3289
    %v3868 = vunpack.c.h.b16 %v3289
    %v3869 = vunpack.c.l.b16 %v3290
    %v3870 = vunpack.c.h.b16 %v3290
    %v3871 = vunpack.c.l.b16 %v3291
    %v3872 = vunpack.c.h.b16 %v3291
    %v3873 = vunpack.c.l.b16 %v3292
    %v3874 = vunpack.c.h.b16 %v3292
    %v3875 = vunpack.c.l.b16 %v3293
    %v3876 = vunpack.c.h.b16 %v3293
    %v3877 = vunpack.c.l.b16 %v3294
    %v3878 = vunpack.c.h.b16 %v3294
    %v3879 = vunpack.c.l.b16 %v3295
    %v3880 = vunpack.c.h.b16 %v3295
    %v3881 = vunpack.c.l.b16 %v3296
    %v3882 = vunpack.c.h.b16 %v3296
    %v3883 = vunpack.c.l.b16 %v3297
    %v3884 = vunpack.c.h.b16 %v3297
    %v3885 = vunpack.c.l.b16 %v3298
    %v3886 = vunpack.c.h.b16 %v3298
    %v3887 = vunpack.c.l.b16 %v3299
    %v3888 = vunpack.c.h.b16 %v3299
    %v3889 = vunpack.c.l.b16 %v3300
    %v3890 = vunpack.c.h.b16 %v3300
    %v3891 = vunpack.c.l.b16 %v3301
    %v3892 = vunpack.c.h.b16 %v3301
    %v3893 = vunpack.c.l.b16 %v3302
    %v3894 = vunpack.c.h.b16 %v3302
    %v3895 = vunpack.c.l.b16 %v3303
    %v3896 = vunpack.c.h.b16 %v3303
    %v3897 = vunpack.c.l.b16 %v3304
    %v3898 = vunpack.c.h.b16 %v3304
    %v3899 = vunpack.c.l.b16 %v3305
    %v3900 = vunpack.c.h.b16 %v3305
    %v3901 = vunpack.c.l.b16 %v3306
    %v3902 = vunpack.c.h.b16 %v3306
    %v3903 = vunpack.c.l.b16 %v3307
    %v3904 = vunpack.c.h.b16 %v3307
    %v3905 = vunpack.c.l.b16 %v3308
    %v3906 = vunpack.c.h.b16 %v3308
    %v3907 = vunpack.c.l.b16 %v3309
    %v3908 = vunpack.c.h.b16 %v3309
    %v3909 = vunpack.c.l.b16 %v3310
    %v3910 = vunpack.c.h.b16 %v3310
    %v3911 = vunpack.c.l.b16 %v3311
    %v3912 = vunpack.c.h.b16 %v3311
    %v3913 = vunpack.c.l.b16 %v3312
    %v3914 = vunpack.c.h.b16 %v3312
    %v3915 = vunpack.c.l.b16 %v3313
    %v3916 = vunpack.c.h.b16 %v3313
    %v3917 = vunpack.c.l.b16 %v3314
    %v3918 = vunpack.c.h.b16 %v3314
    %v3919 = vunpack.c.l.b16 %v3315
    %v3920 = vunpack.c.h.b16 %v3315
    %v3921 = vunpack.c.l.b16 %v3316
    %v3922 = vunpack.c.h.b16 %v3316
    %v3923 = vunpack.c.l.b16 %v3317
    %v3924 = vunpack.c.h.b16 %v3317
    %v3925 = vunpack.c.l.b16 %v3318
    %v3926 = vunpack.c.h.b16 %v3318
    %v3927 = vunpack.c.l.b16 %v3319
    %v3928 = vunpack.c.h.b16 %v3319
    %v3929 = vunpack.c.l.b16 %v3320
    %v3930 = vunpack.c.h.b16 %v3320
    %v3931 = vunpack.c.l.b16 %v3321
    %v3932 = vunpack.c.h.b16 %v3321
    %v3933 = vunpack.c.l.b16 %v3322
    %v3934 = vunpack.c.h.b16 %v3322
    %v3935 = vunpack.c.l.b16 %v3323
    %v3936 = vunpack.c.h.b16 %v3323
    %v3937 = vunpack.c.l.b16 %v3324
    %v3938 = vunpack.c.h.b16 %v3324
    %v3939 = vunpack.c.l.b16 %v3325
    %v3940 = vunpack.c.h.b16 %v3325
    %v3941 = vunpack.c.l.b16 %v3326
    %v3942 = vunpack.c.h.b16 %v3326
    %v3943 = vunpack.c.l.b16 %v3327
    %v3944 = vunpack.c.h.b16 %v3327
    %v3945 = vunpack.c.l.b16 %v3328
    %v3946 = vunpack.c.h.b16 %v3328
    %v3947 = vunpack.c.l.b16 %v3329
    %v3948 = vunpack.c.h.b16 %v3329
    %v3949 = vunpack.c.l.b16 %v3330
    %v3950 = vunpack.c.h.b16 %v3330
    %v3951 = vunpack.c.l.b16 %v3331
    %v3952 = vunpack.c.h.b16 %v3331
    %v3953 = vunpack.c.l.b16 %v3332
    %v3954 = vunpack.c.h.b16 %v3332
    %v3955 = vunpack.c.l.b16 %v3333
    %v3956 = vunpack.c.h.b16 %v3333
    %v3957 = vunpack.c.l.b16 %v3334
    %v3958 = vunpack.c.h.b16 %v3334
    %v3959 = vunpack.c.l.b16 %v3335
    %v3960 = vunpack.c.h.b16 %v3335
    %v3961 = vunpack.c.l.b16 %v3336
    %v3962 = vunpack.c.h.b16 %v3336
    %v3963 = vunpack.c.l.b16 %v3337
    %v3964 = vunpack.c.h.b16 %v3337
    %v3965 = vunpack.c.l.b16 %v3338
    %v3966 = vunpack.c.h.b16 %v3338
    %v3967 = vunpack.c.l.b16 %v3339
    %v3968 = vunpack.c.h.b16 %v3339
    %v3969 = vunpack.c.l.b16 %v3340
    %v3970 = vunpack.c.h.b16 %v3340
    %v3971 = vunpack.c.l.b16 %v3341
    %v3972 = vunpack.c.h.b16 %v3341
    %v3973 = vunpack.c.l.b16 %v3342
    %v3974 = vunpack.c.h.b16 %v3342
    %v3975 = vunpack.c.l.b16 %v3343
    %v3976 = vunpack.c.h.b16 %v3343
    %v3977 = vunpack.c.l.b16 %v3344
    %v3978 = vunpack.c.h.b16 %v3344
    %v3979 = vunpack.c.l.b16 %v3345
    %v3980 = vunpack.c.h.b16 %v3345
    %v3981 = vunpack.c.l.b16 %v3346
    %v3982 = vunpack.c.h.b16 %v3346
    %v3983 = vunpack.c.l.b16 %v3347
    %v3984 = vunpack.c.h.b16 %v3347
    %v3985 = vunpack.c.l.b16 %v3348
    %v3986 = vunpack.c.h.b16 %v3348
    %v3987 = vunpack.c.l.b16 %v3349
    %v3988 = vunpack.c.h.b16 %v3349
    %v3989 = vunpack.c.l.b16 %v3350
    %v3990 = vunpack.c.h.b16 %v3350
    %v3991 = vunpack.c.l.b16 %v3351
    %v3992 = vunpack.c.h.b16 %v3351
    %v3993 = vunpack.c.l.b16 %v3352
    %v3994 = vunpack.c.h.b16 %v3352
    %v3995 = vunpack.c.l.b16 %v3353
    %v3996 = vunpack.c.h.b16 %v3353
    %v3997 = vunpack.c.l.b16 %v3354
    %v3998 = vunpack.c.h.b16 %v3354
    %v3999 = vunpack.c.l.b16 %v3355
    %v4000 = vunpack.c.h.b16 %v3355
    %v4001 = vunpack.c.l.b16 %v3356
    %v4002 = vunpack.c.h.b16 %v3356
    %v4003 = vunpack.c.l.b16 %v3357
    %v4004 = vunpack.c.h.b16 %v3357
    %v4005 = vunpack.c.l.b16 %v3358
    %v4006 = vunpack.c.h.b16 %v3358
    %v4007 = vunpack.c.l.b16 %v3359
    %v4008 = vunpack.c.h.b16 %v3359
    %v4009 = vunpack.c.l.b16 %v3360
    %v4010 = vunpack.c.h.b16 %v3360
    %v4011 = vunpack.c.l.b16 %v3361
    %v4012 = vunpack.c.h.b16 %v3361
    %v4013 = vunpack.c.l.b16 %v3362
    %v4014 = vunpack.c.h.b16 %v3362
    %v4015 = vunpack.c.l.b16 %v3363
    %v4016 = vunpack.c.h.b16 %v3363
    %v4017 = vunpack.c.l.b16 %v3364
    %v4018 = vunpack.c.h.b16 %v3364
    %v4019 = vunpack.c.l.b16 %v3365
    %v4020 = vunpack.c.h.b16 %v3365
    %v4021 = vunpack.c.l.b16 %v3366
    %v4022 = vunpack.c.h.b16 %v3366
    %v4023 = vunpack.c.l.b16 %v3367
    %v4024 = vunpack.c.h.b16 %v3367
    %v4025 = vunpack.c.l.b16 %v3368
    %v4026 = vunpack.c.h.b16 %v3368
    %v4027 = vunpack.c.l.b16 %v3369
    %v4028 = vunpack.c.h.b16 %v3369
    %v4029 = vunpack.c.l.b16 %v3370
    %v4030 = vunpack.c.h.b16 %v3370
    %v4031 = vunpack.c.l.b16 %v3371
    %v4032 = vunpack.c.h.b16 %v3371
    %v4033 = vunpack.c.l.b16 %v3372
    %v4034 = vunpack.c.h.b16 %v3372
    %v4035 = vunpack.c.l.b16 %v3373
    %v4036 = vunpack.c.h.b16 %v3373
    %v4037 = vunpack.c.l.b16 %v3374
    %v4038 = vunpack.c.h.b16 %v3374
    %v4039 = vunpack.c.l.b16 %v3375
    %v4040 = vunpack.c.h.b16 %v3375
    %v4041 = vunpack.c.l.b16 %v3376
    %v4042 = vunpack.c.h.b16 %v3376
    %v4043 = vunpack.c.l.b16 %v3377
    %v4044 = vunpack.c.h.b16 %v3377
    %v4045 = vunpack.c.l.b16 %v3378
    %v4046 = vunpack.c.h.b16 %v3378
    %v4047 = vunpack.c.l.b16 %v3379
    %v4048 = vunpack.c.h.b16 %v3379
    %v4049 = vunpack.c.l.b16 %v3380
    %v4050 = vunpack.c.h.b16 %v3380
    %v4051 = vunpack.c.l.b16 %v3381
    %v4052 = vunpack.c.h.b16 %v3381
    %v4053 = vunpack.c.l.b16 %v3382
    %v4054 = vunpack.c.h.b16 %v3382
    %v4055 = vunpack.c.l.b16 %v3383
    %v4056 = vunpack.c.h.b16 %v3383
    %v4057 = vunpack.c.l.b16 %v3384
    %v4058 = vunpack.c.h.b16 %v3384
    %v4059 = vunpack.c.l.b16 %v3385
    %v4060 = vunpack.c.h.b16 %v3385
    %v4061 = vunpack.c.l.b16 %v3386
    %v4062 = vunpack.c.h.b16 %v3386
    %v4063 = vunpack.c.l.b16 %v3387
    %v4064 = vunpack.c.h.b16 %v3387
    %v4065 = vunpack.c.l.b16 %v3388
    %v4066 = vunpack.c.h.b16 %v3388
    %v4067 = vunpack.c.l.b16 %v3389
    %v4068 = vunpack.c.h.b16 %v3389
    %v4069 = vunpack.c.l.b16 %v3390
    %v4070 = vunpack.c.h.b16 %v3390
    %v4071 = vunpack.c.l.b16 %v3391
    %v4072 = vunpack.c.h.b16 %v3391
    %v4073 = vunpack.c.l.b16 %v3392
    %v4074 = vunpack.c.h.b16 %v3392
    %v4075 = vunpack.c.l.b16 %v3393
    %v4076 = vunpack.c.h.b16 %v3393
    %v4077 = vunpack.c.l.b16 %v3394
    %v4078 = vunpack.c.h.b16 %v3394
    %v4079 = vunpack.c.l.b16 %v3395
    %v4080 = vunpack.c.h.b16 %v3395
    %v4081 = vunpack.c.l.b16 %v3396
    %v4082 = vunpack.c.h.b16 %v3396
    %v4083 = vunpack.c.l.b16 %v3397
    %v4084 = vunpack.c.h.b16 %v3397
    %v4085 = vunpack.c.l.b16 %v3398
    %v4086 = vunpack.c.h.b16 %v3398
    %v4087 = vunpack.c.l.b16 %v3399
    %v4088 = vunpack.c.h.b16 %v3399
    %v4089 = vunpack.c.l.b16 %v3400
    %v4090 = vunpack.c.h.b16 %v3400
    %v4091 = vunpack.c.l.b16 %v3401
    %v4092 = vunpack.c.h.b16 %v3401
    %v4093 = vunpack.c.l.b16 %v3402
    %v4094 = vunpack.c.h.b16 %v3402
    %v4095 = vunpack.c.l.b16 %v3403
    %v4096 = vunpack.c.h.b16 %v3403
    %v4097 = vunpack.c.l.b16 %v3404
    %v4098 = vunpack.c.h.b16 %v3404
    %v4099 = vunpack.c.l.b16 %v3405
    %v4100 = vunpack.c.h.b16 %v3405
    %v4101 = vunpack.c.l.b16 %v3406
    %v4102 = vunpack.c.h.b16 %v3406
    %v4103 = vunpack.c.l.b16 %v3407
    %v4104 = vunpack.c.h.b16 %v3407
    %v4105 = vunpack.c.l.b16 %v3408
    %v4106 = vunpack.c.h.b16 %v3408
    %v4107 = vunpack.c.l.b16 %v3409
    %v4108 = vunpack.c.h.b16 %v3409
    %v4109 = vunpack.c.l.b16 %v3410
    %v4110 = vunpack.c.h.b16 %v3410
    %v4111 = vunpack.c.l.b16 %v3411
    %v4112 = vunpack.c.h.b16 %v3411
    %v4113 = vunpack.c.l.b16 %v3412
    %v4114 = vunpack.c.h.b16 %v3412
    %v4115 = vunpack.c.l.b16 %v3413
    %v4116 = vunpack.c.h.b16 %v3413
    %v4117 = vunpack.c.l.b16 %v3414
    %v4118 = vunpack.c.h.b16 %v3414
    %v4119 = vunpack.c.l.b16 %v3415
    %v4120 = vunpack.c.h.b16 %v3415
    %v4121 = vunpack.c.l.b16 %v3416
    %v4122 = vunpack.c.h.b16 %v3416
    %v4123 = vunpack.c.l.b16 %v3417
    %v4124 = vunpack.c.h.b16 %v3417
    %v4125 = vunpack.c.l.b16 %v3418
    %v4126 = vunpack.c.h.b16 %v3418
    %v4127 = vunpack.c.l.b16 %v3419
    %v4128 = vunpack.c.h.b16 %v3419
    %v4129 = vunpack.c.l.b16 %v3420
    %v4130 = vunpack.c.h.b16 %v3420
    %v4131 = vunpack.c.l.b16 %v3421
    %v4132 = vunpack.c.h.b16 %v3421
    %v4133 = vunpack.c.l.b16 %v3422
    %v4134 = vunpack.c.h.b16 %v3422
    %v4135 = vunpack.c.l.b16 %v3423
    %v4136 = vunpack.c.h.b16 %v3423
    %v4137 = vunpack.c.l.b16 %v3424
    %v4138 = vunpack.c.h.b16 %v3424
    %v4139 = vunpack.c.l.b16 %v3425
    %v4140 = vunpack.c.h.b16 %v3425
    %v4141 = vunpack.c.l.b16 %v3426
    %v4142 = vunpack.c.h.b16 %v3426
    %v4143 = vunpack.c.l.b16 %v3427
    %v4144 = vunpack.c.h.b16 %v3427
    %v4145 = vunpack.c.l.b16 %v3428
    %v4146 = vunpack.c.h.b16 %v3428
    %v4147 = vunpack.c.l.b16 %v3429
    %v4148 = vunpack.c.h.b16 %v3429
    %v4149 = vunpack.c.l.b16 %v3430
    %v4150 = vunpack.c.h.b16 %v3430
    %v4151 = vunpack.c.l.b16 %v3431
    %v4152 = vunpack.c.h.b16 %v3431
    %v4153 = vunpack.c.l.b16 %v3432
    %v4154 = vunpack.c.h.b16 %v3432
    %v4155 = vunpack.c.l.b16 %v3433
    %v4156 = vunpack.c.h.b16 %v3433
    %v4157 = vunpack.c.l.b16 %v3434
    %v4158 = vunpack.c.h.b16 %v3434
    %v4159 = vunpack.c.l.b16 %v3435
    %v4160 = vunpack.c.h.b16 %v3435
    %v4161 = vunpack.c.l.b16 %v3436
    %v4162 = vunpack.c.h.b16 %v3436
    %v4163 = vunpack.c.l.b16 %v3437
    %v4164 = vunpack.c.h.b16 %v3437
    %v4165 = vunpack.c.l.b16 %v3438
    %v4166 = vunpack.c.h.b16 %v3438
    %v4167 = vunpack.c.l.b16 %v3439
    %v4168 = vunpack.c.h.b16 %v3439
    %v4169 = vunpack.c.l.b16 %v3440
    %v4170 = vunpack.c.h.b16 %v3440
    %v4171 = vunpack.c.l.b16 %v3441
    %v4172 = vunpack.c.h.b16 %v3441
    %v4173 = vunpack.c.l.b16 %v3442
    %v4174 = vunpack.c.h.b16 %v3442
    %v4175 = vunpack.c.l.b16 %v3443
    %v4176 = vunpack.c.h.b16 %v3443
    %v4177 = vunpack.c.l.b16 %v3444
    %v4178 = vunpack.c.h.b16 %v3444
    %v4179 = vunpack.c.l.b16 %v3445
    %v4180 = vunpack.c.h.b16 %v3445
    %v4181 = vunpack.c.l.b16 %v3446
    %v4182 = vunpack.c.h.b16 %v3446
    %v4183 = vunpack.c.l.b16 %v3447
    %v4184 = vunpack.c.h.b16 %v3447
    %v4185 = vunpack.c.l.b16 %v3448
    %v4186 = vunpack.c.h.b16 %v3448
    %v4187 = vunpack.c.l.b16 %v3449
    %v4188 = vunpack.c.h.b16 %v3449
    %v4189 = vunpack.c.l.b16 %v3450
    %v4190 = vunpack.c.h.b16 %v3450
    %v4191 = vunpack.c.l.b16 %v3451
    %v4192 = vunpack.c.h.b16 %v3451
    %v4193 = vunpack.c.l.b16 %v3452
    %v4194 = vunpack.c.h.b16 %v3452
    %v4195 = vunpack.c.l.b16 %v3453
    %v4196 = vunpack.c.h.b16 %v3453
    %v4197 = vunpack.c.l.b16 %v3454
    %v4198 = vunpack.c.h.b16 %v3454
    %v4199 = vunpack.c.l.b16 %v3455
    %v4200 = vunpack.c.h.b16 %v3455
    %v4201 = vunpack.c.l.b16 %v3456
    %v4202 = vunpack.c.h.b16 %v3456
    %v4203 = vunpack.c.l.b16 %v3457
    %v4204 = vunpack.c.h.b16 %v3457
    %v4205 = vunpack.c.l.b16 %v3458
    %v4206 = vunpack.c.h.b16 %v3458
    %v4207 = vunpack.c.l.b16 %v3459
    %v4208 = vunpack.c.h.b16 %v3459
    %v4209 = vunpack.c.l.b16 %v3460
    %v4210 = vunpack.c.h.b16 %v3460
    %v4211 = vunpack.c.l.b16 %v3461
    %v4212 = vunpack.c.h.b16 %v3461
    %v4213 = vunpack.c.l.b16 %v3462
    %v4214 = vunpack.c.h.b16 %v3462
    %v4215 = vunpack.c.l.b16 %v3463
    %v4216 = vunpack.c.h.b16 %v3463
    %v4217 = vunpack.c.l.b16 %v3464
    %v4218 = vunpack.c.h.b16 %v3464
    %v4219 = vunpack.c.l.b16 %v3465
    %v4220 = vunpack.c.h.b16 %v3465
    %v4221 = vunpack.c.l.b16 %v3466
    %v4222 = vunpack.c.h.b16 %v3466
    %v4223 = vunpack.c.l.b16 %v3467
    %v4224 = vunpack.c.h.b16 %v3467
    %v4225 = vunpack.c.l.b16 %v3468
    %v4226 = vunpack.c.h.b16 %v3468
    %v4227 = vunpack.c.l.b16 %v3469
    %v4228 = vunpack.c.h.b16 %v3469
    %v4229 = vunpack.c.l.b16 %v3470
    %v4230 = vunpack.c.h.b16 %v3470
    %v4231 = vunpack.c.l.b16 %v3471
    %v4232 = vunpack.c.h.b16 %v3471
    %v4233 = vunpack.c.l.b16 %v3472
    %v4234 = vunpack.c.h.b16 %v3472
    %v4235 = vunpack.c.l.b16 %v3473
    %v4236 = vunpack.c.h.b16 %v3473
    %v4237 = vunpack.c.l.b16 %v3474
    %v4238 = vunpack.c.h.b16 %v3474
    %v4239 = vunpack.c.l.b16 %v3475
    %v4240 = vunpack.c.h.b16 %v3475
    %v4241 = vunpack.c.l.b16 %v3476
    %v4242 = vunpack.c.h.b16 %v3476
    %v4243 = vunpack.c.l.b16 %v3477
    %v4244 = vunpack.c.h.b16 %v3477
    %v4245 = vunpack.c.l.b16 %v3478
    %v4246 = vunpack.c.h.b16 %v3478
    %v4247 = vunpack.c.l.b16 %v3479
    %v4248 = vunpack.c.h.b16 %v3479
    %v4249 = vunpack.c.l.b16 %v3480
    %v4250 = vunpack.c.h.b16 %v3480
    %v4251 = vunpack.c.l.b16 %v3481
    %v4252 = vunpack.c.h.b16 %v3481
    %v4253 = vunpack.c.l.b16 %v3482
    %v4254 = vunpack.c.h.b16 %v3482
    %v4255 = vunpack.c.l.b16 %v3483
    %v4256 = vunpack.c.h.b16 %v3483
    %v4257 = vunpack.c.l.b16 %v3484
    %v4258 = vunpack.c.h.b16 %v3484
    %v4259 = vunpack.c.l.b16 %v3485
    %v4260 = vunpack.c.h.b16 %v3485
    %v4261 = vunpack.c.l.b16 %v3486
    %v4262 = vunpack.c.h.b16 %v3486
    %v4263 = vunpack.c.l.b16 %v3487
    %v4264 = vunpack.c.h.b16 %v3487
    %v4265 = vunpack.c.l.b16 %v3488
    %v4266 = vunpack.c.h.b16 %v3488
    %v4267 = vunpack.c.l.b16 %v3489
    %v4268 = vunpack.c.h.b16 %v3489
    %v4269 = vunpack.c.l.b16 %v3490
    %v4270 = vunpack.c.h.b16 %v3490
    %v4271 = vunpack.c.l.b16 %v3491
    %v4272 = vunpack.c.h.b16 %v3491
    %v4273 = vunpack.c.l.b16 %v3492
    %v4274 = vunpack.c.h.b16 %v3492
    %v4275 = vunpack.c.l.b16 %v3493
    %v4276 = vunpack.c.h.b16 %v3493
    %v4277 = vunpack.c.l.b16 %v3494
    %v4278 = vunpack.c.h.b16 %v3494
    %v4279 = vunpack.c.l.b16 %v3495
    %v4280 = vunpack.c.h.b16 %v3495
    %v4281 = vunpack.c.l.b16 %v3496
    %v4282 = vunpack.c.h.b16 %v3496
    %v4283 = vunpack.c.l.b16 %v3497
    %v4284 = vunpack.c.h.b16 %v3497
    %v4285 = vunpack.c.l.b16 %v3498
    %v4286 = vunpack.c.h.b16 %v3498
    %v4287 = vunpack.c.l.b16 %v3499
    %v4288 = vunpack.c.h.b16 %v3499
    %v4289 = vunpack.c.l.b16 %v3500
    %v4290 = vunpack.c.h.b16 %v3500
    %v4291 = vunpack.c.l.b16 %v3501
    %v4292 = vunpack.c.h.b16 %v3501
    %v4293 = vunpack.c.l.b16 %v3502
    %v4294 = vunpack.c.h.b16 %v3502
    %v4295 = vunpack.c.l.b16 %v3503
    %v4296 = vunpack.c.h.b16 %v3503
    %v4297 = vunpack.c.l.b16 %v3504
    %v4298 = vunpack.c.h.b16 %v3504
    %v4299 = vunpack.c.l.b16 %v3505
    %v4300 = vunpack.c.h.b16 %v3505
    %v4301 = vunpack.c.l.b16 %v3506
    %v4302 = vunpack.c.h.b16 %v3506
    %v4303 = vunpack.c.l.b16 %v3507
    %v4304 = vunpack.c.h.b16 %v3507
    %v4305 = vunpack.c.l.b16 %v3508
    %v4306 = vunpack.c.h.b16 %v3508
    %v4307 = vunpack.c.l.b16 %v3509
    %v4308 = vunpack.c.h.b16 %v3509
    %v4309 = vunpack.c.l.b16 %v3510
    %v4310 = vunpack.c.h.b16 %v3510
    %v4311 = vunpack.c.l.b16 %v3511
    %v4312 = vunpack.c.h.b16 %v3511
    %v4313 = vunpack.c.l.b16 %v3512
    %v4314 = vunpack.c.h.b16 %v3512
    %v4315 = vunpack.c.l.b16 %v3513
    %v4316 = vunpack.c.h.b16 %v3513
    %v4317 = vunpack.c.l.b16 %v3514
    %v4318 = vunpack.c.h.b16 %v3514
    %v4319 = vunpack.c.l.b16 %v3515
    %v4320 = vunpack.c.h.b16 %v3515
    %v4321 = vunpack.c.l.b16 %v3516
    %v4322 = vunpack.c.h.b16 %v3516
    %v4323 = vunpack.c.l.b16 %v3517
    %v4324 = vunpack.c.h.b16 %v3517
    %v4325 = vunpack.c.l.b16 %v3518
    %v4326 = vunpack.c.h.b16 %v3518
    %v4327 = vunpack.c.l.b16 %v3519
    %v4328 = vunpack.c.h.b16 %v3519
    %v4329 = vunpack.c.l.b16 %v3520
    %v4330 = vunpack.c.h.b16 %v3520
    %v4331 = vpack.c.b16 %v3827, %v3819
    %v4332 = vpack.c.b16 %v3828, %v3820
    %v4333 = vpack.c.b16 %v3829, %v3821
    %v4334 = vpack.c.b16 %v3830, %v3822
    %v4335 = vpack.c.b16 %v3831, %v3823
    %v4336 = vpack.c.b16 %v3832, %v3824
    %v4337 = vpack.c.b16 %v3833, %v3825
    %v4338 = vpack.c.b16 %v3834, %v3826
    %v4339 = vpack.c.b16 %v3843, %v3835
    %v4340 = vpack.c.b16 %v3844, %v3836
    %v4341 = vpack.c.b16 %v3845, %v3837
    %v4342 = vpack.c.b16 %v3846, %v3838
    %v4343 = vpack.c.b16 %v3847, %v3839
    %v4344 = vpack.c.b16 %v3848, %v3840
    %v4345 = vpack.c.b16 %v3849, %v3841
    %v4346 = vpack.c.b16 %v3850, %v3842
    %v4347 = vpack.c.b16 %v3859, %v3851
    %v4348 = vpack.c.b16 %v3860, %v3852
    %v4349 = vpack.c.b16 %v3861, %v3853
    %v4350 = vpack.c.b16 %v3862, %v3854
    %v4351 = vpack.c.b16 %v3863, %v3855
    %v4352 = vpack.c.b16 %v3864, %v3856
    %v4353 = vpack.c.b16 %v3865, %v3857
    %v4354 = vpack.c.b16 %v3866, %v3858
    %v4355 = vpack.c.b16 %v3875, %v3867
    %v4356 = vpack.c.b16 %v3876, %v3868
    %v4357 = vpack.c.b16 %v3877, %v3869
    %v4358 = vpack.c.b16 %v3878, %v3870
    %v4359 = vpack.c.b16 %v3879, %v3871
    %v4360 = vpack.c.b16 %v3880, %v3872
    %v4361 = vpack.c.b16 %v3881, %v3873
    %v4362 = vpack.c.b16 %v3882, %v3874
    %v4363 = vpack.c.b16 %v3891, %v3883
    %v4364 = vpack.c.b16 %v3892, %v3884
    %v4365 = vpack.c.b16 %v3893, %v3885
    %v4366 = vpack.c.b16 %v3894, %v3886
    %v4367 = vpack.c.b16 %v3895, %v3887
    %v4368 = vpack.c.b16 %v3896, %v3888
    %v4369 = vpack.c.b16 %v3897, %v3889
    %v4370 = vpack.c.b16 %v3898, %v3890
    %v4371 = vpack.c.b16 %v3907, %v3899
    %v4372 = vpack.c.b16 %v3908, %v3900
    %v4373 = vpack.c.b16 %v3909, %v3901
    %v4374 = vpack.c.b16 %v3910, %v3902
    %v4375 = vpack.c.b16 %v3911, %v3903
    %v4376 = vpack.c.b16 %v3912, %v3904
    %v4377 = vpack.c.b16 %v3913, %v3905
    %v4378 = vpack.c.b16 %v3914, %v3906
    %v4379 = vpack.c.b16 %v3923, %v3915
    %v4380 = vpack.c.b16 %v3924, %v3916
    %v4381 = vpack.c.b16 %v3925, %v3917
    %v4382 = vpack.c.b16 %v3926, %v3918
    %v4383 = vpack.c.b16 %v3927, %v3919
    %v4384 = vpack.c.b16 %v3928, %v3920
    %v4385 = vpack.c.b16 %v3929, %v3921
    %v4386 = vpack.c.b16 %v3930, %v3922
    %v4387 = vpack.c.b16 %v3939, %v3931
    %v4388 = vpack.c.b16 %v3940, %v3932
    %v4389 = vpack.c.b16 %v3941, %v3933
    %v4390 = vpack.c.b16 %v3942, %v3934
    %v4391 = vpack.c.b16 %v3943, %v3935
    %v4392 = vpack.c.b16 %v3944, %v3936
    %v4393 = vpack.c.b16 %v3945, %v3937
    %v4394 = vpack.c.b16 %v3946, %v3938
    %v4395 = vpack.c.b16 %v3955, %v3947
    %v4396 = vpack.c.b16 %v3956, %v3948
    %v4397 = vpack.c.b16 %v3957, %v3949
    %v4398 = vpack.c.b16 %v3958, %v3950
    %v4399 = vpack.c.b16 %v3959, %v3951
    %v4400 = vpack.c.b16 %v3960, %v3952
    %v4401 = vpack.c.b16 %v3961, %v3953
    %v4402 = vpack.c.b16 %v3962, %v3954
    %v4403 = vpack.c.b16 %v3971, %v3963
    %v4404 = vpack.c.b16 %v3972, %v3964
    %v4405 = vpack.c.b16 %v3973, %v3965
    %v4406 = vpack.c.b16 %v3974, %v3966
    %v4407 = vpack.c.b16 %v3975, %v3967
    %v4408 = vpack.c.b16 %v3976, %v3968
    %v4409 = vpack.c.b16 %v3977, %v3969
    %v4410 = vpack.c.b16 %v3978, %v3970
    %v4411 = vpack.c.b16 %v3987, %v3979
    %v4412 = vpack.c.b16 %v3988, %v3980
    %v4413 = vpack.c.b16 %v3989, %v3981
    %v4414 = vpack.c.b16 %v3990, %v3982
    %v4415 = vpack.c.b16 %v3991, %v3983
    %v4416 = vpack.c.b16 %v3992, %v3984
    %v4417 = vpack.c.b16 %v3993, %v3985
    %v4418 = vpack.c.b16 %v3994, %v3986
    %v4419 = vpack.c.b16 %v4003, %v3995
    %v4420 = vpack.c.b16 %v4004, %v3996
    %v4421 = vpack.c.b16 %v4005, %v3997
    %v4422 = vpack.c.b16 %v4006, %v3998
    %v4423 = vpack.c.b16 %v4007, %v3999
    %v4424 = vpack.c.b16 %v4008, %v4000
    %v4425 = vpack.c.b16 %v4009, %v4001
    %v4426 = vpack.c.b16 %v4010, %v4002
    %v4427 = vpack.c.b16 %v4019, %v4011
    %v4428 = vpack.c.b16 %v4020, %v4012
    %v4429 = vpack.c.b16 %v4021, %v4013
    %v4430 = vpack.c.b16 %v4022, %v4014
    %v4431 = vpack.c.b16 %v4023, %v4015
    %v4432 = vpack.c.b16 %v4024, %v4016
    %v4433 = vpack.c.b16 %v4025, %v4017
    %v4434 = vpack.c.b16 %v4026, %v4018
    %v4435 = vpack.c.b16 %v4035, %v4027
    %v4436 = vpack.c.b16 %v4036, %v4028
    %v4437 = vpack.c.b16 %v4037, %v4029
    %v4438 = vpack.c.b16 %v4038, %v4030
    %v4439 = vpack.c.b16 %v4039, %v4031
    %v4440 = vpack.c.b16 %v4040, %v4032
    %v4441 = vpack.c.b16 %v4041, %v4033
    %v4442 = vpack.c.b16 %v4042, %v4034
    %v4443 = vpack.c.b16 %v4051, %v4043
    %v4444 = vpack.c.b16 %v4052, %v4044
    %v4445 = vpack.c.b16 %v4053, %v4045
    %v4446 = vpack.c.b16 %v4054, %v4046
    %v4447 = vpack.c.b16 %v4055, %v4047
    %v4448 = vpack.c.b16 %v4056, %v4048
    %v4449 = vpack.c.b16 %v4057, %v4049
    %v4450 = vpack.c.b16 %v4058, %v4050
    %v4451 = vpack.c.b16 %v4067, %v4059
    %v4452 = vpack.c.b16 %v4068, %v4060
    %v4453 = vpack.c.b16 %v4069, %v4061
    %v4454 = vpack.c.b16 %v4070, %v4062
    %v4455 = vpack.c.b16 %v4071, %v4063
    %v4456 = vpack.c.b16 %v4072, %v4064
    %v4457 = vpack.c.b16 %v4073, %v4065
    %v4458 = vpack.c.b16 %v4074, %v4066
    %v4459 = vpack.c.b16 %v4083, %v4075
    %v4460 = vpack.c.b16 %v4084, %v4076
    %v4461 = vpack.c.b16 %v4085, %v4077
    %v4462 = vpack.c.b16 %v4086, %v4078
    %v4463 = vpack.c.b16 %v4087, %v4079
    %v4464 = vpack.c.b16 %v4088, %v4080
    %v4465 = vpack.c.b16 %v4089, %v4081
    %v4466 = vpack.c.b16 %v4090, %v4082
    %v4467 = vpack.c.b16 %v4099, %v4091
    %v4468 = vpack.c.b16 %v4100, %v4092
    %v4469 = vpack.c.b16 %v4101, %v4093
    %v4470 = vpack.c.b16 %v4102, %v4094
    %v4471 = vpack.c.b16 %v4103, %v4095
    %v4472 = vpack.c.b16 %v4104, %v4096
    %v4473 = vpack.c.b16 %v4105, %v4097
    %v4474 = vpack.c.b16 %v4106, %v4098
    %v4475 = vpack.c.b16 %v4115, %v4107
    %v4476 = vpack.c.b16 %v4116, %v4108
    %v4477 = vpack.c.b16 %v4117, %v4109
    %v4478 = vpack.c.b16 %v4118, %v4110
    %v4479 = vpack.c.b16 %v4119, %v4111
    %v4480 = vpack.c.b16 %v4120, %v4112
    %v4481 = vpack.c.b16 %v4121, %v4113
    %v4482 = vpack.c.b16 %v4122, %v4114
    %v4483 = vpack.c.b16 %v4131, %v4123
    %v4484 = vpack.c.b16 %v4132, %v4124
    %v4485 = vpack.c.b16 %v4133, %v4125
    %v4486 = vpack.c.b16 %v4134, %v4126
    %v4487 = vpack.c.b16 %v4135, %v4127
    %v4488 = vpack.c.b16 %v4136, %v4128
    %v4489 = vpack.c.b16 %v4137, %v4129
    %v4490 = vpack.c.b16 %v4138, %v4130
    %v4491 = vpack.c.b16 %v4147, %v4139
    %v4492 = vpack.c.b16 %v4148, %v4140
    %v4493 = vpack.c.b16 %v4149, %v4141
    %v4494 = vpack.c.b16 %v4150, %v4142
    %v4495 = vpack.c.b16 %v4151, %v4143
    %v4496 = vpack.c.b16 %v4152, %v4144
    %v4497 = vpack.c.b16 %v4153, %v4145
    %v4498 = vpack.c.b16 %v4154, %v4146
    %v4499 = vpack.c.b16 %v4163, %v4155
    %v4500 = vpack.c.b16 %v4164, %v4156
    %v4501 = vpack.c.b16 %v4165, %v4157
    %v4502 = vpack.c.b16 %v4166, %v4158
    %v4503 = vpack.c.b16 %v4167, %v4159
    %v4504 = vpack.c.b16 %v4168, %v4160
    %v4505 = vpack.c.b16 %v4169, %v4161
    %v4506 = vpack.c.b16 %v4170, %v4162
    %v4507 = vpack.c.b16 %v4179, %v4171
    %v4508 = vpack.c.b16 %v4180, %v4172
    %v4509 = vpack.c.b16 %v4181, %v4173
    %v4510 = vpack.c.b16 %v4182, %v4174
    %v4511 = vpack.c.b16 %v4183, %v4175
    %v4512 = vpack.c.b16 %v4184, %v4176
    %v4513 = vpack.c.b16 %v4185, %v4177
    %v4514 = vpack.c.b16 %v4186, %v4178
    %v4515 = vpack.c.b16 %v4195, %v4187
    %v4516 = vpack.c.b16 %v4196, %v4188
    %v4517 = vpack.c.b16 %v4197, %v4189
    %v4518 = vpack.c.b16 %v4198, %v4190
    %v4519 = vpack.c.b16 %v4199, %v4191
    %v4520 = vpack.c.b16 %v4200, %v4192
    %v4521 = vpack.c.b16 %v4201, %v4193
    %v4522 = vpack.c.b16 %v4202, %v4194
    %v4523 = vpack.c.b16 %v4211, %v4203
    %v4524 = vpack.c.b16 %v4212, %v4204
    %v4525 = vpack.c.b16 %v4213, %v4205
    %v4526 = vpack.c.b16 %v4214, %v4206
    %v4527 = vpack.c.b16 %v4215, %v4207
    %v4528 = vpack.c.b16 %v4216, %v4208
    %v4529 = vpack.c.b16 %v4217, %v4209
    %v4530 = vpack.c.b16 %v4218, %v4210
    %v4531 = vpack.c.b16 %v4227, %v4219
    %v4532 = vpack.c.b16 %v4228, %v4220
    %v4533 = vpack.c.b16 %v4229, %v4221
    %v4534 = vpack.c.b16 %v4230, %v4222
    %v4535 = vpack.c.b16 %v4231, %v4223
    %v4536 = vpack.c.b16 %v4232, %v4224
    %v4537 = vpack.c.b16 %v4233, %v4225
    %v4538 = vpack.c.b16 %v4234, %v4226
    %v4539 = vpack.c.b16 %v4243, %v4235
    %v4540 = vpack.c.b16 %v4244, %v4236
    %v4541 = vpack.c.b16 %v4245, %v4237
    %v4542 = vpack.c.b16 %v4246, %v4238
    %v4543 = vpack.c.b16 %v4247, %v4239
    %v4544 = vpack.c.b16 %v4248, %v4240
    %v4545 = vpack.c.b16 %v4249, %v4241
    %v4546 = vpack.c.b16 %v4250, %v4242
    %v4547 = vpack.c.b16 %v4259, %v4251
    %v4548 = vpack.c.b16 %v4260, %v4252
    %v4549 = vpack.c.b16 %v4261, %v4253
    %v4550 = vpack.c.b16 %v4262, %v4254
    %v4551 = vpack.c.b16 %v4263, %v4255
    %v4552 = vpack.c.b16 %v4264, %v4256
    %v4553 = vpack.c.b16 %v4265, %v4257
    %v4554 = vpack.c.b16 %v4266, %v4258
    %v4555 = vpack.c.b16 %v4275, %v4267
    %v4556 = vpack.c.b16 %v4276, %v4268
    %v4557 = vpack.c.b16 %v4277, %v4269
    %v4558 = vpack.c.b16 %v4278, %v4270
    %v4559 = vpack.c.b16 %v4279, %v4271
    %v4560 = vpack.c.b16 %v4280, %v4272
    %v4561 = vpack.c.b16 %v4281, %v4273
    %v4562 = vpack.c.b16 %v4282, %v4274
    %v4563 = vpack.c.b16 %v4291, %v4283
    %v4564 = vpack.c.b16 %v4292, %v4284
    %v4565 = vpack.c.b16 %v4293, %v4285
    %v4566 = vpack.c.b16 %v4294, %v4286
    %v4567 = vpack.c.b16 %v4295, %v4287
    %v4568 = vpack.c.b16 %v4296, %v4288
    %v4569 = vpack.c.b16 %v4297, %v4289
    %v4570 = vpack.c.b16 %v4298, %v4290
    %v4571 = vpack.c.b16 %v4307, %v4299
    %v4572 = vpack.c.b16 %v4308, %v4300
    %v4573 = vpack.c.b16 %v4309, %v4301
    %v4574 = vpack.c.b16 %v4310, %v4302
    %v4575 = vpack.c.b16 %v4311, %v4303
    %v4576 = vpack.c.b16 %v4312, %v4304
    %v4577 = vpack.c.b16 %v4313, %v4305
    %v4578 = vpack.c.b16 %v4314, %v4306
    %v4579 = vpack.c.b16 %v4323, %v4315
    %v4580 = vpack.c.b16 %v4324, %v4316
    %v4581 = vpack.c.b16 %v4325, %v4317
    %v4582 = vpack.c.b16 %v4326, %v4318
    %v4583 = vpack.c.b16 %v4327, %v4319
    %v4584 = vpack.c.b16 %v4328, %v4320
    %v4585 = vpack.c.b16 %v4329, %v4321
    %v4586 = vpack.c.b16 %v4330, %v4322
    %4843 = vmatprep.subr.bf16.mxu0 %v4388
    %4844 = vmatpush1.bf16.msra.mxu0 %v4387
    %4845 = vmatprep.subr.bf16.mxu0 %v4380
    %4846 = vmatpush1.bf16.msra.mxu0 %v4379
    %4847 = vmatprep.subr.bf16.mxu0 %v4372
    %4848 = vmatpush1.bf16.msra.mxu0 %v4371
    %4849 = vmatprep.subr.bf16.mxu0 %v4364
    %4850 = vmatpush1.bf16.msra.mxu0 %v4363
    %4851 = vmatprep.subr.bf16.mxu0 %v4356
    %4852 = vmatpush1.bf16.msra.mxu0 %v4355
    %4853 = vmatprep.subr.bf16.mxu0 %v4348
    %4854 = vmatpush1.bf16.msra.mxu0 %v4347
    %4855 = vmatprep.subr.bf16.mxu0 %v4340
    %4856 = vmatpush1.bf16.msra.mxu0 %v4339
    %4857 = vmatprep.subr.bf16.mxu0 %v4332
    %4858 = vmatpush1.bf16.msra.mxu0 %v4331
    %4859 = vmatprep.subr.bf16.mxu0 %v4452
    %4860 = vmatpush2.bf16.msra.mxu0 %v4451
    %4861 = vmatprep.subr.bf16.mxu0 %v4444
    %4862 = vmatpush2.bf16.msra.mxu0 %v4443
    %4863 = vmatprep.subr.bf16.mxu0 %v4436
    %4864 = vmatpush2.bf16.msra.mxu0 %v4435
    %4865 = vmatprep.subr.bf16.mxu0 %v4428
    %4866 = vmatpush2.bf16.msra.mxu0 %v4427
    %4867 = vmatprep.subr.bf16.mxu0 %v4420
    %4868 = vmatpush2.bf16.msra.mxu0 %v4419
    %4869 = vmatprep.subr.bf16.mxu0 %v4412
    %4870 = vmatpush2.bf16.msra.mxu0 %v4411
    %4871 = vmatprep.subr.bf16.mxu0 %v4404
    %4872 = vmatpush2.bf16.msra.mxu0 %v4403
    %4873 = vmatprep.subr.bf16.mxu0 %v4396
    %4874 = vmatpush2.bf16.msra.mxu0 %v4395
    %4875 = vmatprep.mubr.bf16.mxu0 %v3262
    %4876 = vmatmul.mubr.bf16.gmra.mxu0 %v3261
    %v4877 = vpop.f32.mrf.mxu0
    %v4878 = vadd.f32 %v3526, %v4877
    %v4879 = vpop.f32.mrf.mxu0
    %v4880 = vadd.f32 %v3530, %v4879
    %v4881 = vpop.f32.mrf.mxu0
    %v4882 = vpop.f32.mrf.mxu0
    %4883 = vdwg.mxu0
    %4884 = vmatprep.subr.bf16.mxu0 %v4516
    %4885 = vmatpush1.bf16.msra.mxu0 %v4515
    %4886 = vmatprep.subr.bf16.mxu0 %v4508
    %4887 = vmatpush1.bf16.msra.mxu0 %v4507
    %4888 = vmatprep.subr.bf16.mxu0 %v4500
    %4889 = vmatpush1.bf16.msra.mxu0 %v4499
    %4890 = vmatprep.subr.bf16.mxu0 %v4492
    %4891 = vmatpush1.bf16.msra.mxu0 %v4491
    %4892 = vmatprep.subr.bf16.mxu0 %v4484
    %4893 = vmatpush1.bf16.msra.mxu0 %v4483
    %4894 = vmatprep.subr.bf16.mxu0 %v4476
    %4895 = vmatpush1.bf16.msra.mxu0 %v4475
    %4896 = vmatprep.subr.bf16.mxu0 %v4468
    %4897 = vmatpush1.bf16.msra.mxu0 %v4467
    %4898 = vmatprep.subr.bf16.mxu0 %v4460
    %4899 = vmatpush1.bf16.msra.mxu0 %v4459
    %4900 = vmatprep.subr.bf16.mxu0 %v4580
    %4901 = vmatpush2.bf16.msra.mxu0 %v4579
    %4902 = vmatprep.subr.bf16.mxu0 %v4572
    %4903 = vmatpush2.bf16.msra.mxu0 %v4571
    %4904 = vmatprep.subr.bf16.mxu0 %v4564
    %4905 = vmatpush2.bf16.msra.mxu0 %v4563
    %4906 = vmatprep.subr.bf16.mxu0 %v4556
    %4907 = vmatpush2.bf16.msra.mxu0 %v4555
    %4908 = vmatprep.subr.bf16.mxu0 %v4548
    %4909 = vmatpush2.bf16.msra.mxu0 %v4547
    %4910 = vmatprep.subr.bf16.mxu0 %v4540
    %4911 = vmatpush2.bf16.msra.mxu0 %v4539
    %4912 = vmatprep.subr.bf16.mxu0 %v4532
    %4913 = vmatpush2.bf16.msra.mxu0 %v4531
    %4914 = vmatprep.subr.bf16.mxu0 %v4524
    %4915 = vmatpush2.bf16.msra.mxu0 %v4523
    %4916 = vmatprep.mubr.bf16.mxu0 %v3264
    %4917 = vmatmul.mubr.bf16.gmra.mxu0 %v3263
    %v4918 = vpop.f32.mrf.mxu0
    %v4919 = vadd.f32 %v4878, %v4918
    %v4920 = vpop.f32.mrf.mxu0
    %v4921 = vadd.f32 %v4880, %v4920
    %v4922 = vpop.f32.mrf.mxu0
    %v4923 = vpop.f32.mrf.mxu0
    %4924 = vdwg.mxu0
    %4925 = vmatprep.subr.bf16.mxu0 %v4390
    %4926 = vmatpush1.bf16.msra.mxu0 %v4389
    %4927 = vmatprep.subr.bf16.mxu0 %v4382
    %4928 = vmatpush1.bf16.msra.mxu0 %v4381
    %4929 = vmatprep.subr.bf16.mxu0 %v4374
    %4930 = vmatpush1.bf16.msra.mxu0 %v4373
    %4931 = vmatprep.subr.bf16.mxu0 %v4366
    %4932 = vmatpush1.bf16.msra.mxu0 %v4365
    %4933 = vmatprep.subr.bf16.mxu0 %v4358
    %4934 = vmatpush1.bf16.msra.mxu0 %v4357
    %4935 = vmatprep.subr.bf16.mxu0 %v4350
    %4936 = vmatpush1.bf16.msra.mxu0 %v4349
    %4937 = vmatprep.subr.bf16.mxu0 %v4342
    %4938 = vmatpush1.bf16.msra.mxu0 %v4341
    %4939 = vmatprep.subr.bf16.mxu0 %v4334
    %4940 = vmatpush1.bf16.msra.mxu0 %v4333
    %4941 = vmatprep.subr.bf16.mxu0 %v4454
    %4942 = vmatpush2.bf16.msra.mxu0 %v4453
    %4943 = vmatprep.subr.bf16.mxu0 %v4446
    %4944 = vmatpush2.bf16.msra.mxu0 %v4445
    %4945 = vmatprep.subr.bf16.mxu0 %v4438
    %4946 = vmatpush2.bf16.msra.mxu0 %v4437
    %4947 = vmatprep.subr.bf16.mxu0 %v4430
    %4948 = vmatpush2.bf16.msra.mxu0 %v4429
    %4949 = vmatprep.subr.bf16.mxu0 %v4422
    %4950 = vmatpush2.bf16.msra.mxu0 %v4421
    %4951 = vmatprep.subr.bf16.mxu0 %v4414
    %4952 = vmatpush2.bf16.msra.mxu0 %v4413
    %4953 = vmatprep.subr.bf16.mxu0 %v4406
    %4954 = vmatpush2.bf16.msra.mxu0 %v4405
    %4955 = vmatprep.subr.bf16.mxu0 %v4398
    %4956 = vmatpush2.bf16.msra.mxu0 %v4397
    %4957 = vmatprep.mubr.bf16.mxu0 %v3262
    %4958 = vmatmul.mubr.bf16.gmra.mxu0 %v3261
    %v4959 = vpop.f32.mrf.mxu0
    %v4960 = vadd.f32 %v3534, %v4959
    %v4961 = vpop.f32.mrf.mxu0
    %v4962 = vadd.f32 %v3538, %v4961
    %v4963 = vpop.f32.mrf.mxu0
    %v4964 = vpop.f32.mrf.mxu0
    %4965 = vdwg.mxu0
    %4966 = vmatprep.subr.bf16.mxu0 %v4518
    %4967 = vmatpush1.bf16.msra.mxu0 %v4517
    %4968 = vmatprep.subr.bf16.mxu0 %v4510
    %4969 = vmatpush1.bf16.msra.mxu0 %v4509
    %4970 = vmatprep.subr.bf16.mxu0 %v4502
    %4971 = vmatpush1.bf16.msra.mxu0 %v4501
    %4972 = vmatprep.subr.bf16.mxu0 %v4494
    %4973 = vmatpush1.bf16.msra.mxu0 %v4493
    %4974 = vmatprep.subr.bf16.mxu0 %v4486
    %4975 = vmatpush1.bf16.msra.mxu0 %v4485
    %4976 = vmatprep.subr.bf16.mxu0 %v4478
    %4977 = vmatpush1.bf16.msra.mxu0 %v4477
    %4978 = vmatprep.subr.bf16.mxu0 %v4470
    %4979 = vmatpush1.bf16.msra.mxu0 %v4469
    %4980 = vmatprep.subr.bf16.mxu0 %v4462
    %4981 = vmatpush1.bf16.msra.mxu0 %v4461
    %4982 = vmatprep.subr.bf16.mxu0 %v4582
    %4983 = vmatpush2.bf16.msra.mxu0 %v4581
    %4984 = vmatprep.subr.bf16.mxu0 %v4574
    %4985 = vmatpush2.bf16.msra.mxu0 %v4573
    %4986 = vmatprep.subr.bf16.mxu0 %v4566
    %4987 = vmatpush2.bf16.msra.mxu0 %v4565
    %4988 = vmatprep.subr.bf16.mxu0 %v4558
    %4989 = vmatpush2.bf16.msra.mxu0 %v4557
    %4990 = vmatprep.subr.bf16.mxu0 %v4550
    %4991 = vmatpush2.bf16.msra.mxu0 %v4549
    %4992 = vmatprep.subr.bf16.mxu0 %v4542
    %4993 = vmatpush2.bf16.msra.mxu0 %v4541
    %4994 = vmatprep.subr.bf16.mxu0 %v4534
    %4995 = vmatpush2.bf16.msra.mxu0 %v4533
    %4996 = vmatprep.subr.bf16.mxu0 %v4526
    %4997 = vmatpush2.bf16.msra.mxu0 %v4525
    %4998 = vmatprep.mubr.bf16.mxu0 %v3264
    %4999 = vmatmul.mubr.bf16.gmra.mxu0 %v3263
    %v5000 = vpop.f32.mrf.mxu0
    %v5001 = vadd.f32 %v4960, %v5000
    %v5002 = vpop.f32.mrf.mxu0
    %v5003 = vadd.f32 %v4962, %v5002
    %v5004 = vpop.f32.mrf.mxu0
    %v5005 = vpop.f32.mrf.mxu0
    %5006 = vdwg.mxu0
    %5007 = vmatprep.subr.bf16.mxu0 %v4392
    %5008 = vmatpush1.bf16.msra.mxu0 %v4391
    %5009 = vmatprep.subr.bf16.mxu0 %v4384
    %5010 = vmatpush1.bf16.msra.mxu0 %v4383
    %5011 = vmatprep.subr.bf16.mxu0 %v4376
    %5012 = vmatpush1.bf16.msra.mxu0 %v4375
    %5013 = vmatprep.subr.bf16.mxu0 %v4368
    %5014 = vmatpush1.bf16.msra.mxu0 %v4367
    %5015 = vmatprep.subr.bf16.mxu0 %v4360
    %5016 = vmatpush1.bf16.msra.mxu0 %v4359
    %5017 = vmatprep.subr.bf16.mxu0 %v4352
    %5018 = vmatpush1.bf16.msra.mxu0 %v4351
    %5019 = vmatprep.subr.bf16.mxu0 %v4344
    %5020 = vmatpush1.bf16.msra.mxu0 %v4343
    %5021 = vmatprep.subr.bf16.mxu0 %v4336
    %5022 = vmatpush1.bf16.msra.mxu0 %v4335
    %5023 = vmatprep.subr.bf16.mxu0 %v4456
    %5024 = vmatpush2.bf16.msra.mxu0 %v4455
    %5025 = vmatprep.subr.bf16.mxu0 %v4448
    %5026 = vmatpush2.bf16.msra.mxu0 %v4447
    %5027 = vmatprep.subr.bf16.mxu0 %v4440
    %5028 = vmatpush2.bf16.msra.mxu0 %v4439
    %5029 = vmatprep.subr.bf16.mxu0 %v4432
    %5030 = vmatpush2.bf16.msra.mxu0 %v4431
    %5031 = vmatprep.subr.bf16.mxu0 %v4424
    %5032 = vmatpush2.bf16.msra.mxu0 %v4423
    %5033 = vmatprep.subr.bf16.mxu0 %v4416
    %5034 = vmatpush2.bf16.msra.mxu0 %v4415
    %5035 = vmatprep.subr.bf16.mxu0 %v4408
    %5036 = vmatpush2.bf16.msra.mxu0 %v4407
    %5037 = vmatprep.subr.bf16.mxu0 %v4400
    %5038 = vmatpush2.bf16.msra.mxu0 %v4399
    %5039 = vmatprep.mubr.bf16.mxu0 %v3262
    %5040 = vmatmul.mubr.bf16.gmra.mxu0 %v3261
    %v5041 = vpop.f32.mrf.mxu0
    %v5042 = vadd.f32 %v3542, %v5041
    %v5043 = vpop.f32.mrf.mxu0
    %v5044 = vadd.f32 %v3546, %v5043
    %v5045 = vpop.f32.mrf.mxu0
    %v5046 = vpop.f32.mrf.mxu0
    %5047 = vdwg.mxu0
    %5048 = vmatprep.subr.bf16.mxu0 %v4520
    %5049 = vmatpush1.bf16.msra.mxu0 %v4519
    %5050 = vmatprep.subr.bf16.mxu0 %v4512
    %5051 = vmatpush1.bf16.msra.mxu0 %v4511
    %5052 = vmatprep.subr.bf16.mxu0 %v4504
    %5053 = vmatpush1.bf16.msra.mxu0 %v4503
    %5054 = vmatprep.subr.bf16.mxu0 %v4496
    %5055 = vmatpush1.bf16.msra.mxu0 %v4495
    %5056 = vmatprep.subr.bf16.mxu0 %v4488
    %5057 = vmatpush1.bf16.msra.mxu0 %v4487
    %5058 = vmatprep.subr.bf16.mxu0 %v4480
    %5059 = vmatpush1.bf16.msra.mxu0 %v4479
    %5060 = vmatprep.subr.bf16.mxu0 %v4472
    %5061 = vmatpush1.bf16.msra.mxu0 %v4471
    %5062 = vmatprep.subr.bf16.mxu0 %v4464
    %5063 = vmatpush1.bf16.msra.mxu0 %v4463
    %5064 = vmatprep.subr.bf16.mxu0 %v4584
    %5065 = vmatpush2.bf16.msra.mxu0 %v4583
    %5066 = vmatprep.subr.bf16.mxu0 %v4576
    %5067 = vmatpush2.bf16.msra.mxu0 %v4575
    %5068 = vmatprep.subr.bf16.mxu0 %v4568
    %5069 = vmatpush2.bf16.msra.mxu0 %v4567
    %5070 = vmatprep.subr.bf16.mxu0 %v4560
    %5071 = vmatpush2.bf16.msra.mxu0 %v4559
    %5072 = vmatprep.subr.bf16.mxu0 %v4552
    %5073 = vmatpush2.bf16.msra.mxu0 %v4551
    %5074 = vmatprep.subr.bf16.mxu0 %v4544
    %5075 = vmatpush2.bf16.msra.mxu0 %v4543
    %5076 = vmatprep.subr.bf16.mxu0 %v4536
    %5077 = vmatpush2.bf16.msra.mxu0 %v4535
    %5078 = vmatprep.subr.bf16.mxu0 %v4528
    %5079 = vmatpush2.bf16.msra.mxu0 %v4527
    %5080 = vmatprep.mubr.bf16.mxu0 %v3264
    %5081 = vmatmul.mubr.bf16.gmra.mxu0 %v3263
    %v5082 = vpop.f32.mrf.mxu0
    %v5083 = vadd.f32 %v5042, %v5082
    %v5084 = vpop.f32.mrf.mxu0
    %v5085 = vadd.f32 %v5044, %v5084
    %v5086 = vpop.f32.mrf.mxu0
    %v5087 = vpop.f32.mrf.mxu0
    %5088 = vdwg.mxu0
    %5089 = vmatprep.subr.bf16.mxu0 %v4394
    %5090 = vmatpush1.bf16.msra.mxu0 %v4393
    %5091 = vmatprep.subr.bf16.mxu0 %v4386
    %5092 = vmatpush1.bf16.msra.mxu0 %v4385
    %5093 = vmatprep.subr.bf16.mxu0 %v4378
    %5094 = vmatpush1.bf16.msra.mxu0 %v4377
    %5095 = vmatprep.subr.bf16.mxu0 %v4370
    %5096 = vmatpush1.bf16.msra.mxu0 %v4369
    %5097 = vmatprep.subr.bf16.mxu0 %v4362
    %5098 = vmatpush1.bf16.msra.mxu0 %v4361
    %5099 = vmatprep.subr.bf16.mxu0 %v4354
    %5100 = vmatpush1.bf16.msra.mxu0 %v4353
    %5101 = vmatprep.subr.bf16.mxu0 %v4346
    %5102 = vmatpush1.bf16.msra.mxu0 %v4345
    %5103 = vmatprep.subr.bf16.mxu0 %v4338
    %5104 = vmatpush1.bf16.msra.mxu0 %v4337
    %5105 = vmatprep.subr.bf16.mxu0 %v4458
    %5106 = vmatpush2.bf16.msra.mxu0 %v4457
    %5107 = vmatprep.subr.bf16.mxu0 %v4450
    %5108 = vmatpush2.bf16.msra.mxu0 %v4449
    %5109 = vmatprep.subr.bf16.mxu0 %v4442
    %5110 = vmatpush2.bf16.msra.mxu0 %v4441
    %5111 = vmatprep.subr.bf16.mxu0 %v4434
    %5112 = vmatpush2.bf16.msra.mxu0 %v4433
    %5113 = vmatprep.subr.bf16.mxu0 %v4426
    %5114 = vmatpush2.bf16.msra.mxu0 %v4425
    %5115 = vmatprep.subr.bf16.mxu0 %v4418
    %5116 = vmatpush2.bf16.msra.mxu0 %v4417
    %5117 = vmatprep.subr.bf16.mxu0 %v4410
    %5118 = vmatpush2.bf16.msra.mxu0 %v4409
    %5119 = vmatprep.subr.bf16.mxu0 %v4402
    %5120 = vmatpush2.bf16.msra.mxu0 %v4401
    %5121 = vmatprep.mubr.bf16.mxu0 %v3262
    %5122 = vmatmul.mubr.bf16.gmra.mxu0 %v3261
    %v5123 = vpop.f32.mrf.mxu0
    %v5124 = vadd.f32 %v3550, %v5123
    %v5125 = vpop.f32.mrf.mxu0
    %v5126 = vadd.f32 %v3554, %v5125
    %v5127 = vpop.f32.mrf.mxu0
    %v5128 = vpop.f32.mrf.mxu0
    %5129 = vdwg.mxu0
    %5130 = vmatprep.subr.bf16.mxu0 %v4522
    %5131 = vmatpush1.bf16.msra.mxu0 %v4521
    %5132 = vmatprep.subr.bf16.mxu0 %v4514
    %5133 = vmatpush1.bf16.msra.mxu0 %v4513
    %5134 = vmatprep.subr.bf16.mxu0 %v4506
    %5135 = vmatpush1.bf16.msra.mxu0 %v4505
    %5136 = vmatprep.subr.bf16.mxu0 %v4498
    %5137 = vmatpush1.bf16.msra.mxu0 %v4497
    %5138 = vmatprep.subr.bf16.mxu0 %v4490
    %5139 = vmatpush1.bf16.msra.mxu0 %v4489
    %5140 = vmatprep.subr.bf16.mxu0 %v4482
    %5141 = vmatpush1.bf16.msra.mxu0 %v4481
    %5142 = vmatprep.subr.bf16.mxu0 %v4474
    %5143 = vmatpush1.bf16.msra.mxu0 %v4473
    %5144 = vmatprep.subr.bf16.mxu0 %v4466
    %5145 = vmatpush1.bf16.msra.mxu0 %v4465
    %5146 = vmatprep.subr.bf16.mxu0 %v4586
    %5147 = vmatpush2.bf16.msra.mxu0 %v4585
    %5148 = vmatprep.subr.bf16.mxu0 %v4578
    %5149 = vmatpush2.bf16.msra.mxu0 %v4577
    %5150 = vmatprep.subr.bf16.mxu0 %v4570
    %5151 = vmatpush2.bf16.msra.mxu0 %v4569
    %5152 = vmatprep.subr.bf16.mxu0 %v4562
    %5153 = vmatpush2.bf16.msra.mxu0 %v4561
    %5154 = vmatprep.subr.bf16.mxu0 %v4554
    %5155 = vmatpush2.bf16.msra.mxu0 %v4553
    %5156 = vmatprep.subr.bf16.mxu0 %v4546
    %5157 = vmatpush2.bf16.msra.mxu0 %v4545
    %5158 = vmatprep.subr.bf16.mxu0 %v4538
    %5159 = vmatpush2.bf16.msra.mxu0 %v4537
    %5160 = vmatprep.subr.bf16.mxu0 %v4530
    %5161 = vmatpush2.bf16.msra.mxu0 %v4529
    %5162 = vmatprep.mubr.bf16.mxu0 %v3264
    %5163 = vmatmul.mubr.bf16.gmra.mxu0 %v3263
    %v5164 = vpop.f32.mrf.mxu0
    %v5165 = vadd.f32 %v5124, %v5164
    %v5166 = vpop.f32.mrf.mxu0
    %v5167 = vadd.f32 %v5126, %v5166
    %v5168 = vpop.f32.mrf.mxu0
    %v5169 = vpop.f32.mrf.mxu0
    %5170 = vdwg.mxu0
    %v5171 = vsub.f32 0.0, %v4919
    %v5172 = vsub.f32 0.0, %v4921
    %v5173 = vsub.f32 0.0, %v5001
    %v5174 = vsub.f32 0.0, %v5003
    %v5175 = vsub.f32 0.0, %v5083
    %v5176 = vsub.f32 0.0, %v5085
    %v5177 = vsub.f32 0.0, %v5165
    %v5178 = vsub.f32 0.0, %v5167
    %v5179 = vmul.f32 %v5171, 1.442695
    %v5180 = vpow.pop %v5179
    %v5181 = vmul.f32 %v5172, 1.442695
    %v5182 = vpow.pop %v5181
    %v5183 = vmul.f32 %v5173, 1.442695
    %v5184 = vpow.pop %v5183
    %v5185 = vmul.f32 %v5174, 1.442695
    %v5186 = vpow.pop %v5185
    %v5187 = vmul.f32 %v5175, 1.442695
    %v5188 = vpow.pop %v5187
    %v5189 = vmul.f32 %v5176, 1.442695
    %v5190 = vpow.pop %v5189
    %v5191 = vmul.f32 %v5177, 1.442695
    %v5192 = vpow.pop %v5191
    %v5193 = vmul.f32 %v5178, 1.442695
    %v5194 = vpow.pop %v5193
    %v5195 = vadd.f32 %v5180, 1.0
    %v5196 = vadd.f32 %v5182, 1.0
    %v5197 = vadd.f32 %v5184, 1.0
    %v5198 = vadd.f32 %v5186, 1.0
    %v5199 = vadd.f32 %v5188, 1.0
    %v5200 = vadd.f32 %v5190, 1.0
    %v5201 = vadd.f32 %v5192, 1.0
    %v5202 = vadd.f32 %v5194, 1.0
    %v5203 = vrcp.pop %v5195
    %v5204 = vrcp.pop %v5196
    %v5205 = vrcp.pop %v5197
    %v5206 = vrcp.pop %v5198
    %v5207 = vrcp.pop %v5199
    %v5208 = vrcp.pop %v5200
    %v5209 = vrcp.pop %v5201
    %v5210 = vrcp.pop %v5202
    %5211 = vst [vmem:[%s13] sm:$0xff] %v5203
    %5212 = vst [vmem:[%s13 + $0x8] sm:$0xff] %v5204
    %5213 = vst [vmem:[%s13 + $0x10] sm:$0xff] %v5205
    %5214 = vst [vmem:[%s13 + $0x18] sm:$0xff] %v5206
    %5215 = vst [vmem:[%s13 + $0x20] sm:$0xff] %v5207
    %5216 = vst [vmem:[%s13 + $0x28] sm:$0xff] %v5208
    %5217 = vst [vmem:[%s13 + $0x30] sm:$0xff] %v5209
    %5218 = vst [vmem:[%s13 + $0x38] sm:$0xff] %v5210
    // Predicated region
    $region70: #{_lambda_.1} parent=1 // pred_check
      _
    $region71: #{_lambda_.1} parent=1 // pred_check_branch
      %5220 = sbr.rel (0) target = $region73
    $region72: #{_lambda_.1} parent=1 // pred_region
      _
    $region73: #{_lambda_.1} parent=1 // pred_fallthru
      _
    // Predicated region
    $region74: #{_lambda_.1} parent=1 // pred_check
      _
    $region75: #{_lambda_.1} parent=1 // pred_check_branch
      %5222 = sbr.rel (0) target = $region77
    $region76: #{_lambda_.1} parent=1 // pred_region
      _
    $region77: #{_lambda_.1} parent=1 // pred_fallthru
      _
    %5223 = vsyncpa [#allocation3], 1
    %5224 = vsyncpa [#allocation5], 1
    %5225 = vsyncpa [#allocation8], 1

</llo_original>
